<compile_context>
chip_gen: v6e
topology: v6e:2x2x1
jax: 0.10.0
libtpu: 0.0.40
codegen_flags: <defaults>
</compile_context>

<pallas_src>
import functools

import jax
import jax.numpy as jnp
from jax.experimental import pallas as pl
from jax.experimental.pallas import tpu as pltpu


# ----------------------------------------------------------------------------
# Small helpers
# ----------------------------------------------------------------------------
def _cdiv(a, b):
    return -(-a // b)


def _round_up(x, m):
    return _cdiv(x, m) * m


def _pick_tile(P, tm):
    """Row tile: multiple of 16 (bf16 sublane packing); give >= 2 grid steps
    whenever possible (v7x megacore); never (much) larger than the problem."""
    tm = max(16, (tm // 16) * 16)
    if P > 16:
        tm = min(tm, _round_up(_cdiv(P, 2), 16))
    return min(tm, _round_up(P, 16))


_COMPILER_PARAMS = pltpu.CompilerParams(
    dimension_semantics=("parallel",),       # row blocks are independent
    vmem_limit_bytes=32 * 1024 * 1024,       # safe headroom on v5e/v6e/v7x
)


# ----------------------------------------------------------------------------
# Pallas kernels
# ----------------------------------------------------------------------------
def _conv7_up1_kernel(x_ref, w7_ref, b7_ref, w1_ref, b1_ref, o_ref):
    """conv_7_table (1x1) + upsample_1_table on one row tile.

    x:(tm,256) w7:(256,256) b7:(1,256) w1:(256,k1^2*128) b1:(1,k1^2*128)
    o:(tm,k1^2*128) bf16, columns ordered (k1h, k1w, ch)  -- "unshuffled".
    """
    h = jnp.dot(x_ref[...], w7_ref[...], preferred_element_type=jnp.float32)
    h = (h + b7_ref[...]).astype(jnp.bfloat16)   # conv7 activation: stays on chip
    o = jnp.dot(h, w1_ref[...], preferred_element_type=jnp.float32)
    o_ref[...] = (o + b1_ref[...]).astype(o_ref.dtype)


def _up2_up3_kernel(y1_ref, p4_ref, p3_ref, w2u_ref, w2s_ref, b2_ref,
                    w3u_ref, w3s_ref, b3_ref, o_ref, *, k1sq, c_up1, nc2):
    """upsample_2_table + upsample_3_table fused on one row tile.

    y1 :(tm, k1^2*128)        bf16  unshuffled conv7+up1 output
    p4 :(k1^2, tm, c0)        bf16  unshuffled pool_4 skip (group on axis 0)
    p3 :(tm, k1^2*k2^2*c1)    bf16  unshuffled pool_3 skip
    w2u:(128, nc2) w2s:(c0, nc2) b2:(1, nc2)          nc2 = k2^2*256
    w3u:(k1^2*nc2, n_out)     block-diagonal up3 "up" weight
    w3s:(k1^2*k2^2*c1, n_out) block-diagonal up3 skip weight
    b3 :(1, n_out)            o:(tm, n_out) f32       n_out = k1^2*k2^2*k3^2
    """
    # upsample_3 skip path (pool_3 @ W3_skip) + bias for every sub-pixel at
    # once, lane-dense, via the block-diagonal weight.
    o = jnp.dot(p3_ref[...], w3s_ref[...], preferred_element_type=jnp.float32)
    o = o + b3_ref[...]

    w2u = w2u_ref[...]
    w2s = w2s_ref[...]
    b2 = b2_ref[...]
    for g1 in range(k1sq):                       # static unroll over k1*k1 groups
        y1_g = y1_ref[:, g1 * c_up1:(g1 + 1) * c_up1]   # (tm,128), lane aligned
        p4_g = p4_ref[g1]                                # (tm,c0), leading-axis idx
        acc2 = jnp.dot(y1_g, w2u, preferred_element_type=jnp.float32)
        acc2 = acc2 + jnp.dot(p4_g, w2s, preferred_element_type=jnp.float32)
        y2_g = (acc2 + b2).astype(jnp.bfloat16)  # upsample_2 activation: VMEM only
        # upsample_3 "up" path: this row block of the block-diagonal weight hits
        # exactly this group's output columns.
        o = o + jnp.dot(y2_g, w3u_ref[g1 * nc2:(g1 + 1) * nc2, :],
                        preferred_element_type=jnp.float32)
    o_ref[...] = o.astype(o_ref.dtype)


# ----------------------------------------------------------------------------
# pallas_call wrappers
# ----------------------------------------------------------------------------
def conv7_up1(xm, w7, b7, w1, b1, *, tm):
    P, K = xm.shape
    N1 = w7.shape[1]
    N2 = w1.shape[1]
    tile = _pick_tile(P, tm)
    return pl.pallas_call(
        _conv7_up1_kernel,
        out_shape=jax.ShapeDtypeStruct((P, N2), jnp.bfloat16),
        grid=(_cdiv(P, tile),),
        in_specs=[
            pl.BlockSpec((tile, K), lambda i: (i, 0)),
            pl.BlockSpec((K, N1), lambda i: (0, 0)),
            pl.BlockSpec((1, N1), lambda i: (0, 0)),
            pl.BlockSpec((N1, N2), lambda i: (0, 0)),
            pl.BlockSpec((1, N2), lambda i: (0, 0)),
        ],
        out_specs=pl.BlockSpec((tile, N2), lambda i: (i, 0)),
        compiler_params=_COMPILER_PARAMS,
    )(xm, w7, b7, w1, b1)


def up2_up3(y1, p4, p3, w2u, w2s, b2, w3u_bd, w3s_bd, b3, *, k1sq, c_up1, tm):
    P = y1.shape[0]
    c0 = p4.shape[2]
    nc2 = w2u.shape[1]
    n_out = w3u_bd.shape[1]
    tile = _pick_tile(P, tm)
    kernel = functools.partial(_up2_up3_kernel, k1sq=k1sq, c_up1=c_up1, nc2=nc2)
    return pl.pallas_call(
        kernel,
        out_shape=jax.ShapeDtypeStruct((P, n_out), jnp.float32),
        grid=(_cdiv(P, tile),),
        in_specs=[
            pl.BlockSpec((tile, y1.shape[1]), lambda i: (i, 0)),
            pl.BlockSpec((k1sq, tile, c0), lambda i: (0, i, 0)),
            pl.BlockSpec((tile, p3.shape[1]), lambda i: (i, 0)),
            pl.BlockSpec(w2u.shape, lambda i: (0, 0)),
            pl.BlockSpec(w2s.shape, lambda i: (0, 0)),
            pl.BlockSpec(b2.shape, lambda i: (0, 0)),
            pl.BlockSpec(w3u_bd.shape, lambda i: (0, 0)),
            pl.BlockSpec(w3s_bd.shape, lambda i: (0, 0)),
            pl.BlockSpec(b3.shape, lambda i: (0, 0)),
        ],
        out_specs=pl.BlockSpec((tile, n_out), lambda i: (i, 0)),
        compiler_params=_COMPILER_PARAMS,
    )(y1, p4, p3, w2u, w2s, b2, w3u_bd, w3s_bd, b3)


# ----------------------------------------------------------------------------
# One-time weight packing (kernel == stride ConvTranspose2d => per-pixel matmul)
# ----------------------------------------------------------------------------
def _pack_convT_weight(w):
    """PyTorch ConvTranspose2d weight (Ci, Co, kh, kw) -> (Ci, kh*kw*Co)."""
    Ci, Co, kh, kw = w.shape
    return jnp.transpose(w, (0, 2, 3, 1)).reshape(Ci, kh * kw * Co)


def pack_params(params, kernels, strides):
    """Pack / cast / block-diag-expand all weights once (outside the jitted
    forward), so nothing weight-related runs per call."""
    k0, k1, k2, k3 = kernels
    # TODO(synk): only the TableNet configuration (1x1 conv_7, kernel==stride
    #             transposed convs) is implemented.
    assert k0 == 1 and strides[0] == 1, "conv_7_table must be 1x1 / stride 1"
    assert tuple(kernels[1:]) == tuple(strides[1:]), "need kernel == stride"

    bf16, f32 = jnp.bfloat16, jnp.float32
    c_up1, c_up2 = 128, 256
    g = (k1 * k1) * (k2 * k2)

    w3u = _pack_convT_weight(params["up3_w"][:c_up2])    # (256, k3^2)
    w3s = _pack_convT_weight(params["up3_w"][c_up2:])    # (c1,  k3^2)
    eye_g = jnp.eye(g, dtype=f32)

    return {
        "w7": params["conv7_w"][:, :, 0, 0].T.astype(bf16),                # (256,256)
        "b7": params["conv7_b"].astype(f32).reshape(1, -1),
        "w1": _pack_convT_weight(params["up1_w"]).astype(bf16),            # (256,k1^2*128)
        "b1": jnp.tile(params["up1_b"], k1 * k1).astype(f32).reshape(1, -1),
        # torch.cat((up1_out, pool_4_out), 1): first 128 input rows = "up" path.
        "w2u": _pack_convT_weight(params["up2_w"][:c_up1]).astype(bf16),   # (128,k2^2*256)
        "w2s": _pack_convT_weight(params["up2_w"][c_up1:]).astype(bf16),   # (c0, k2^2*256)
        "b2": jnp.tile(params["up2_b"], k2 * k2).astype(f32).reshape(1, -1),
        # torch.cat((up2_out, pool_3_out), 1): first 256 input rows = "up" path.
        "w3u_bd": jnp.kron(eye_g, w3u).astype(bf16),  # (k1^2*k2^2*256, k1^2*k2^2*k3^2)
        "w3s_bd": jnp.kron(eye_g, w3s).astype(bf16),  # (k1^2*k2^2*c1,  k1^2*k2^2*k3^2)
        "b3": jnp.tile(params["up3_b"], g * k3 * k3).astype(f32).reshape(1, -1),
    }


# ----------------------------------------------------------------------------
# Layout glue (XLA side, only on narrow skip tensors and the tiny output)
# ----------------------------------------------------------------------------
def _unshuffle_p4(p, N, H, W, k1):
    """NCHW pool_4 skip (N,c0,H*k1,W*k1) -> (k1*k1, N*H*W, c0) bf16.
    Leading axis = (k1h,k1w) group so the kernel indexes it on axis 0."""
    C = p.shape[1]
    p = jnp.transpose(p, (0, 2, 3, 1)).reshape(N, H, k1, W, k1, C)
    p = jnp.transpose(p, (2, 4, 0, 1, 3, 5))            # (k1h,k1w,N,H,W,C)
    return p.reshape(k1 * k1, N * H * W, C).astype(jnp.bfloat16)


def _unshuffle_p3(p, N, H, W, k1, k2):
    """NCHW pool_3 skip (N,c1,H*k1*k2,W*k1*k2) -> (N*H*W, k1^2*k2^2*c1) bf16,
    columns ordered (k1h, k1w, k2h, k2w, c)."""
    C = p.shape[1]
    p = jnp.transpose(p, (0, 2, 3, 1)).reshape(N, H, k1, k2, W, k1, k2, C)
    p = jnp.transpose(p, (0, 1, 4, 2, 5, 3, 6, 7))      # (N,H,W,k1h,k1w,k2h,k2w,C)
    return p.reshape(N * H * W, k1 * k1 * k2 * k2 * C).astype(jnp.bfloat16)


def _shuffle_out(o, N, H, W, k1, k2, k3):
    """(N*H*W, k1^2*k2^2*k3^2) f32 -> NCHW (N, 1, H*k1*k2*k3, W*k1*k2*k3)."""
    o = o.reshape(N, H, W, k1, k1, k2, k2, k3, k3)
    o = jnp.transpose(o, (0, 1, 3, 5, 7, 2, 4, 6, 8))
    o = o.reshape(N, H * k1 * k2 * k3, W * k1 * k2 * k3)
    return o[:, None]


# ----------------------------------------------------------------------------
# TableDecoder forward
# ----------------------------------------------------------------------------
def table_decoder_forward(packed, x, pool_3_out, pool_4_out, *, kernels, tm=512):
    _, k1, k2, k3 = kernels
    N, Cx, H, W = x.shape
    P = N * H * W

    # NCHW -> (pixels, channels) once; permutations only touch narrow tensors.
    xm = jnp.transpose(x, (0, 2, 3, 1)).reshape(P, Cx).astype(jnp.bfloat16)
    p4m = _unshuffle_p4(pool_4_out, N, H, W, k1)
    p3m = _unshuffle_p3(pool_3_out, N, H, W, k1, k2)

    # conv_7_table (1x1) + upsample_1_table fused; output kept "unshuffled".
    y1 = conv7_up1(xm, packed["w7"], packed["b7"], packed["w1"], packed["b1"],
                   tm=tm)

    # upsample_2_table + upsample_3_table fused; the up2 activation (the
    # biggest tensor of the decoder) never leaves VMEM.
    o = up2_up3(y1, p4m, p3m,
                packed["w2u"], packed["w2s"], packed["b2"],
                packed["w3u_bd"], packed["w3s_bd"], packed["b3"],
                k1sq=k1 * k1, c_up1=128, tm=tm)

    # The only wide permutation back to NCHW acts on the tiny fused output.
    return _shuffle_out(o, N, H, W, k1, k2, k3)


# ----------------------------------------------------------------------------
# Parameter init (shapes follow the PyTorch module exactly)
# ----------------------------------------------------------------------------
def init_params(key, channels, kernels):
    ks = jax.random.split(key, 8)
    scale = 0.02

    def rnd(k, shape):
        return (scale * jax.random.normal(k, shape)).astype(jnp.float32)

    c0, c1 = channels
    k0, k1, k2, k3 = kernels
    return {
        "conv7_w": rnd(ks[0], (256, 256, k0, k0)),      # Conv2d (out, in, kh, kw)
        "conv7_b": rnd(ks[1], (256,)),
        "up1_w": rnd(ks[2], (256, 128, k1, k1)),        # ConvTranspose2d (in, out, kh, kw)
        "up1_b": rnd(ks[3], (128,)),
        "up2_w": rnd(ks[4], (128 + c0, 256, k2, k2)),
        "up2_b": rnd(ks[5], (256,)),
        "up3_w": rnd(ks[6], (256 + c1, 1, k3, k3)),
        "up3_b": rnd(ks[7], (1,)),
    }


# ----------------------------------------------------------------------------
# Pure-JAX f32 reference (layer by layer, with the explicit torch.cat order)
# ----------------------------------------------------------------------------
def _convT_ref(x, w, b, k):
    y = jnp.einsum("nihw,iouv->nohuwv", x, w)
    N, Co, H, _, W, _ = y.shape
    return y.reshape(N, Co, H * k, W * k) + b[None, :, None, None]


def reference_forward(params, x, pool_3_out, pool_4_out, kernels):
    _, k1, k2, k3 = kernels
    h = jnp.einsum("nihw,oi->nohw", x, params["conv7_w"][:, :, 0, 0])
    h = h + params["conv7_b"][None, :, None, None]
    y = _convT_ref(h, params["up1_w"], params["up1_b"], k1)
    y = jnp.concatenate([y, pool_4_out], axis=1)
    y = _convT_ref(y, params["up2_w"], params["up2_b"], k2)
    y = jnp.concatenate([y, pool_3_out], axis=1)
    return _convT_ref(y, params["up3_w"], params["up3_b"], k3)


if __name__ == "__main__":
    # Small synthetic config (TableNet structure, reduced skip channels / spatial).
    channels = (32, 16)        # pool_4_out has 32 ch, pool_3_out has 16 ch
    kernels = (1, 2, 2, 2)     # conv7 1x1; transposed convs 2x2
    strides = (1, 2, 2, 2)     # stride == kernel for every transposed conv

    N, H, W = 2, 4, 4
    key = jax.random.PRNGKey(0)
    k_in, k_p3, k_p4, k_par = jax.random.split(key, 4)

    x = jax.random.normal(k_in, (N, 256, H, W), dtype=jnp.float32)
    pool_4_out = jax.random.normal(k_p4, (N, channels[0], 2 * H, 2 * W), jnp.float32)
    pool_3_out = jax.random.normal(k_p3, (N, channels[1], 4 * H, 4 * W), jnp.float32)

    params = init_params(k_par, channels, kernels)
    packed = pack_params(params, kernels, strides)

    fwd = jax.jit(functools.partial(table_decoder_forward, packed, kernels=kernels))
    out = jax.block_until_ready(fwd(x, pool_3_out, pool_4_out))

    assert out.shape == (N, 1, 8 * H, 8 * W), out.shape
    assert out.dtype == jnp.float32

    # bf16 matmul operands / f32 accumulation => loose tolerance vs f32 reference.
    ref = reference_forward(params, x, pool_3_out, pool_4_out, kernels)
    err = float(jnp.max(jnp.abs(out - ref)))
    assert err < 3e-2, f"max abs err vs f32 reference: {err}"

    print("KERNEL_OK")
</pallas_src>

<mosaic_0001>
module attributes {stable_mosaic.version = 11 : i64} {
  func.func @_conv7_up1_kernel(%arg0: i32, %arg1: memref<16x256xbf16, #tpu.memory_space<vmem>>, %arg2: memref<256x256xbf16, #tpu.memory_space<vmem>>, %arg3: memref<1x256xf32, #tpu.memory_space<vmem>>, %arg4: memref<256x512xbf16, #tpu.memory_space<vmem>>, %arg5: memref<1x512xf32, #tpu.memory_space<vmem>>, %arg6: memref<16x512xbf16, #tpu.memory_space<vmem>>) attributes {dimension_semantics = [#tpu.dimension_semantics<parallel>], iteration_bounds = array<i64: 2>, scalar_prefetch = 0 : i64, scratch_operands = 0 : i64, tpu.core_type = #tpu.core_type<tc>, window_params = [{transform_indices = @transform_0, window_bounds = array<i64: 16, 256>}, {pipeline_mode = #tpu.pipeline_mode<synchronous>, transform_indices = @transform_1, window_bounds = array<i64: 256, 256>}, {pipeline_mode = #tpu.pipeline_mode<synchronous>, transform_indices = @transform_2, window_bounds = array<i64: 1, 256>}, {pipeline_mode = #tpu.pipeline_mode<synchronous>, transform_indices = @transform_3, window_bounds = array<i64: 256, 512>}, {pipeline_mode = #tpu.pipeline_mode<synchronous>, transform_indices = @transform_4, window_bounds = array<i64: 1, 512>}, {transform_indices = @transform_5, window_bounds = array<i64: 16, 512>}]} {
    %c0 = arith.constant 0 : index
    %c0_0 = arith.constant 0 : index
    %0 = vector.load %arg1[%c0, %c0_0] : memref<16x256xbf16, #tpu.memory_space<vmem>>, vector<16x256xbf16>
    %c0_1 = arith.constant 0 : index
    %c0_2 = arith.constant 0 : index
    %1 = vector.load %arg2[%c0_1, %c0_2] : memref<256x256xbf16, #tpu.memory_space<vmem>>, vector<256x256xbf16>
    %cst = arith.constant dense<0.000000e+00> : vector<16x256xf32>
    %2 = tpu.matmul %0, %1, %cst {dimension_numbers = #tpu.dot_dimension_numbers<[1], [0], [0], [1], [0, 0, 1, 1], [], []>} : vector<16x256xbf16>, vector<256x256xbf16>, vector<16x256xf32> -> vector<16x256xf32>
    %c0_3 = arith.constant 0 : index
    %c0_4 = arith.constant 0 : index
    %3 = vector.load %arg3[%c0_3, %c0_4] : memref<1x256xf32, #tpu.memory_space<vmem>>, vector<1x256xf32>
    %4 = vector.broadcast %3 : vector<1x256xf32> to vector<16x256xf32>
    %5 = arith.addf %2, %4 : vector<16x256xf32>
    %6 = arith.truncf %5 : vector<16x256xf32> to vector<16x256xbf16>
    %c0_5 = arith.constant 0 : index
    %c0_6 = arith.constant 0 : index
    %7 = vector.load %arg4[%c0_5, %c0_6] : memref<256x512xbf16, #tpu.memory_space<vmem>>, vector<256x512xbf16>
    %cst_7 = arith.constant dense<0.000000e+00> : vector<16x512xf32>
    %8 = tpu.matmul %6, %7, %cst_7 {dimension_numbers = #tpu.dot_dimension_numbers<[1], [0], [0], [1], [0, 0, 1, 1], [], []>} : vector<16x256xbf16>, vector<256x512xbf16>, vector<16x512xf32> -> vector<16x512xf32>
    %c0_8 = arith.constant 0 : index
    %c0_9 = arith.constant 0 : index
    %9 = vector.load %arg5[%c0_8, %c0_9] : memref<1x512xf32, #tpu.memory_space<vmem>>, vector<1x512xf32>
    %10 = vector.broadcast %9 : vector<1x512xf32> to vector<16x512xf32>
    %11 = arith.addf %8, %10 : vector<16x512xf32>
    %12 = arith.truncf %11 : vector<16x512xf32> to vector<16x512xbf16>
    %c0_10 = arith.constant 0 : index
    %c0_11 = arith.constant 0 : index
    %13 = vector.load %arg6[%c0_10, %c0_11] : memref<16x512xbf16, #tpu.memory_space<vmem>>, vector<16x512xbf16>
    tpu.vector_store %arg6[%c0_10, %c0_11], %12 {strides = array<i32>} : memref<16x512xbf16, #tpu.memory_space<vmem>>, vector<16x512xbf16>,
    return
  }
  func.func @transform_0(%arg0: i32) -> (i32, i32) {
    %c0_i32 = arith.constant 0 : i32
    %c0_i32_0 = arith.constant 0 : i32
    return %arg0, %c0_i32 : i32, i32
  }
  func.func @transform_1(%arg0: i32) -> (i32, i32) {
    %c0_i32 = arith.constant 0 : i32
    %c0_i32_0 = arith.constant 0 : i32
    %c0_i32_1 = arith.constant 0 : i32
    return %c0_i32, %c0_i32_0 : i32, i32
  }
  func.func @transform_2(%arg0: i32) -> (i32, i32) {
    %c0_i32 = arith.constant 0 : i32
    %c0_i32_0 = arith.constant 0 : i32
    %c0_i32_1 = arith.constant 0 : i32
    return %c0_i32, %c0_i32_0 : i32, i32
  }
  func.func @transform_3(%arg0: i32) -> (i32, i32) {
    %c0_i32 = arith.constant 0 : i32
    %c0_i32_0 = arith.constant 0 : i32
    %c0_i32_1 = arith.constant 0 : i32
    return %c0_i32, %c0_i32_0 : i32, i32
  }
  func.func @transform_4(%arg0: i32) -> (i32, i32) {
    %c0_i32 = arith.constant 0 : i32
    %c0_i32_0 = arith.constant 0 : i32
    %c0_i32_1 = arith.constant 0 : i32
    return %c0_i32, %c0_i32_0 : i32, i32
  }
  func.func @transform_5(%arg0: i32) -> (i32, i32) {
    %c0_i32 = arith.constant 0 : i32
    %c0_i32_0 = arith.constant 0 : i32
    return %arg0, %c0_i32 : i32, i32
  }
}

module attributes {stable_mosaic.version = 11 : i64} {
  func.func @_up2_up3_kernel(%arg0: i32, %arg1: memref<16x512xbf16, #tpu.memory_space<vmem>>, %arg2: memref<4x16x32xbf16, #tpu.memory_space<vmem>>, %arg3: memref<16x256xbf16, #tpu.memory_space<vmem>>, %arg4: memref<128x1024xbf16, #tpu.memory_space<vmem>>, %arg5: memref<32x1024xbf16, #tpu.memory_space<vmem>>, %arg6: memref<1x1024xf32, #tpu.memory_space<vmem>>, %arg7: memref<4096x64xbf16, #tpu.memory_space<vmem>>, %arg8: memref<256x64xbf16, #tpu.memory_space<vmem>>, %arg9: memref<1x64xf32, #tpu.memory_space<vmem>>, %arg10: memref<16x64xf32, #tpu.memory_space<vmem>>) attributes {dimension_semantics = [#tpu.dimension_semantics<parallel>], iteration_bounds = array<i64: 2>, scalar_prefetch = 0 : i64, scratch_operands = 0 : i64, tpu.core_type = #tpu.core_type<tc>, window_params = [{transform_indices = @transform_0, window_bounds = array<i64: 16, 512>}, {transform_indices = @transform_1, window_bounds = array<i64: 4, 16, 32>}, {transform_indices = @transform_2, window_bounds = array<i64: 16, 256>}, {pipeline_mode = #tpu.pipeline_mode<synchronous>, transform_indices = @transform_3, window_bounds = array<i64: 128, 1024>}, {pipeline_mode = #tpu.pipeline_mode<synchronous>, transform_indices = @transform_4, window_bounds = array<i64: 32, 1024>}, {pipeline_mode = #tpu.pipeline_mode<synchronous>, transform_indices = @transform_5, window_bounds = array<i64: 1, 1024>}, {pipeline_mode = #tpu.pipeline_mode<synchronous>, transform_indices = @transform_6, window_bounds = array<i64: 4096, 64>}, {pipeline_mode = #tpu.pipeline_mode<synchronous>, transform_indices = @transform_7, window_bounds = array<i64: 256, 64>}, {pipeline_mode = #tpu.pipeline_mode<synchronous>, transform_indices = @transform_8, window_bounds = array<i64: 1, 64>}, {transform_indices = @transform_9, window_bounds = array<i64: 16, 64>}]} {
    %c0 = arith.constant 0 : index
    %c0_0 = arith.constant 0 : index
    %0 = vector.load %arg3[%c0, %c0_0] : memref<16x256xbf16, #tpu.memory_space<vmem>>, vector<16x256xbf16>
    %c0_1 = arith.constant 0 : index
    %c0_2 = arith.constant 0 : index
    %1 = vector.load %arg8[%c0_1, %c0_2] : memref<256x64xbf16, #tpu.memory_space<vmem>>, vector<256x64xbf16>
    %cst = arith.constant dense<0.000000e+00> : vector<16x64xf32>
    %2 = tpu.matmul %0, %1, %cst {dimension_numbers = #tpu.dot_dimension_numbers<[1], [0], [0], [1], [0, 0, 1, 1], [], []>} : vector<16x256xbf16>, vector<256x64xbf16>, vector<16x64xf32> -> vector<16x64xf32>
    %c0_3 = arith.constant 0 : index
    %c0_4 = arith.constant 0 : index
    %3 = vector.load %arg9[%c0_3, %c0_4] : memref<1x64xf32, #tpu.memory_space<vmem>>, vector<1x64xf32>
    %4 = vector.broadcast %3 : vector<1x64xf32> to vector<16x64xf32>
    %5 = arith.addf %2, %4 : vector<16x64xf32>
    %c0_5 = arith.constant 0 : index
    %c0_6 = arith.constant 0 : index
    %6 = vector.load %arg4[%c0_5, %c0_6] : memref<128x1024xbf16, #tpu.memory_space<vmem>>, vector<128x1024xbf16>
    %c0_7 = arith.constant 0 : index
    %c0_8 = arith.constant 0 : index
    %7 = vector.load %arg5[%c0_7, %c0_8] : memref<32x1024xbf16, #tpu.memory_space<vmem>>, vector<32x1024xbf16>
    %c0_9 = arith.constant 0 : index
    %c0_10 = arith.constant 0 : index
    %8 = vector.load %arg6[%c0_9, %c0_10] : memref<1x1024xf32, #tpu.memory_space<vmem>>, vector<1x1024xf32>
    %c0_11 = arith.constant 0 : index
    %c0_12 = arith.constant 0 : index
    %9 = vector.load %arg1[%c0_11, %c0_12] : memref<16x512xbf16, #tpu.memory_space<vmem>>, vector<16x128xbf16>
    %c0_13 = arith.constant 0 : index
    %c0_14 = arith.constant 0 : index
    %c0_15 = arith.constant 0 : index
    %10 = vector.load %arg2[%c0_13, %c0_14, %c0_15] : memref<4x16x32xbf16, #tpu.memory_space<vmem>>, vector<1x16x32xbf16>
    %11 = vector.shape_cast %10 : vector<1x16x32xbf16> to vector<16x32xbf16>
    %cst_16 = arith.constant dense<0.000000e+00> : vector<16x1024xf32>
    %12 = tpu.matmul %9, %6, %cst_16 {dimension_numbers = #tpu.dot_dimension_numbers<[1], [0], [0], [1], [0, 0, 1, 1], [], []>} : vector<16x128xbf16>, vector<128x1024xbf16>, vector<16x1024xf32> -> vector<16x1024xf32>
    %cst_17 = arith.constant dense<0.000000e+00> : vector<16x1024xf32>
    %13 = tpu.matmul %11, %7, %cst_17 {dimension_numbers = #tpu.dot_dimension_numbers<[1], [0], [0], [1], [0, 0, 1, 1], [], []>} : vector<16x32xbf16>, vector<32x1024xbf16>, vector<16x1024xf32> -> vector<16x1024xf32>
    %14 = arith.addf %12, %13 : vector<16x1024xf32>
    %15 = vector.broadcast %8 : vector<1x1024xf32> to vector<16x1024xf32>
    %16 = arith.addf %14, %15 : vector<16x1024xf32>
    %17 = arith.truncf %16 : vector<16x1024xf32> to vector<16x1024xbf16>
    %c0_18 = arith.constant 0 : index
    %c0_19 = arith.constant 0 : index
    %18 = vector.load %arg7[%c0_18, %c0_19] : memref<4096x64xbf16, #tpu.memory_space<vmem>>, vector<1024x64xbf16>
    %cst_20 = arith.constant dense<0.000000e+00> : vector<16x64xf32>
    %19 = tpu.matmul %17, %18, %cst_20 {dimension_numbers = #tpu.dot_dimension_numbers<[1], [0], [0], [1], [0, 0, 1, 1], [], []>} : vector<16x1024xbf16>, vector<1024x64xbf16>, vector<16x64xf32> -> vector<16x64xf32>
    %20 = arith.addf %5, %19 : vector<16x64xf32>
    %c0_21 = arith.constant 0 : index
    %c128 = arith.constant 128 : index
    %21 = vector.load %arg1[%c0_21, %c128] : memref<16x512xbf16, #tpu.memory_space<vmem>>, vector<16x128xbf16>
    %c1 = arith.constant 1 : index
    %c0_22 = arith.constant 0 : index
    %c0_23 = arith.constant 0 : index
    %22 = vector.load %arg2[%c1, %c0_22, %c0_23] : memref<4x16x32xbf16, #tpu.memory_space<vmem>>, vector<1x16x32xbf16>
    %23 = vector.shape_cast %22 : vector<1x16x32xbf16> to vector<16x32xbf16>
    %cst_24 = arith.constant dense<0.000000e+00> : vector<16x1024xf32>
    %24 = tpu.matmul %21, %6, %cst_24 {dimension_numbers = #tpu.dot_dimension_numbers<[1], [0], [0], [1], [0, 0, 1, 1], [], []>} : vector<16x128xbf16>, vector<128x1024xbf16>, vector<16x1024xf32> -> vector<16x1024xf32>
    %cst_25 = arith.constant dense<0.000000e+00> : vector<16x1024xf32>
    %25 = tpu.matmul %23, %7, %cst_25 {dimension_numbers = #tpu.dot_dimension_numbers<[1], [0], [0], [1], [0, 0, 1, 1], [], []>} : vector<16x32xbf16>, vector<32x1024xbf16>, vector<16x1024xf32> -> vector<16x1024xf32>
    %26 = arith.addf %24, %25 : vector<16x1024xf32>
    %27 = vector.broadcast %8 : vector<1x1024xf32> to vector<16x1024xf32>
    %28 = arith.addf %26, %27 : vector<16x1024xf32>
    %29 = arith.truncf %28 : vector<16x1024xf32> to vector<16x1024xbf16>
    %c1024 = arith.constant 1024 : index
    %c0_26 = arith.constant 0 : index
    %30 = vector.load %arg7[%c1024, %c0_26] : memref<4096x64xbf16, #tpu.memory_space<vmem>>, vector<1024x64xbf16>
    %cst_27 = arith.constant dense<0.000000e+00> : vector<16x64xf32>
    %31 = tpu.matmul %29, %30, %cst_27 {dimension_numbers = #tpu.dot_dimension_numbers<[1], [0], [0], [1], [0, 0, 1, 1], [], []>} : vector<16x1024xbf16>, vector<1024x64xbf16>, vector<16x64xf32> -> vector<16x64xf32>
    %32 = arith.addf %20, %31 : vector<16x64xf32>
    %c0_28 = arith.constant 0 : index
    %c256 = arith.constant 256 : index
    %33 = vector.load %arg1[%c0_28, %c256] : memref<16x512xbf16, #tpu.memory_space<vmem>>, vector<16x128xbf16>
    %c2 = arith.constant 2 : index
    %c0_29 = arith.constant 0 : index
    %c0_30 = arith.constant 0 : index
    %34 = vector.load %arg2[%c2, %c0_29, %c0_30] : memref<4x16x32xbf16, #tpu.memory_space<vmem>>, vector<1x16x32xbf16>
    %35 = vector.shape_cast %34 : vector<1x16x32xbf16> to vector<16x32xbf16>
    %cst_31 = arith.constant dense<0.000000e+00> : vector<16x1024xf32>
    %36 = tpu.matmul %33, %6, %cst_31 {dimension_numbers = #tpu.dot_dimension_numbers<[1], [0], [0], [1], [0, 0, 1, 1], [], []>} : vector<16x128xbf16>, vector<128x1024xbf16>, vector<16x1024xf32> -> vector<16x1024xf32>
    %cst_32 = arith.constant dense<0.000000e+00> : vector<16x1024xf32>
    %37 = tpu.matmul %35, %7, %cst_32 {dimension_numbers = #tpu.dot_dimension_numbers<[1], [0], [0], [1], [0, 0, 1, 1], [], []>} : vector<16x32xbf16>, vector<32x1024xbf16>, vector<16x1024xf32> -> vector<16x1024xf32>
    %38 = arith.addf %36, %37 : vector<16x1024xf32>
    %39 = vector.broadcast %8 : vector<1x1024xf32> to vector<16x1024xf32>
    %40 = arith.addf %38, %39 : vector<16x1024xf32>
    %41 = arith.truncf %40 : vector<16x1024xf32> to vector<16x1024xbf16>
    %c2048 = arith.constant 2048 : index
    %c0_33 = arith.constant 0 : index
    %42 = vector.load %arg7[%c2048, %c0_33] : memref<4096x64xbf16, #tpu.memory_space<vmem>>, vector<1024x64xbf16>
    %cst_34 = arith.constant dense<0.000000e+00> : vector<16x64xf32>
    %43 = tpu.matmul %41, %42, %cst_34 {dimension_numbers = #tpu.dot_dimension_numbers<[1], [0], [0], [1], [0, 0, 1, 1], [], []>} : vector<16x1024xbf16>, vector<1024x64xbf16>, vector<16x64xf32> -> vector<16x64xf32>
    %44 = arith.addf %32, %43 : vector<16x64xf32>
    %c0_35 = arith.constant 0 : index
    %c384 = arith.constant 384 : index
    %45 = vector.load %arg1[%c0_35, %c384] : memref<16x512xbf16, #tpu.memory_space<vmem>>, vector<16x128xbf16>
    %c3 = arith.constant 3 : index
    %c0_36 = arith.constant 0 : index
    %c0_37 = arith.constant 0 : index
    %46 = vector.load %arg2[%c3, %c0_36, %c0_37] : memref<4x16x32xbf16, #tpu.memory_space<vmem>>, vector<1x16x32xbf16>
    %47 = vector.shape_cast %46 : vector<1x16x32xbf16> to vector<16x32xbf16>
    %cst_38 = arith.constant dense<0.000000e+00> : vector<16x1024xf32>
    %48 = tpu.matmul %45, %6, %cst_38 {dimension_numbers = #tpu.dot_dimension_numbers<[1], [0], [0], [1], [0, 0, 1, 1], [], []>} : vector<16x128xbf16>, vector<128x1024xbf16>, vector<16x1024xf32> -> vector<16x1024xf32>
    %cst_39 = arith.constant dense<0.000000e+00> : vector<16x1024xf32>
    %49 = tpu.matmul %47, %7, %cst_39 {dimension_numbers = #tpu.dot_dimension_numbers<[1], [0], [0], [1], [0, 0, 1, 1], [], []>} : vector<16x32xbf16>, vector<32x1024xbf16>, vector<16x1024xf32> -> vector<16x1024xf32>
    %50 = arith.addf %48, %49 : vector<16x1024xf32>
    %51 = vector.broadcast %8 : vector<1x1024xf32> to vector<16x1024xf32>
    %52 = arith.addf %50, %51 : vector<16x1024xf32>
    %53 = arith.truncf %52 : vector<16x1024xf32> to vector<16x1024xbf16>
    %c3072 = arith.constant 3072 : index
    %c0_40 = arith.constant 0 : index
    %54 = vector.load %arg7[%c3072, %c0_40] : memref<4096x64xbf16, #tpu.memory_space<vmem>>, vector<1024x64xbf16>
    %cst_41 = arith.constant dense<0.000000e+00> : vector<16x64xf32>
    %55 = tpu.matmul %53, %54, %cst_41 {dimension_numbers = #tpu.dot_dimension_numbers<[1], [0], [0], [1], [0, 0, 1, 1], [], []>} : vector<16x1024xbf16>, vector<1024x64xbf16>, vector<16x64xf32> -> vector<16x64xf32>
    %56 = arith.addf %44, %55 : vector<16x64xf32>
    %c0_42 = arith.constant 0 : index
    %c0_43 = arith.constant 0 : index
    %57 = vector.load %arg10[%c0_42, %c0_43] : memref<16x64xf32, #tpu.memory_space<vmem>>, vector<16x64xf32>
    tpu.vector_store %arg10[%c0_42, %c0_43], %56 {strides = array<i32>} : memref<16x64xf32, #tpu.memory_space<vmem>>, vector<16x64xf32>,
    return
  }
  func.func @transform_0(%arg0: i32) -> (i32, i32) {
    %c0_i32 = arith.constant 0 : i32
    %c0_i32_0 = arith.constant 0 : i32
    return %arg0, %c0_i32 : i32, i32
  }
  func.func @transform_1(%arg0: i32) -> (i32, i32, i32) {
    %c0_i32 = arith.constant 0 : i32
    %c0_i32_0 = arith.constant 0 : i32
    %c0_i32_1 = arith.constant 0 : i32
    return %c0_i32, %arg0, %c0_i32_0 : i32, i32, i32
  }
  func.func @transform_2(%arg0: i32) -> (i32, i32) {
    %c0_i32 = arith.constant 0 : i32
    %c0_i32_0 = arith.constant 0 : i32
    return %arg0, %c0_i32 : i32, i32
  }
  func.func @transform_3(%arg0: i32) -> (i32, i32) {
    %c0_i32 = arith.constant 0 : i32
    %c0_i32_0 = arith.constant 0 : i32
    %c0_i32_1 = arith.constant 0 : i32
    return %c0_i32, %c0_i32_0 : i32, i32
  }
  func.func @transform_4(%arg0: i32) -> (i32, i32) {
    %c0_i32 = arith.constant 0 : i32
    %c0_i32_0 = arith.constant 0 : i32
    %c0_i32_1 = arith.constant 0 : i32
    return %c0_i32, %c0_i32_0 : i32, i32
  }
  func.func @transform_5(%arg0: i32) -> (i32, i32) {
    %c0_i32 = arith.constant 0 : i32
    %c0_i32_0 = arith.constant 0 : i32
    %c0_i32_1 = arith.constant 0 : i32
    return %c0_i32, %c0_i32_0 : i32, i32
  }
  func.func @transform_6(%arg0: i32) -> (i32, i32) {
    %c0_i32 = arith.constant 0 : i32
    %c0_i32_0 = arith.constant 0 : i32
    %c0_i32_1 = arith.constant 0 : i32
    return %c0_i32, %c0_i32_0 : i32, i32
  }
  func.func @transform_7(%arg0: i32) -> (i32, i32) {
    %c0_i32 = arith.constant 0 : i32
    %c0_i32_0 = arith.constant 0 : i32
    %c0_i32_1 = arith.constant 0 : i32
    return %c0_i32, %c0_i32_0 : i32, i32
  }
  func.func @transform_8(%arg0: i32) -> (i32, i32) {
    %c0_i32 = arith.constant 0 : i32
    %c0_i32_0 = arith.constant 0 : i32
    %c0_i32_1 = arith.constant 0 : i32
    return %c0_i32, %c0_i32_0 : i32, i32
  }
  func.func @transform_9(%arg0: i32) -> (i32, i32) {
    %c0_i32 = arith.constant 0 : i32
    %c0_i32_0 = arith.constant 0 : i32
    return %arg0, %c0_i32 : i32, i32
  }
}

</mosaic_0001>

<llo_original>
// kernel: table_decoder_forward.2
$region0: #{table_decoder_forward.2}
  #allocation0 [shape = 'u32[]', space=smem, size = 0x4, offset = 0x4, fixed_abs, tag = 'smem constant byte address 0x4 - core index']
  #allocation1 [shape = 'u32[144,128]{1,0:T(1,128)}', space=vmem, size = 0x12000, scoped, tag = 'internal scratch']
  %s0 = inlined_call_operand.vmem [shape: bf16[32,256], index: 0, kind: input, shape index: {}]
  %s1 = inlined_call_operand.hbm [shape: bf16[256,256], index: 1, kind: input, shape index: {}]
  %s2 = inlined_call_operand.vmem [shape: f32[1,256], index: 2, kind: input, shape index: {}]
  %s3 = inlined_call_operand.hbm [shape: bf16[256,512], index: 3, kind: input, shape index: {}]
  %s4 = inlined_call_operand.vmem [shape: f32[1,512], index: 4, kind: input, shape index: {}]
  %s5 = inlined_call_operand.vmem [shape: bf16[32,512], index: 5, kind: output, shape index: {}]
  %s6 = sld [smem:[#allocation0]]
  $region61: #{table_decoder_forward.2} parent=0
    _
  %s8 = ssub.s32 1, %s6
  %s9 = scalar_select 0, %s8, %s6
  $region1: #{table_decoder_forward.2} parent=0
    #allocation2 [shape = 'u8[131072]{0}', space=vmem, size = 0x20000, scoped, tag = 'input window, operand 1, single buffered']
    #allocation3 [shape = 's32[2]{0}', space=sflag, size = 0x8, scoped, tag = 'scoped memory for table_decoder_forward.2']
    #allocation4 [shape = 'u8[262144]{0}', space=vmem, size = 0x40000, scoped, tag = 'input window, operand 3, single buffered']
    #allocation5 [shape = 's32[1]{0}', space=sflag, size = 0x4, scoped, tag = 'scoped memory for table_decoder_forward.2']
    %10 = vsyncpa [#allocation3], 0
    %11 = vsyncpa [#allocation5], 0
    loop: start=0, step=1, limit=4
    $region2: #{table_decoder_forward.2} parent=1 // loop_pre_header
      _
    $region3: #{table_decoder_forward.2} parent=1 // loop_header
      %s13 = sphi 0, %s17
      %p14 = scmp.ge.s32.totalorder %s13, 4
      %s23 = sphi 0, %s25
      %s26 = sphi 0, %s23
      %s27 = sphi 0, %s26
      %s43 = sphi 0, %s27
      %s47 = sphi 0, %s47
      %s49 = sphi 0, %s47
      %s50 = sphi 0, %s49
      %s64 = sphi 0, %s50
      %s68 = sphi 0, %s68
      %s70 = sphi 0, %s68
      %s71 = sphi 0, %s70
      %s85 = sphi 0, %s71
      %s89 = sphi 0, %s89
      %s91 = sphi 0, %s89
      %s92 = sphi 0, %s91
      %s106 = sphi 0, %s92
      %s110 = sphi 0, %s110
      %s112 = sphi 0, %s110
      %s113 = sphi 0, %s112
      %s127 = sphi 0, %s113
      %s133 = sphi 0, %s135
      %s136 = sphi 0, %s133
      %s137 = sphi 0, %s136
      %s153 = sphi 0, %s137
    $region4: #{table_decoder_forward.2} parent=1 // loop_header_branch
      %16 = sbr.rel (%p14) target = $region8
    $region5: #{table_decoder_forward.2} parent=1 // loop_body
      %s18 = ssub.s32 %s13, 1
      %s19 = ssub.s32 %s13, 2
      %s20 = sadd.s32 %s13, 1
      %s21 = ssub.s32 %s13, %s20
      %p22 = scmp.eq.s32.totalorder %s21, 0
      %s24 = sadd.s32 %s23, 1
      %s25 = scalar_select %p22, %s23, %s24
      %p28 = pneg %p22
      %p29 = scmp.eq.s32.totalorder %s13, 1
      %p30 = por %p28, %p29
      %p31 = scmp.ne.s32.totalorder %s23, %s26
      %p32 = scmp.eq.s32.totalorder %s13, 0
      %p33 = por %p31, %p32
      %p34 = scmp.ne.s32.totalorder %s23, %s26
      %p35 = scmp.eq.s32.totalorder %s18, 1
      %p36 = por %p34, %p35
      %p37 = scmp.ne.s32.totalorder %s26, %s27
      %p38 = scmp.eq.s32.totalorder %s18, 0
      %p39 = por %p37, %p38
      %p40 = scmp.ne.s32.totalorder %s26, %s27
      %p41 = scmp.eq.s32.totalorder %s19, 1
      %p42 = por %p40, %p41
      %p44 = scmp.ne.s32.totalorder %s27, %s43
      %p45 = scmp.eq.s32.totalorder %s19, 0
      %p46 = por %p44, %p45
      %s48 = sadd.s32 %s47, 1
      %p51 = scmp.eq.s32.totalorder %s13, 1
      %p52 = scmp.ne.s32.totalorder %s47, %s49
      %p53 = scmp.eq.s32.totalorder %s13, 0
      %p54 = por %p52, %p53
      %p55 = scmp.ne.s32.totalorder %s47, %s49
      %p56 = scmp.eq.s32.totalorder %s18, 1
      %p57 = por %p55, %p56
      %p58 = scmp.ne.s32.totalorder %s49, %s50
      %p59 = scmp.eq.s32.totalorder %s18, 0
      %p60 = por %p58, %p59
      %p61 = scmp.ne.s32.totalorder %s49, %s50
      %p62 = scmp.eq.s32.totalorder %s19, 1
      %p63 = por %p61, %p62
      %p65 = scmp.ne.s32.totalorder %s50, %s64
      %p66 = scmp.eq.s32.totalorder %s19, 0
      %p67 = por %p65, %p66
      %s69 = sadd.s32 %s68, 1
      %p72 = scmp.eq.s32.totalorder %s13, 1
      %p73 = scmp.ne.s32.totalorder %s68, %s70
      %p74 = scmp.eq.s32.totalorder %s13, 0
      %p75 = por %p73, %p74
      %p76 = scmp.ne.s32.totalorder %s68, %s70
      %p77 = scmp.eq.s32.totalorder %s18, 1
      %p78 = por %p76, %p77
      %p79 = scmp.ne.s32.totalorder %s70, %s71
      %p80 = scmp.eq.s32.totalorder %s18, 0
      %p81 = por %p79, %p80
      %p82 = scmp.ne.s32.totalorder %s70, %s71
      %p83 = scmp.eq.s32.totalorder %s19, 1
      %p84 = por %p82, %p83
      %p86 = scmp.ne.s32.totalorder %s71, %s85
      %p87 = scmp.eq.s32.totalorder %s19, 0
      %p88 = por %p86, %p87
      %s90 = sadd.s32 %s89, 1
      %p93 = scmp.eq.s32.totalorder %s13, 1
      %p94 = scmp.ne.s32.totalorder %s89, %s91
      %p95 = scmp.eq.s32.totalorder %s13, 0
      %p96 = por %p94, %p95
      %p97 = scmp.ne.s32.totalorder %s89, %s91
      %p98 = scmp.eq.s32.totalorder %s18, 1
      %p99 = por %p97, %p98
      %p100 = scmp.ne.s32.totalorder %s91, %s92
      %p101 = scmp.eq.s32.totalorder %s18, 0
      %p102 = por %p100, %p101
      %p103 = scmp.ne.s32.totalorder %s91, %s92
      %p104 = scmp.eq.s32.totalorder %s19, 1
      %p105 = por %p103, %p104
      %p107 = scmp.ne.s32.totalorder %s92, %s106
      %p108 = scmp.eq.s32.totalorder %s19, 0
      %p109 = por %p107, %p108
      %s111 = sadd.s32 %s110, 1
      %p114 = scmp.eq.s32.totalorder %s13, 1
      %p115 = scmp.ne.s32.totalorder %s110, %s112
      %p116 = scmp.eq.s32.totalorder %s13, 0
      %p117 = por %p115, %p116
      %p118 = scmp.ne.s32.totalorder %s110, %s112
      %p119 = scmp.eq.s32.totalorder %s18, 1
      %p120 = por %p118, %p119
      %p121 = scmp.ne.s32.totalorder %s112, %s113
      %p122 = scmp.eq.s32.totalorder %s18, 0
      %p123 = por %p121, %p122
      %p124 = scmp.ne.s32.totalorder %s112, %s113
      %p125 = scmp.eq.s32.totalorder %s19, 1
      %p126 = por %p124, %p125
      %p128 = scmp.ne.s32.totalorder %s113, %s127
      %p129 = scmp.eq.s32.totalorder %s19, 0
      %p130 = por %p128, %p129
      %s131 = ssub.s32 %s13, %s20
      %p132 = scmp.eq.s32.totalorder %s131, 0
      %s134 = sadd.s32 %s133, 1
      %s135 = scalar_select %p132, %s133, %s134
      %p138 = pneg %p132
      %p139 = scmp.eq.s32.totalorder %s13, 1
      %p140 = por %p138, %p139
      %p141 = scmp.ne.s32.totalorder %s133, %s136
      %p142 = scmp.eq.s32.totalorder %s13, 0
      %p143 = por %p141, %p142
      %p144 = scmp.ne.s32.totalorder %s133, %s136
      %p145 = scmp.eq.s32.totalorder %s18, 1
      %p146 = por %p144, %p145
      %p147 = scmp.ne.s32.totalorder %s136, %s137
      %p148 = scmp.eq.s32.totalorder %s18, 0
      %p149 = por %p147, %p148
      %p150 = scmp.ne.s32.totalorder %s136, %s137
      %p151 = scmp.eq.s32.totalorder %s19, 1
      %p152 = por %p150, %p151
      %p154 = scmp.ne.s32.totalorder %s137, %s153
      %p155 = scmp.eq.s32.totalorder %s19, 0
      %p156 = por %p154, %p155
      %p157 = scmp.le.s32.totalorder 1, %s13
      %p158 = scmp.lt.s32.totalorder %s13, 3
      %p159 = pnand %p157, %p158
      %p160 = pneg %p159
      // Predicated region
      $region9: #{table_decoder_forward.2} parent=5 // pred_check
        _
      $region10: #{table_decoder_forward.2} parent=5 // pred_check_branch
        %162 = sbr.rel (%p159) target = $region12
      $region11: #{table_decoder_forward.2} parent=5 // pred_region
        %s163 = ssub.s32 %s13, 1
        // Predicated region
        $region13: #{table_decoder_forward.2} parent=11 // pred_check
          %p164 = pneg %p60
        $region14: #{table_decoder_forward.2} parent=11 // pred_check_branch
          %166 = sbr.rel (%p164) target = $region16
        $region15: #{table_decoder_forward.2} parent=11 // pred_region
          %s168 = ssub.s32 4096, 4096
          %169 = vsyncadd [#allocation3], %s168
          %s170 = sshll.u32 [#allocation2], 4
          %s171 = int_to_ptr.vmem [resolvable:$true] %s170
          %176 = dma.hbm_to_vmem [thread:$0]  %s1, 4096, %s171, [#allocation3], 128, 128, 8
        $region16: #{table_decoder_forward.2} parent=11 // pred_fallthru
          _
        // Predicated region
        $region17: #{table_decoder_forward.2} parent=11 // pred_check
          %p177 = pneg %p81
        $region18: #{table_decoder_forward.2} parent=11 // pred_check_branch
          %179 = sbr.rel (%p177) target = $region20
        $region19: #{table_decoder_forward.2} parent=11 // pred_region
          _
        $region20: #{table_decoder_forward.2} parent=11 // pred_fallthru
          _
        // Predicated region
        $region21: #{table_decoder_forward.2} parent=11 // pred_check
          %p180 = pneg %p102
        $region22: #{table_decoder_forward.2} parent=11 // pred_check_branch
          %182 = sbr.rel (%p180) target = $region24
        $region23: #{table_decoder_forward.2} parent=11 // pred_region
          %s184 = ssub.s32 8192, 8192
          %185 = vsyncadd [#allocation5], %s184
          %s186 = sshll.u32 [#allocation4], 4
          %s187 = int_to_ptr.vmem [resolvable:$true] %s186
          %192 = dma.hbm_to_vmem [thread:$0]  %s3, 8192, %s187, [#allocation5], 256, 256, 16
        $region24: #{table_decoder_forward.2} parent=11 // pred_fallthru
          _
        // Predicated region
        $region25: #{table_decoder_forward.2} parent=11 // pred_check
          %p193 = pneg %p123
        $region26: #{table_decoder_forward.2} parent=11 // pred_check_branch
          %195 = sbr.rel (%p193) target = $region28
        $region27: #{table_decoder_forward.2} parent=11 // pred_region
          _
        $region28: #{table_decoder_forward.2} parent=11 // pred_fallthru
          _
      $region12: #{table_decoder_forward.2} parent=5 // pred_fallthru
        _
      %p196 = scmp.lt.s32.totalorder %s13, 2
      // Predicated region
      $region29: #{table_decoder_forward.2} parent=5 // pred_check
        %p197 = pneg %p196
      $region30: #{table_decoder_forward.2} parent=5 // pred_check_branch
        %199 = sbr.rel (%p197) target = $region32
      $region31: #{table_decoder_forward.2} parent=5 // pred_region
        // Predicated region
        $region33: #{table_decoder_forward.2} parent=31 // pred_check
          %p200 = pneg %p33
        $region34: #{table_decoder_forward.2} parent=31 // pred_check_branch
          %202 = sbr.rel (%p200) target = $region36
        $region35: #{table_decoder_forward.2} parent=31 // pred_region
          %s203 = smul.u32 2, %s13
          %p204 = scmp.lt.s32.totalorder %s203, 3
          %s205 = scalar_select %p204, %s203, 3
          %s206 = smul.addr %s205, 2
          %s207 = smul.addr %s206, 4
          %s208 = scalar_lea.vmem %s0, %s207
          %s209 = smul.u32 2, %s13
        $region36: #{table_decoder_forward.2} parent=31 // pred_fallthru
          _
      $region32: #{table_decoder_forward.2} parent=5 // pred_fallthru
        _
      %p210 = scmp.le.s32.totalorder 1, %s13
      %p211 = scmp.lt.s32.totalorder %s13, 3
      %p212 = pnand %p210, %p211
      %p213 = pneg %p212
      // Predicated region
      $region37: #{table_decoder_forward.2} parent=5 // pred_check
        _
      $region38: #{table_decoder_forward.2} parent=5 // pred_check_branch
        %215 = sbr.rel (%p212) target = $region40
      $region39: #{table_decoder_forward.2} parent=5 // pred_region
        %s216 = ssub.s32 %s13, 1
        // Predicated region
        $region41: #{table_decoder_forward.2} parent=39 // pred_check
          %p217 = pneg %p60
        $region42: #{table_decoder_forward.2} parent=39 // pred_check_branch
          %219 = sbr.rel (%p217) target = $region44
        $region43: #{table_decoder_forward.2} parent=39 // pred_region
          %220 = dma.done [#allocation3], 4096
        $region44: #{table_decoder_forward.2} parent=39 // pred_fallthru
          _
        // Predicated region
        $region45: #{table_decoder_forward.2} parent=39 // pred_check
          %p221 = pneg %p102
        $region46: #{table_decoder_forward.2} parent=39 // pred_check_branch
          %223 = sbr.rel (%p221) target = $region48
        $region47: #{table_decoder_forward.2} parent=39 // pred_region
          %224 = dma.done [#allocation5], 8192
        $region48: #{table_decoder_forward.2} parent=39 // pred_fallthru
          _
        %s225 = smul.u32 2, %s18
        %p226 = scmp.lt.s32.totalorder %s225, 3
        %s227 = scalar_select %p226, %s225, 3
        %s228 = smul.addr %s227, 2
        %s229 = smul.addr %s228, 4
        %s230 = scalar_lea.vmem %s0, %s229
        %p231 = pneg %p39
        %p232 = pneg %p36
        %p233 = pneg %p60
        %p234 = pneg %p57
        %p235 = pneg %p81
        %p236 = pneg %p78
        %p237 = pneg %p102
        %p238 = pneg %p99
        %p239 = pneg %p123
        %p240 = pneg %p120
        %p241 = pneg %p149
        %p242 = pneg %p146
        %s243 = smul.u32 2, %s18
        %p244 = scmp.lt.s32.totalorder %s243, 3
        %s245 = scalar_select %p244, %s243, 3
        %s246 = smul.addr %s245, 4
        %s247 = smul.addr %s246, 4
        %s248 = scalar_lea.vmem %s5, %s247
        %s249 = smul.u32 2, %s18
        %p250 = scmp.lt.s32.totalorder %s249, 3
        %s251 = scalar_select %p250, %s249, 3
        %s252 = smul.addr %s251, 2
        %s253 = smul.addr %s252, 4
        %s254 = scalar_lea.vmem %s0, %s253
        %s255 = smul.u32 2, %s18
        %s256 = smul.u32 2, %s18
        %p257 = scmp.lt.s32.totalorder %s256, 3
        %s258 = scalar_select %p257, %s256, 3
        %s259 = smul.addr %s258, 4
        %s260 = smul.addr %s259, 4
        %s261 = scalar_lea.vmem %s5, %s260
        %s262 = smul.u32 2, %s18
        %v263 = vld [vmem:[%s254] sm:$0xff]
        %v264 = vld [vmem:[%s254 + $0x8] sm:$0xff]
        %v265 = vld [vmem:[#allocation2] sm:$0xff]
        %v266 = vld [vmem:[#allocation2 + $0x8] sm:$0xff]
        %v267 = vld [vmem:[#allocation2 + $0x10] sm:$0xff]
        %v268 = vld [vmem:[#allocation2 + $0x18] sm:$0xff]
        %v269 = vld [vmem:[#allocation2 + $0x20] sm:$0xff]
        %v270 = vld [vmem:[#allocation2 + $0x28] sm:$0xff]
        %v271 = vld [vmem:[#allocation2 + $0x30] sm:$0xff]
        %v272 = vld [vmem:[#allocation2 + $0x38] sm:$0xff]
        %v273 = vld [vmem:[#allocation2 + $0x40] sm:$0xff]
        %v274 = vld [vmem:[#allocation2 + $0x48] sm:$0xff]
        %v275 = vld [vmem:[#allocation2 + $0x50] sm:$0xff]
        %v276 = vld [vmem:[#allocation2 + $0x58] sm:$0xff]
        %v277 = vld [vmem:[#allocation2 + $0x60] sm:$0xff]
        %v278 = vld [vmem:[#allocation2 + $0x68] sm:$0xff]
        %v279 = vld [vmem:[#allocation2 + $0x70] sm:$0xff]
        %v280 = vld [vmem:[#allocation2 + $0x78] sm:$0xff]
        %v281 = vld [vmem:[#allocation2 + $0x80] sm:$0xff]
        %v282 = vld [vmem:[#allocation2 + $0x88] sm:$0xff]
        %v283 = vld [vmem:[#allocation2 + $0x90] sm:$0xff]
        %v284 = vld [vmem:[#allocation2 + $0x98] sm:$0xff]
        %v285 = vld [vmem:[#allocation2 + $0xa0] sm:$0xff]
        %v286 = vld [vmem:[#allocation2 + $0xa8] sm:$0xff]
        %v287 = vld [vmem:[#allocation2 + $0xb0] sm:$0xff]
        %v288 = vld [vmem:[#allocation2 + $0xb8] sm:$0xff]
        %v289 = vld [vmem:[#allocation2 + $0xc0] sm:$0xff]
        %v290 = vld [vmem:[#allocation2 + $0xc8] sm:$0xff]
        %v291 = vld [vmem:[#allocation2 + $0xd0] sm:$0xff]
        %v292 = vld [vmem:[#allocation2 + $0xd8] sm:$0xff]
        %v293 = vld [vmem:[#allocation2 + $0xe0] sm:$0xff]
        %v294 = vld [vmem:[#allocation2 + $0xe8] sm:$0xff]
        %v295 = vld [vmem:[#allocation2 + $0xf0] sm:$0xff]
        %v296 = vld [vmem:[#allocation2 + $0xf8] sm:$0xff]
        %v297 = vld [vmem:[%s2] sm:$0x3]
        %v299 = vlaneseq
        %v300 = vshrl.u32 %v299, 7
        %v301 = vsub.s32 0, %v300
        %v302 = vrot.slane %v297, %v301
        %v303 = vlaneseq
        %v304 = vshrl.u32 %v303, 7
        %v305 = vsub.s32 1, %v304
        %v306 = vrot.slane %v297, %v305
        %v311 = vunpack.c.l.b16 %v263
        %v312 = vunpack.c.h.b16 %v263
        %v313 = vunpack.c.l.b16 %v264
        %v314 = vunpack.c.h.b16 %v264
        %v315 = vpack.c.b16 %v313, %v311
        %v316 = vpack.c.b16 %v314, %v312
        %v351 = vunpack.c.l.b16 %v265
        %v352 = vunpack.c.h.b16 %v265
        %v353 = vunpack.c.l.b16 %v266
        %v354 = vunpack.c.h.b16 %v266
        %v355 = vunpack.c.l.b16 %v267
        %v356 = vunpack.c.h.b16 %v267
        %v357 = vunpack.c.l.b16 %v268
        %v358 = vunpack.c.h.b16 %v268
        %v359 = vunpack.c.l.b16 %v269
        %v360 = vunpack.c.h.b16 %v269
        %v361 = vunpack.c.l.b16 %v270
        %v362 = vunpack.c.h.b16 %v270
        %v363 = vunpack.c.l.b16 %v271
        %v364 = vunpack.c.h.b16 %v271
        %v365 = vunpack.c.l.b16 %v272
        %v366 = vunpack.c.h.b16 %v272
        %v367 = vunpack.c.l.b16 %v273
        %v368 = vunpack.c.h.b16 %v273
        %v369 = vunpack.c.l.b16 %v274
        %v370 = vunpack.c.h.b16 %v274
        %v371 = vunpack.c.l.b16 %v275
        %v372 = vunpack.c.h.b16 %v275
        %v373 = vunpack.c.l.b16 %v276
        %v374 = vunpack.c.h.b16 %v276
        %v375 = vunpack.c.l.b16 %v277
        %v376 = vunpack.c.h.b16 %v277
        %v377 = vunpack.c.l.b16 %v278
        %v378 = vunpack.c.h.b16 %v278
        %v379 = vunpack.c.l.b16 %v279
        %v380 = vunpack.c.h.b16 %v279
        %v381 = vunpack.c.l.b16 %v280
        %v382 = vunpack.c.h.b16 %v280
        %v383 = vunpack.c.l.b16 %v281
        %v384 = vunpack.c.h.b16 %v281
        %v385 = vunpack.c.l.b16 %v282
        %v386 = vunpack.c.h.b16 %v282
        %v387 = vunpack.c.l.b16 %v283
        %v388 = vunpack.c.h.b16 %v283
        %v389 = vunpack.c.l.b16 %v284
        %v390 = vunpack.c.h.b16 %v284
        %v391 = vunpack.c.l.b16 %v285
        %v392 = vunpack.c.h.b16 %v285
        %v393 = vunpack.c.l.b16 %v286
        %v394 = vunpack.c.h.b16 %v286
        %v395 = vunpack.c.l.b16 %v287
        %v396 = vunpack.c.h.b16 %v287
        %v397 = vunpack.c.l.b16 %v288
        %v398 = vunpack.c.h.b16 %v288
        %v399 = vunpack.c.l.b16 %v289
        %v400 = vunpack.c.h.b16 %v289
        %v401 = vunpack.c.l.b16 %v290
        %v402 = vunpack.c.h.b16 %v290
        %v403 = vunpack.c.l.b16 %v291
        %v404 = vunpack.c.h.b16 %v291
        %v405 = vunpack.c.l.b16 %v292
        %v406 = vunpack.c.h.b16 %v292
        %v407 = vunpack.c.l.b16 %v293
        %v408 = vunpack.c.h.b16 %v293
        %v409 = vunpack.c.l.b16 %v294
        %v410 = vunpack.c.h.b16 %v294
        %v411 = vunpack.c.l.b16 %v295
        %v412 = vunpack.c.h.b16 %v295
        %v413 = vunpack.c.l.b16 %v296
        %v414 = vunpack.c.h.b16 %v296
        %v415 = vpack.c.b16 %v353, %v351
        %v416 = vpack.c.b16 %v354, %v352
        %v417 = vpack.c.b16 %v357, %v355
        %v418 = vpack.c.b16 %v358, %v356
        %v419 = vpack.c.b16 %v361, %v359
        %v420 = vpack.c.b16 %v362, %v360
        %v421 = vpack.c.b16 %v365, %v363
        %v422 = vpack.c.b16 %v366, %v364
        %v423 = vpack.c.b16 %v369, %v367
        %v424 = vpack.c.b16 %v370, %v368
        %v425 = vpack.c.b16 %v373, %v371
        %v426 = vpack.c.b16 %v374, %v372
        %v427 = vpack.c.b16 %v377, %v375
        %v428 = vpack.c.b16 %v378, %v376
        %v429 = vpack.c.b16 %v381, %v379
        %v430 = vpack.c.b16 %v382, %v380
        %v431 = vpack.c.b16 %v385, %v383
        %v432 = vpack.c.b16 %v386, %v384
        %v433 = vpack.c.b16 %v389, %v387
        %v434 = vpack.c.b16 %v390, %v388
        %v435 = vpack.c.b16 %v393, %v391
        %v436 = vpack.c.b16 %v394, %v392
        %v437 = vpack.c.b16 %v397, %v395
        %v438 = vpack.c.b16 %v398, %v396
        %v439 = vpack.c.b16 %v401, %v399
        %v440 = vpack.c.b16 %v402, %v400
        %v441 = vpack.c.b16 %v405, %v403
        %v442 = vpack.c.b16 %v406, %v404
        %v443 = vpack.c.b16 %v409, %v407
        %v444 = vpack.c.b16 %v410, %v408
        %v445 = vpack.c.b16 %v413, %v411
        %v446 = vpack.c.b16 %v414, %v412
        %479 = vmatprep.subr.bf16.mxu0 %v430
        %480 = vmatpush1.bf16.msra.mxu0 %v429
        %481 = vmatprep.subr.bf16.mxu0 %v428
        %482 = vmatpush1.bf16.msra.mxu0 %v427
        %483 = vmatprep.subr.bf16.mxu0 %v426
        %484 = vmatpush1.bf16.msra.mxu0 %v425
        %485 = vmatprep.subr.bf16.mxu0 %v424
        %486 = vmatpush1.bf16.msra.mxu0 %v423
        %487 = vmatprep.subr.bf16.mxu0 %v422
        %488 = vmatpush1.bf16.msra.mxu0 %v421
        %489 = vmatprep.subr.bf16.mxu0 %v420
        %490 = vmatpush1.bf16.msra.mxu0 %v419
        %491 = vmatprep.subr.bf16.mxu0 %v418
        %492 = vmatpush1.bf16.msra.mxu0 %v417
        %493 = vmatprep.subr.bf16.mxu0 %v416
        %494 = vmatpush1.bf16.msra.mxu0 %v415
        %495 = vmatprep.subr.bf16.mxu0 %v446
        %496 = vmatpush2.bf16.msra.mxu0 %v445
        %497 = vmatprep.subr.bf16.mxu0 %v444
        %498 = vmatpush2.bf16.msra.mxu0 %v443
        %499 = vmatprep.subr.bf16.mxu0 %v442
        %500 = vmatpush2.bf16.msra.mxu0 %v441
        %501 = vmatprep.subr.bf16.mxu0 %v440
        %502 = vmatpush2.bf16.msra.mxu0 %v439
        %503 = vmatprep.subr.bf16.mxu0 %v438
        %504 = vmatpush2.bf16.msra.mxu0 %v437
        %505 = vmatprep.subr.bf16.mxu0 %v436
        %506 = vmatpush2.bf16.msra.mxu0 %v435
        %507 = vmatprep.subr.bf16.mxu0 %v434
        %508 = vmatpush2.bf16.msra.mxu0 %v433
        %509 = vmatprep.subr.bf16.mxu0 %v432
        %510 = vmatpush2.bf16.msra.mxu0 %v431
        %511 = vmatprep.mubr.bf16.mxu0 %v316
        %512 = vmatmul.mubr.bf16.gmra.mxu0 %v315
        %v513 = vpop.f32.mrf.mxu0
        %v514 = vadd.f32 %v302, %v513
        %v515 = vpop.f32.mrf.mxu0
        %v516 = vadd.f32 %v306, %v515
        %v517 = vpop.f32.mrf.mxu0
        %v518 = vadd.f32 %v302, %v517
        %v519 = vpop.f32.mrf.mxu0
        %v520 = vadd.f32 %v306, %v519
        %521 = vdwg.mxu0
        %v522 = vpack.c.bf16 %v518, %v514
        %v523 = vpack.c.bf16 %v520, %v516
        %v524 = vld [vmem:[#allocation4] sm:$0xff]
        %v525 = vld [vmem:[#allocation4 + $0x8] sm:$0xff]
        %v526 = vld [vmem:[#allocation4 + $0x10] sm:$0xff]
        %v527 = vld [vmem:[#allocation4 + $0x18] sm:$0xff]
        %v528 = vld [vmem:[#allocation4 + $0x20] sm:$0xff]
        %v529 = vld [vmem:[#allocation4 + $0x28] sm:$0xff]
        %v530 = vld [vmem:[#allocation4 + $0x30] sm:$0xff]
        %v531 = vld [vmem:[#allocation4 + $0x38] sm:$0xff]
        %v532 = vld [vmem:[#allocation4 + $0x40] sm:$0xff]
        %v533 = vld [vmem:[#allocation4 + $0x48] sm:$0xff]
        %v534 = vld [vmem:[#allocation4 + $0x50] sm:$0xff]
        %v535 = vld [vmem:[#allocation4 + $0x58] sm:$0xff]
        %v536 = vld [vmem:[#allocation4 + $0x60] sm:$0xff]
        %v537 = vld [vmem:[#allocation4 + $0x68] sm:$0xff]
        %v538 = vld [vmem:[#allocation4 + $0x70] sm:$0xff]
        %v539 = vld [vmem:[#allocation4 + $0x78] sm:$0xff]
        %v540 = vld [vmem:[#allocation4 + $0x80] sm:$0xff]
        %v541 = vld [vmem:[#allocation4 + $0x88] sm:$0xff]
        %v542 = vld [vmem:[#allocation4 + $0x90] sm:$0xff]
        %v543 = vld [vmem:[#allocation4 + $0x98] sm:$0xff]
        %v544 = vld [vmem:[#allocation4 + $0xa0] sm:$0xff]
        %v545 = vld [vmem:[#allocation4 + $0xa8] sm:$0xff]
        %v546 = vld [vmem:[#allocation4 + $0xb0] sm:$0xff]
        %v547 = vld [vmem:[#allocation4 + $0xb8] sm:$0xff]
        %v548 = vld [vmem:[#allocation4 + $0xc0] sm:$0xff]
        %v549 = vld [vmem:[#allocation4 + $0xc8] sm:$0xff]
        %v550 = vld [vmem:[#allocation4 + $0xd0] sm:$0xff]
        %v551 = vld [vmem:[#allocation4 + $0xd8] sm:$0xff]
        %v552 = vld [vmem:[#allocation4 + $0xe0] sm:$0xff]
        %v553 = vld [vmem:[#allocation4 + $0xe8] sm:$0xff]
        %v554 = vld [vmem:[#allocation4 + $0xf0] sm:$0xff]
        %v555 = vld [vmem:[#allocation4 + $0xf8] sm:$0xff]
        %v556 = vld [vmem:[#allocation4 + $0x100] sm:$0xff]
        %v557 = vld [vmem:[#allocation4 + $0x108] sm:$0xff]
        %v558 = vld [vmem:[#allocation4 + $0x110] sm:$0xff]
        %v559 = vld [vmem:[#allocation4 + $0x118] sm:$0xff]
        %v560 = vld [vmem:[#allocation4 + $0x120] sm:$0xff]
        %v561 = vld [vmem:[#allocation4 + $0x128] sm:$0xff]
        %v562 = vld [vmem:[#allocation4 + $0x130] sm:$0xff]
        %v563 = vld [vmem:[#allocation4 + $0x138] sm:$0xff]
        %v564 = vld [vmem:[#allocation4 + $0x140] sm:$0xff]
        %v565 = vld [vmem:[#allocation4 + $0x148] sm:$0xff]
        %v566 = vld [vmem:[#allocation4 + $0x150] sm:$0xff]
        %v567 = vld [vmem:[#allocation4 + $0x158] sm:$0xff]
        %v568 = vld [vmem:[#allocation4 + $0x160] sm:$0xff]
        %v569 = vld [vmem:[#allocation4 + $0x168] sm:$0xff]
        %v570 = vld [vmem:[#allocation4 + $0x170] sm:$0xff]
        %v571 = vld [vmem:[#allocation4 + $0x178] sm:$0xff]
        %v572 = vld [vmem:[#allocation4 + $0x180] sm:$0xff]
        %v573 = vld [vmem:[#allocation4 + $0x188] sm:$0xff]
        %v574 = vld [vmem:[#allocation4 + $0x190] sm:$0xff]
        %v575 = vld [vmem:[#allocation4 + $0x198] sm:$0xff]
        %v576 = vld [vmem:[#allocation4 + $0x1a0] sm:$0xff]
        %v577 = vld [vmem:[#allocation4 + $0x1a8] sm:$0xff]
        %v578 = vld [vmem:[#allocation4 + $0x1b0] sm:$0xff]
        %v579 = vld [vmem:[#allocation4 + $0x1b8] sm:$0xff]
        %v580 = vld [vmem:[#allocation4 + $0x1c0] sm:$0xff]
        %v581 = vld [vmem:[#allocation4 + $0x1c8] sm:$0xff]
        %v582 = vld [vmem:[#allocation4 + $0x1d0] sm:$0xff]
        %v583 = vld [vmem:[#allocation4 + $0x1d8] sm:$0xff]
        %v584 = vld [vmem:[#allocation4 + $0x1e0] sm:$0xff]
        %v585 = vld [vmem:[#allocation4 + $0x1e8] sm:$0xff]
        %v586 = vld [vmem:[#allocation4 + $0x1f0] sm:$0xff]
        %v587 = vld [vmem:[#allocation4 + $0x1f8] sm:$0xff]
        %v588 = vld [vmem:[%s4] sm:$0xf]
        %v590 = vlaneseq
        %v591 = vshrl.u32 %v590, 7
        %v592 = vsub.s32 0, %v591
        %v593 = vrot.slane %v588, %v592
        %v594 = vlaneseq
        %v595 = vshrl.u32 %v594, 7
        %v596 = vsub.s32 1, %v595
        %v597 = vrot.slane %v588, %v596
        %v598 = vlaneseq
        %v599 = vshrl.u32 %v598, 7
        %v600 = vsub.s32 2, %v599
        %v601 = vrot.slane %v588, %v600
        %v602 = vlaneseq
        %v603 = vshrl.u32 %v602, 7
        %v604 = vsub.s32 3, %v603
        %v605 = vrot.slane %v588, %v604
        %v674 = vunpack.c.l.b16 %v524
        %v675 = vunpack.c.h.b16 %v524
        %v676 = vunpack.c.l.b16 %v525
        %v677 = vunpack.c.h.b16 %v525
        %v678 = vunpack.c.l.b16 %v526
        %v679 = vunpack.c.h.b16 %v526
        %v680 = vunpack.c.l.b16 %v527
        %v681 = vunpack.c.h.b16 %v527
        %v682 = vunpack.c.l.b16 %v528
        %v683 = vunpack.c.h.b16 %v528
        %v684 = vunpack.c.l.b16 %v529
        %v685 = vunpack.c.h.b16 %v529
        %v686 = vunpack.c.l.b16 %v530
        %v687 = vunpack.c.h.b16 %v530
        %v688 = vunpack.c.l.b16 %v531
        %v689 = vunpack.c.h.b16 %v531
        %v690 = vunpack.c.l.b16 %v532
        %v691 = vunpack.c.h.b16 %v532
        %v692 = vunpack.c.l.b16 %v533
        %v693 = vunpack.c.h.b16 %v533
        %v694 = vunpack.c.l.b16 %v534
        %v695 = vunpack.c.h.b16 %v534
        %v696 = vunpack.c.l.b16 %v535
        %v697 = vunpack.c.h.b16 %v535
        %v698 = vunpack.c.l.b16 %v536
        %v699 = vunpack.c.h.b16 %v536
        %v700 = vunpack.c.l.b16 %v537
        %v701 = vunpack.c.h.b16 %v537
        %v702 = vunpack.c.l.b16 %v538
        %v703 = vunpack.c.h.b16 %v538
        %v704 = vunpack.c.l.b16 %v539
        %v705 = vunpack.c.h.b16 %v539
        %v706 = vunpack.c.l.b16 %v540
        %v707 = vunpack.c.h.b16 %v540
        %v708 = vunpack.c.l.b16 %v541
        %v709 = vunpack.c.h.b16 %v541
        %v710 = vunpack.c.l.b16 %v542
        %v711 = vunpack.c.h.b16 %v542
        %v712 = vunpack.c.l.b16 %v543
        %v713 = vunpack.c.h.b16 %v543
        %v714 = vunpack.c.l.b16 %v544
        %v715 = vunpack.c.h.b16 %v544
        %v716 = vunpack.c.l.b16 %v545
        %v717 = vunpack.c.h.b16 %v545
        %v718 = vunpack.c.l.b16 %v546
        %v719 = vunpack.c.h.b16 %v546
        %v720 = vunpack.c.l.b16 %v547
        %v721 = vunpack.c.h.b16 %v547
        %v722 = vunpack.c.l.b16 %v548
        %v723 = vunpack.c.h.b16 %v548
        %v724 = vunpack.c.l.b16 %v549
        %v725 = vunpack.c.h.b16 %v549
        %v726 = vunpack.c.l.b16 %v550
        %v727 = vunpack.c.h.b16 %v550
        %v728 = vunpack.c.l.b16 %v551
        %v729 = vunpack.c.h.b16 %v551
        %v730 = vunpack.c.l.b16 %v552
        %v731 = vunpack.c.h.b16 %v552
        %v732 = vunpack.c.l.b16 %v553
        %v733 = vunpack.c.h.b16 %v553
        %v734 = vunpack.c.l.b16 %v554
        %v735 = vunpack.c.h.b16 %v554
        %v736 = vunpack.c.l.b16 %v555
        %v737 = vunpack.c.h.b16 %v555
        %v738 = vunpack.c.l.b16 %v556
        %v739 = vunpack.c.h.b16 %v556
        %v740 = vunpack.c.l.b16 %v557
        %v741 = vunpack.c.h.b16 %v557
        %v742 = vunpack.c.l.b16 %v558
        %v743 = vunpack.c.h.b16 %v558
        %v744 = vunpack.c.l.b16 %v559
        %v745 = vunpack.c.h.b16 %v559
        %v746 = vunpack.c.l.b16 %v560
        %v747 = vunpack.c.h.b16 %v560
        %v748 = vunpack.c.l.b16 %v561
        %v749 = vunpack.c.h.b16 %v561
        %v750 = vunpack.c.l.b16 %v562
        %v751 = vunpack.c.h.b16 %v562
        %v752 = vunpack.c.l.b16 %v563
        %v753 = vunpack.c.h.b16 %v563
        %v754 = vunpack.c.l.b16 %v564
        %v755 = vunpack.c.h.b16 %v564
        %v756 = vunpack.c.l.b16 %v565
        %v757 = vunpack.c.h.b16 %v565
        %v758 = vunpack.c.l.b16 %v566
        %v759 = vunpack.c.h.b16 %v566
        %v760 = vunpack.c.l.b16 %v567
        %v761 = vunpack.c.h.b16 %v567
        %v762 = vunpack.c.l.b16 %v568
        %v763 = vunpack.c.h.b16 %v568
        %v764 = vunpack.c.l.b16 %v569
        %v765 = vunpack.c.h.b16 %v569
        %v766 = vunpack.c.l.b16 %v570
        %v767 = vunpack.c.h.b16 %v570
        %v768 = vunpack.c.l.b16 %v571
        %v769 = vunpack.c.h.b16 %v571
        %v770 = vunpack.c.l.b16 %v572
        %v771 = vunpack.c.h.b16 %v572
        %v772 = vunpack.c.l.b16 %v573
        %v773 = vunpack.c.h.b16 %v573
        %v774 = vunpack.c.l.b16 %v574
        %v775 = vunpack.c.h.b16 %v574
        %v776 = vunpack.c.l.b16 %v575
        %v777 = vunpack.c.h.b16 %v575
        %v778 = vunpack.c.l.b16 %v576
        %v779 = vunpack.c.h.b16 %v576
        %v780 = vunpack.c.l.b16 %v577
        %v781 = vunpack.c.h.b16 %v577
        %v782 = vunpack.c.l.b16 %v578
        %v783 = vunpack.c.h.b16 %v578
        %v784 = vunpack.c.l.b16 %v579
        %v785 = vunpack.c.h.b16 %v579
        %v786 = vunpack.c.l.b16 %v580
        %v787 = vunpack.c.h.b16 %v580
        %v788 = vunpack.c.l.b16 %v581
        %v789 = vunpack.c.h.b16 %v581
        %v790 = vunpack.c.l.b16 %v582
        %v791 = vunpack.c.h.b16 %v582
        %v792 = vunpack.c.l.b16 %v583
        %v793 = vunpack.c.h.b16 %v583
        %v794 = vunpack.c.l.b16 %v584
        %v795 = vunpack.c.h.b16 %v584
        %v796 = vunpack.c.l.b16 %v585
        %v797 = vunpack.c.h.b16 %v585
        %v798 = vunpack.c.l.b16 %v586
        %v799 = vunpack.c.h.b16 %v586
        %v800 = vunpack.c.l.b16 %v587
        %v801 = vunpack.c.h.b16 %v587
        %v802 = vpack.c.b16 %v678, %v674
        %v803 = vpack.c.b16 %v679, %v675
        %v804 = vpack.c.b16 %v680, %v676
        %v805 = vpack.c.b16 %v681, %v677
        %v806 = vpack.c.b16 %v686, %v682
        %v807 = vpack.c.b16 %v687, %v683
        %v808 = vpack.c.b16 %v688, %v684
        %v809 = vpack.c.b16 %v689, %v685
        %v810 = vpack.c.b16 %v694, %v690
        %v811 = vpack.c.b16 %v695, %v691
        %v812 = vpack.c.b16 %v696, %v692
        %v813 = vpack.c.b16 %v697, %v693
        %v814 = vpack.c.b16 %v702, %v698
        %v815 = vpack.c.b16 %v703, %v699
        %v816 = vpack.c.b16 %v704, %v700
        %v817 = vpack.c.b16 %v705, %v701
        %v818 = vpack.c.b16 %v710, %v706
        %v819 = vpack.c.b16 %v711, %v707
        %v820 = vpack.c.b16 %v712, %v708
        %v821 = vpack.c.b16 %v713, %v709
        %v822 = vpack.c.b16 %v718, %v714
        %v823 = vpack.c.b16 %v719, %v715
        %v824 = vpack.c.b16 %v720, %v716
        %v825 = vpack.c.b16 %v721, %v717
        %v826 = vpack.c.b16 %v726, %v722
        %v827 = vpack.c.b16 %v727, %v723
        %v828 = vpack.c.b16 %v728, %v724
        %v829 = vpack.c.b16 %v729, %v725
        %v830 = vpack.c.b16 %v734, %v730
        %v831 = vpack.c.b16 %v735, %v731
        %v832 = vpack.c.b16 %v736, %v732
        %v833 = vpack.c.b16 %v737, %v733
        %v834 = vpack.c.b16 %v742, %v738
        %v835 = vpack.c.b16 %v743, %v739
        %v836 = vpack.c.b16 %v744, %v740
        %v837 = vpack.c.b16 %v745, %v741
        %v838 = vpack.c.b16 %v750, %v746
        %v839 = vpack.c.b16 %v751, %v747
        %v840 = vpack.c.b16 %v752, %v748
        %v841 = vpack.c.b16 %v753, %v749
        %v842 = vpack.c.b16 %v758, %v754
        %v843 = vpack.c.b16 %v759, %v755
        %v844 = vpack.c.b16 %v760, %v756
        %v845 = vpack.c.b16 %v761, %v757
        %v846 = vpack.c.b16 %v766, %v762
        %v847 = vpack.c.b16 %v767, %v763
        %v848 = vpack.c.b16 %v768, %v764
        %v849 = vpack.c.b16 %v769, %v765
        %v850 = vpack.c.b16 %v774, %v770
        %v851 = vpack.c.b16 %v775, %v771
        %v852 = vpack.c.b16 %v776, %v772
        %v853 = vpack.c.b16 %v777, %v773
        %v854 = vpack.c.b16 %v782, %v778
        %v855 = vpack.c.b16 %v783, %v779
        %v856 = vpack.c.b16 %v784, %v780
        %v857 = vpack.c.b16 %v785, %v781
        %v858 = vpack.c.b16 %v790, %v786
        %v859 = vpack.c.b16 %v791, %v787
        %v860 = vpack.c.b16 %v792, %v788
        %v861 = vpack.c.b16 %v793, %v789
        %v862 = vpack.c.b16 %v798, %v794
        %v863 = vpack.c.b16 %v799, %v795
        %v864 = vpack.c.b16 %v800, %v796
        %v865 = vpack.c.b16 %v801, %v797
        %930 = vmatprep.subr.bf16.mxu0 %v831
        %931 = vmatpush1.bf16.msra.mxu0 %v830
        %932 = vmatprep.subr.bf16.mxu0 %v827
        %933 = vmatpush1.bf16.msra.mxu0 %v826
        %934 = vmatprep.subr.bf16.mxu0 %v823
        %935 = vmatpush1.bf16.msra.mxu0 %v822
        %936 = vmatprep.subr.bf16.mxu0 %v819
        %937 = vmatpush1.bf16.msra.mxu0 %v818
        %938 = vmatprep.subr.bf16.mxu0 %v815
        %939 = vmatpush1.bf16.msra.mxu0 %v814
        %940 = vmatprep.subr.bf16.mxu0 %v811
        %941 = vmatpush1.bf16.msra.mxu0 %v810
        %942 = vmatprep.subr.bf16.mxu0 %v807
        %943 = vmatpush1.bf16.msra.mxu0 %v806
        %944 = vmatprep.subr.bf16.mxu0 %v803
        %945 = vmatpush1.bf16.msra.mxu0 %v802
        %946 = vmatprep.subr.bf16.mxu0 %v863
        %947 = vmatpush2.bf16.msra.mxu0 %v862
        %948 = vmatprep.subr.bf16.mxu0 %v859
        %949 = vmatpush2.bf16.msra.mxu0 %v858
        %950 = vmatprep.subr.bf16.mxu0 %v855
        %951 = vmatpush2.bf16.msra.mxu0 %v854
        %952 = vmatprep.subr.bf16.mxu0 %v851
        %953 = vmatpush2.bf16.msra.mxu0 %v850
        %954 = vmatprep.subr.bf16.mxu0 %v847
        %955 = vmatpush2.bf16.msra.mxu0 %v846
        %956 = vmatprep.subr.bf16.mxu0 %v843
        %957 = vmatpush2.bf16.msra.mxu0 %v842
        %958 = vmatprep.subr.bf16.mxu0 %v839
        %959 = vmatpush2.bf16.msra.mxu0 %v838
        %960 = vmatprep.subr.bf16.mxu0 %v835
        %961 = vmatpush2.bf16.msra.mxu0 %v834
        %962 = vmatprep.mubr.bf16.mxu0 %v523
        %963 = vmatmul.mubr.bf16.gmra.mxu0 %v522
        %v964 = vpop.f32.mrf.mxu0
        %v965 = vadd.f32 %v593, %v964
        %v966 = vpop.f32.mrf.mxu0
        %v967 = vadd.f32 %v597, %v966
        %v968 = vpop.f32.mrf.mxu0
        %v969 = vadd.f32 %v593, %v968
        %v970 = vpop.f32.mrf.mxu0
        %v971 = vadd.f32 %v597, %v970
        %972 = vdwg.mxu0
        %973 = vmatprep.subr.bf16.mxu0 %v833
        %974 = vmatpush1.bf16.msra.mxu0 %v832
        %975 = vmatprep.subr.bf16.mxu0 %v829
        %976 = vmatpush1.bf16.msra.mxu0 %v828
        %977 = vmatprep.subr.bf16.mxu0 %v825
        %978 = vmatpush1.bf16.msra.mxu0 %v824
        %979 = vmatprep.subr.bf16.mxu0 %v821
        %980 = vmatpush1.bf16.msra.mxu0 %v820
        %981 = vmatprep.subr.bf16.mxu0 %v817
        %982 = vmatpush1.bf16.msra.mxu0 %v816
        %983 = vmatprep.subr.bf16.mxu0 %v813
        %984 = vmatpush1.bf16.msra.mxu0 %v812
        %985 = vmatprep.subr.bf16.mxu0 %v809
        %986 = vmatpush1.bf16.msra.mxu0 %v808
        %987 = vmatprep.subr.bf16.mxu0 %v805
        %988 = vmatpush1.bf16.msra.mxu0 %v804
        %989 = vmatprep.subr.bf16.mxu0 %v865
        %990 = vmatpush2.bf16.msra.mxu0 %v864
        %991 = vmatprep.subr.bf16.mxu0 %v861
        %992 = vmatpush2.bf16.msra.mxu0 %v860
        %993 = vmatprep.subr.bf16.mxu0 %v857
        %994 = vmatpush2.bf16.msra.mxu0 %v856
        %995 = vmatprep.subr.bf16.mxu0 %v853
        %996 = vmatpush2.bf16.msra.mxu0 %v852
        %997 = vmatprep.subr.bf16.mxu0 %v849
        %998 = vmatpush2.bf16.msra.mxu0 %v848
        %999 = vmatprep.subr.bf16.mxu0 %v845
        %1000 = vmatpush2.bf16.msra.mxu0 %v844
        %1001 = vmatprep.subr.bf16.mxu0 %v841
        %1002 = vmatpush2.bf16.msra.mxu0 %v840
        %1003 = vmatprep.subr.bf16.mxu0 %v837
        %1004 = vmatpush2.bf16.msra.mxu0 %v836
        %1005 = vmatprep.mubr.bf16.mxu0 %v523
        %1006 = vmatmul.mubr.bf16.gmra.mxu0 %v522
        %v1007 = vpop.f32.mrf.mxu0
        %v1008 = vadd.f32 %v601, %v1007
        %v1009 = vpop.f32.mrf.mxu0
        %v1010 = vadd.f32 %v605, %v1009
        %v1011 = vpop.f32.mrf.mxu0
        %v1012 = vadd.f32 %v601, %v1011
        %v1013 = vpop.f32.mrf.mxu0
        %v1014 = vadd.f32 %v605, %v1013
        %1015 = vdwg.mxu0
        %v1016 = vpack.c.bf16 %v969, %v965
        %v1017 = vpack.c.bf16 %v971, %v967
        %v1018 = vpack.c.bf16 %v1012, %v1008
        %v1019 = vpack.c.bf16 %v1014, %v1010
        %v1024 = vunpack.c.l.b16 %v1016
        %v1025 = vunpack.c.l.b16 %v1017
        %v1026 = vunpack.c.l.b16 %v1018
        %v1027 = vunpack.c.l.b16 %v1019
        %v1028 = vunpack.c.h.b16 %v1016
        %v1029 = vunpack.c.h.b16 %v1017
        %v1030 = vunpack.c.h.b16 %v1018
        %v1031 = vunpack.c.h.b16 %v1019
        %v1032 = vpack.c.b16 %v1025, %v1024
        %v1033 = vpack.c.b16 %v1027, %v1026
        %v1034 = vpack.c.b16 %v1029, %v1028
        %v1035 = vpack.c.b16 %v1031, %v1030
        %1040 = vst [vmem:[%s261] sm:$0xff] %v1032
        %1041 = vst [vmem:[%s261 + $0x8] sm:$0xff] %v1033
        %1042 = vst [vmem:[%s261 + $0x10] sm:$0xff] %v1034
        %1043 = vst [vmem:[%s261 + $0x18] sm:$0xff] %v1035
        %s1044 = smul.u32 2, %s18
        %p1045 = scmp.lt.s32.totalorder %s1044, 3
        %s1046 = scalar_select %p1045, %s1044, 3
        %s1047 = smul.addr %s1046, 4
        %s1048 = smul.addr %s1047, 4
        %s1049 = scalar_lea.vmem %s5, %s1048
        // Predicated region
        $region49: #{table_decoder_forward.2} parent=39 // pred_check
          %p1050 = pneg %p146
        $region50: #{table_decoder_forward.2} parent=39 // pred_check_branch
          %1052 = sbr.rel (%p1050) target = $region52
        $region51: #{table_decoder_forward.2} parent=39 // pred_region
          %s1053 = smul.u32 2, %s18
        $region52: #{table_decoder_forward.2} parent=39 // pred_fallthru
          _
      $region40: #{table_decoder_forward.2} parent=5 // pred_fallthru
        _
      %p1054 = scmp.le.s32.totalorder 2, %s13
      // Predicated region
      $region53: #{table_decoder_forward.2} parent=5 // pred_check
        %p1055 = pneg %p1054
      $region54: #{table_decoder_forward.2} parent=5 // pred_check_branch
        %1057 = sbr.rel (%p1055) target = $region56
      $region55: #{table_decoder_forward.2} parent=5 // pred_region
        %s1058 = ssub.s32 %s13, 2
        // Predicated region
        $region57: #{table_decoder_forward.2} parent=55 // pred_check
          %p1059 = pneg %p152
        $region58: #{table_decoder_forward.2} parent=55 // pred_check_branch
          %1061 = sbr.rel (%p1059) target = $region60
        $region59: #{table_decoder_forward.2} parent=55 // pred_region
          %s1062 = smul.u32 2, %s19
          %p1063 = scmp.lt.s32.totalorder %s1062, 3
          %s1064 = scalar_select %p1063, %s1062, 3
          %s1065 = smul.addr %s1064, 4
          %s1066 = smul.addr %s1065, 4
          %s1067 = scalar_lea.vmem %s5, %s1066
        $region60: #{table_decoder_forward.2} parent=55 // pred_fallthru
          _
      $region56: #{table_decoder_forward.2} parent=5 // pred_fallthru
        _
    $region6: #{table_decoder_forward.2} parent=1 // loop_footer
      %s17 = sadd.s32 1, %s13
    $region7: #{table_decoder_forward.2} parent=1 // loop_footer_branch
      %12 = sbr.rel target = $region3
    $region8: #{table_decoder_forward.2} parent=1 // loop_exit
      _
    %1068 = vsyncpa [#allocation3], 1
    %s1069 = scalar_lea.sflag [#allocation3], 1
    %1070 = vsyncpa %s1069, 1
    %1071 = vsyncpa [#allocation5], 1

// kernel: table_decoder_forward.3
$region0: #{table_decoder_forward.3}
  #allocation0 [shape = 'u32[]', space=smem, size = 0x4, offset = 0x4, fixed_abs, tag = 'smem constant byte address 0x4 - core index']
  #allocation1 [shape = 'u32[144,128]{1,0:T(1,128)}', space=vmem, size = 0x12000, scoped, tag = 'internal scratch']
  %s0 = inlined_call_operand.vmem [shape: bf16[32,512], index: 0, kind: input, shape index: {}]
  %s1 = inlined_call_operand.vmem [shape: bf16[4,32,32], index: 1, kind: input, shape index: {}]
  %s2 = inlined_call_operand.vmem [shape: bf16[32,256], index: 2, kind: input, shape index: {}]
  %s3 = inlined_call_operand.vmem [shape: bf16[128,1024], index: 3, kind: input, shape index: {}]
  %s4 = inlined_call_operand.vmem [shape: bf16[32,1024], index: 4, kind: input, shape index: {}]
  %s5 = inlined_call_operand.vmem [shape: f32[1,1024], index: 5, kind: input, shape index: {}]
  %s6 = inlined_call_operand.vmem [shape: bf16[4096,64], index: 6, kind: input, shape index: {}]
  %s7 = inlined_call_operand.vmem [shape: bf16[256,64], index: 7, kind: input, shape index: {}]
  %s8 = inlined_call_operand.vmem [shape: f32[1,64], index: 8, kind: input, shape index: {}]
  %s9 = inlined_call_operand.vmem [shape: f32[32,64], index: 9, kind: output, shape index: {}]
  %s10 = sld [smem:[#allocation0]]
  $region110: #{table_decoder_forward.3} parent=0
    _
  %s12 = ssub.s32 1, %s10
  %s13 = scalar_select 0, %s12, %s10
  $region1: #{table_decoder_forward.3} parent=0
    #allocation2 [shape = 'u8[32768]{0}', space=vmem, size = 0x8000, scoped, tag = 'input window, operand 1']
    loop: start=0, step=1, limit=4
    $region2: #{table_decoder_forward.3} parent=1 // loop_pre_header
      _
    $region3: #{table_decoder_forward.3} parent=1 // loop_header
      %s15 = sphi 0, %s19
      %p16 = scmp.ge.s32.totalorder %s15, 4
      %s25 = sphi 0, %s27
      %s28 = sphi 0, %s25
      %s29 = sphi 0, %s28
      %s45 = sphi 0, %s29
      %s51 = sphi 0, %s53
      %s54 = sphi 0, %s51
      %s55 = sphi 0, %s54
      %s71 = sphi 0, %s55
      %s77 = sphi 0, %s79
      %s80 = sphi 0, %s77
      %s81 = sphi 0, %s80
      %s97 = sphi 0, %s81
      %s101 = sphi 0, %s101
      %s103 = sphi 0, %s101
      %s104 = sphi 0, %s103
      %s118 = sphi 0, %s104
      %s122 = sphi 0, %s122
      %s124 = sphi 0, %s122
      %s125 = sphi 0, %s124
      %s139 = sphi 0, %s125
      %s143 = sphi 0, %s143
      %s145 = sphi 0, %s143
      %s146 = sphi 0, %s145
      %s160 = sphi 0, %s146
      %s164 = sphi 0, %s164
      %s166 = sphi 0, %s164
      %s167 = sphi 0, %s166
      %s181 = sphi 0, %s167
      %s185 = sphi 0, %s185
      %s187 = sphi 0, %s185
      %s188 = sphi 0, %s187
      %s202 = sphi 0, %s188
      %s206 = sphi 0, %s206
      %s208 = sphi 0, %s206
      %s209 = sphi 0, %s208
      %s223 = sphi 0, %s209
      %s229 = sphi 0, %s231
      %s232 = sphi 0, %s229
      %s233 = sphi 0, %s232
      %s249 = sphi 0, %s233
    $region4: #{table_decoder_forward.3} parent=1 // loop_header_branch
      %18 = sbr.rel (%p16) target = $region8
    $region5: #{table_decoder_forward.3} parent=1 // loop_body
      %s20 = ssub.s32 %s15, 1
      %s21 = ssub.s32 %s15, 2
      %s22 = sadd.s32 %s15, 1
      %s23 = ssub.s32 %s15, %s22
      %p24 = scmp.eq.s32.totalorder %s23, 0
      %s26 = sadd.s32 %s25, 1
      %s27 = scalar_select %p24, %s25, %s26
      %p30 = pneg %p24
      %p31 = scmp.eq.s32.totalorder %s15, 1
      %p32 = por %p30, %p31
      %p33 = scmp.ne.s32.totalorder %s25, %s28
      %p34 = scmp.eq.s32.totalorder %s15, 0
      %p35 = por %p33, %p34
      %p36 = scmp.ne.s32.totalorder %s25, %s28
      %p37 = scmp.eq.s32.totalorder %s20, 1
      %p38 = por %p36, %p37
      %p39 = scmp.ne.s32.totalorder %s28, %s29
      %p40 = scmp.eq.s32.totalorder %s20, 0
      %p41 = por %p39, %p40
      %p42 = scmp.ne.s32.totalorder %s28, %s29
      %p43 = scmp.eq.s32.totalorder %s21, 1
      %p44 = por %p42, %p43
      %p46 = scmp.ne.s32.totalorder %s29, %s45
      %p47 = scmp.eq.s32.totalorder %s21, 0
      %p48 = por %p46, %p47
      %s49 = ssub.s32 %s15, %s22
      %p50 = scmp.eq.s32.totalorder %s49, 0
      %s52 = sadd.s32 %s51, 1
      %s53 = scalar_select %p50, %s51, %s52
      %p56 = pneg %p50
      %p57 = scmp.eq.s32.totalorder %s15, 1
      %p58 = por %p56, %p57
      %p59 = scmp.ne.s32.totalorder %s51, %s54
      %p60 = scmp.eq.s32.totalorder %s15, 0
      %p61 = por %p59, %p60
      %p62 = scmp.ne.s32.totalorder %s51, %s54
      %p63 = scmp.eq.s32.totalorder %s20, 1
      %p64 = por %p62, %p63
      %p65 = scmp.ne.s32.totalorder %s54, %s55
      %p66 = scmp.eq.s32.totalorder %s20, 0
      %p67 = por %p65, %p66
      %p68 = scmp.ne.s32.totalorder %s54, %s55
      %p69 = scmp.eq.s32.totalorder %s21, 1
      %p70 = por %p68, %p69
      %p72 = scmp.ne.s32.totalorder %s55, %s71
      %p73 = scmp.eq.s32.totalorder %s21, 0
      %p74 = por %p72, %p73
      %s75 = ssub.s32 %s15, %s22
      %p76 = scmp.eq.s32.totalorder %s75, 0
      %s78 = sadd.s32 %s77, 1
      %s79 = scalar_select %p76, %s77, %s78
      %p82 = pneg %p76
      %p83 = scmp.eq.s32.totalorder %s15, 1
      %p84 = por %p82, %p83
      %p85 = scmp.ne.s32.totalorder %s77, %s80
      %p86 = scmp.eq.s32.totalorder %s15, 0
      %p87 = por %p85, %p86
      %p88 = scmp.ne.s32.totalorder %s77, %s80
      %p89 = scmp.eq.s32.totalorder %s20, 1
      %p90 = por %p88, %p89
      %p91 = scmp.ne.s32.totalorder %s80, %s81
      %p92 = scmp.eq.s32.totalorder %s20, 0
      %p93 = por %p91, %p92
      %p94 = scmp.ne.s32.totalorder %s80, %s81
      %p95 = scmp.eq.s32.totalorder %s21, 1
      %p96 = por %p94, %p95
      %p98 = scmp.ne.s32.totalorder %s81, %s97
      %p99 = scmp.eq.s32.totalorder %s21, 0
      %p100 = por %p98, %p99
      %s102 = sadd.s32 %s101, 1
      %p105 = scmp.eq.s32.totalorder %s15, 1
      %p106 = scmp.ne.s32.totalorder %s101, %s103
      %p107 = scmp.eq.s32.totalorder %s15, 0
      %p108 = por %p106, %p107
      %p109 = scmp.ne.s32.totalorder %s101, %s103
      %p110 = scmp.eq.s32.totalorder %s20, 1
      %p111 = por %p109, %p110
      %p112 = scmp.ne.s32.totalorder %s103, %s104
      %p113 = scmp.eq.s32.totalorder %s20, 0
      %p114 = por %p112, %p113
      %p115 = scmp.ne.s32.totalorder %s103, %s104
      %p116 = scmp.eq.s32.totalorder %s21, 1
      %p117 = por %p115, %p116
      %p119 = scmp.ne.s32.totalorder %s104, %s118
      %p120 = scmp.eq.s32.totalorder %s21, 0
      %p121 = por %p119, %p120
      %s123 = sadd.s32 %s122, 1
      %p126 = scmp.eq.s32.totalorder %s15, 1
      %p127 = scmp.ne.s32.totalorder %s122, %s124
      %p128 = scmp.eq.s32.totalorder %s15, 0
      %p129 = por %p127, %p128
      %p130 = scmp.ne.s32.totalorder %s122, %s124
      %p131 = scmp.eq.s32.totalorder %s20, 1
      %p132 = por %p130, %p131
      %p133 = scmp.ne.s32.totalorder %s124, %s125
      %p134 = scmp.eq.s32.totalorder %s20, 0
      %p135 = por %p133, %p134
      %p136 = scmp.ne.s32.totalorder %s124, %s125
      %p137 = scmp.eq.s32.totalorder %s21, 1
      %p138 = por %p136, %p137
      %p140 = scmp.ne.s32.totalorder %s125, %s139
      %p141 = scmp.eq.s32.totalorder %s21, 0
      %p142 = por %p140, %p141
      %s144 = sadd.s32 %s143, 1
      %p147 = scmp.eq.s32.totalorder %s15, 1
      %p148 = scmp.ne.s32.totalorder %s143, %s145
      %p149 = scmp.eq.s32.totalorder %s15, 0
      %p150 = por %p148, %p149
      %p151 = scmp.ne.s32.totalorder %s143, %s145
      %p152 = scmp.eq.s32.totalorder %s20, 1
      %p153 = por %p151, %p152
      %p154 = scmp.ne.s32.totalorder %s145, %s146
      %p155 = scmp.eq.s32.totalorder %s20, 0
      %p156 = por %p154, %p155
      %p157 = scmp.ne.s32.totalorder %s145, %s146
      %p158 = scmp.eq.s32.totalorder %s21, 1
      %p159 = por %p157, %p158
      %p161 = scmp.ne.s32.totalorder %s146, %s160
      %p162 = scmp.eq.s32.totalorder %s21, 0
      %p163 = por %p161, %p162
      %s165 = sadd.s32 %s164, 1
      %p168 = scmp.eq.s32.totalorder %s15, 1
      %p169 = scmp.ne.s32.totalorder %s164, %s166
      %p170 = scmp.eq.s32.totalorder %s15, 0
      %p171 = por %p169, %p170
      %p172 = scmp.ne.s32.totalorder %s164, %s166
      %p173 = scmp.eq.s32.totalorder %s20, 1
      %p174 = por %p172, %p173
      %p175 = scmp.ne.s32.totalorder %s166, %s167
      %p176 = scmp.eq.s32.totalorder %s20, 0
      %p177 = por %p175, %p176
      %p178 = scmp.ne.s32.totalorder %s166, %s167
      %p179 = scmp.eq.s32.totalorder %s21, 1
      %p180 = por %p178, %p179
      %p182 = scmp.ne.s32.totalorder %s167, %s181
      %p183 = scmp.eq.s32.totalorder %s21, 0
      %p184 = por %p182, %p183
      %s186 = sadd.s32 %s185, 1
      %p189 = scmp.eq.s32.totalorder %s15, 1
      %p190 = scmp.ne.s32.totalorder %s185, %s187
      %p191 = scmp.eq.s32.totalorder %s15, 0
      %p192 = por %p190, %p191
      %p193 = scmp.ne.s32.totalorder %s185, %s187
      %p194 = scmp.eq.s32.totalorder %s20, 1
      %p195 = por %p193, %p194
      %p196 = scmp.ne.s32.totalorder %s187, %s188
      %p197 = scmp.eq.s32.totalorder %s20, 0
      %p198 = por %p196, %p197
      %p199 = scmp.ne.s32.totalorder %s187, %s188
      %p200 = scmp.eq.s32.totalorder %s21, 1
      %p201 = por %p199, %p200
      %p203 = scmp.ne.s32.totalorder %s188, %s202
      %p204 = scmp.eq.s32.totalorder %s21, 0
      %p205 = por %p203, %p204
      %s207 = sadd.s32 %s206, 1
      %p210 = scmp.eq.s32.totalorder %s15, 1
      %p211 = scmp.ne.s32.totalorder %s206, %s208
      %p212 = scmp.eq.s32.totalorder %s15, 0
      %p213 = por %p211, %p212
      %p214 = scmp.ne.s32.totalorder %s206, %s208
      %p215 = scmp.eq.s32.totalorder %s20, 1
      %p216 = por %p214, %p215
      %p217 = scmp.ne.s32.totalorder %s208, %s209
      %p218 = scmp.eq.s32.totalorder %s20, 0
      %p219 = por %p217, %p218
      %p220 = scmp.ne.s32.totalorder %s208, %s209
      %p221 = scmp.eq.s32.totalorder %s21, 1
      %p222 = por %p220, %p221
      %p224 = scmp.ne.s32.totalorder %s209, %s223
      %p225 = scmp.eq.s32.totalorder %s21, 0
      %p226 = por %p224, %p225
      %s227 = ssub.s32 %s15, %s22
      %p228 = scmp.eq.s32.totalorder %s227, 0
      %s230 = sadd.s32 %s229, 1
      %s231 = scalar_select %p228, %s229, %s230
      %p234 = pneg %p228
      %p235 = scmp.eq.s32.totalorder %s15, 1
      %p236 = por %p234, %p235
      %p237 = scmp.ne.s32.totalorder %s229, %s232
      %p238 = scmp.eq.s32.totalorder %s15, 0
      %p239 = por %p237, %p238
      %p240 = scmp.ne.s32.totalorder %s229, %s232
      %p241 = scmp.eq.s32.totalorder %s20, 1
      %p242 = por %p240, %p241
      %p243 = scmp.ne.s32.totalorder %s232, %s233
      %p244 = scmp.eq.s32.totalorder %s20, 0
      %p245 = por %p243, %p244
      %p246 = scmp.ne.s32.totalorder %s232, %s233
      %p247 = scmp.eq.s32.totalorder %s21, 1
      %p248 = por %p246, %p247
      %p250 = scmp.ne.s32.totalorder %s233, %s249
      %p251 = scmp.eq.s32.totalorder %s21, 0
      %p252 = por %p250, %p251
      %p253 = scmp.le.s32.totalorder 1, %s15
      %p254 = scmp.lt.s32.totalorder %s15, 3
      %p255 = pnand %p253, %p254
      %p256 = pneg %p255
      // Predicated region
      $region9: #{table_decoder_forward.3} parent=5 // pred_check
        _
      $region10: #{table_decoder_forward.3} parent=5 // pred_check_branch
        %258 = sbr.rel (%p255) target = $region12
      $region11: #{table_decoder_forward.3} parent=5 // pred_region
        %s259 = ssub.s32 %s15, 1
        // Predicated region
        $region13: #{table_decoder_forward.3} parent=11 // pred_check
          %p260 = pneg %p114
        $region14: #{table_decoder_forward.3} parent=11 // pred_check_branch
          %262 = sbr.rel (%p260) target = $region16
        $region15: #{table_decoder_forward.3} parent=11 // pred_region
          _
        $region16: #{table_decoder_forward.3} parent=11 // pred_fallthru
          _
        // Predicated region
        $region17: #{table_decoder_forward.3} parent=11 // pred_check
          %p263 = pneg %p135
        $region18: #{table_decoder_forward.3} parent=11 // pred_check_branch
          %265 = sbr.rel (%p263) target = $region20
        $region19: #{table_decoder_forward.3} parent=11 // pred_region
          _
        $region20: #{table_decoder_forward.3} parent=11 // pred_fallthru
          _
        // Predicated region
        $region21: #{table_decoder_forward.3} parent=11 // pred_check
          %p266 = pneg %p156
        $region22: #{table_decoder_forward.3} parent=11 // pred_check_branch
          %268 = sbr.rel (%p266) target = $region24
        $region23: #{table_decoder_forward.3} parent=11 // pred_region
          _
        $region24: #{table_decoder_forward.3} parent=11 // pred_fallthru
          _
        // Predicated region
        $region25: #{table_decoder_forward.3} parent=11 // pred_check
          %p269 = pneg %p177
        $region26: #{table_decoder_forward.3} parent=11 // pred_check_branch
          %271 = sbr.rel (%p269) target = $region28
        $region27: #{table_decoder_forward.3} parent=11 // pred_region
          _
        $region28: #{table_decoder_forward.3} parent=11 // pred_fallthru
          _
        // Predicated region
        $region29: #{table_decoder_forward.3} parent=11 // pred_check
          %p272 = pneg %p198
        $region30: #{table_decoder_forward.3} parent=11 // pred_check_branch
          %274 = sbr.rel (%p272) target = $region32
        $region31: #{table_decoder_forward.3} parent=11 // pred_region
          _
        $region32: #{table_decoder_forward.3} parent=11 // pred_fallthru
          _
        // Predicated region
        $region33: #{table_decoder_forward.3} parent=11 // pred_check
          %p275 = pneg %p219
        $region34: #{table_decoder_forward.3} parent=11 // pred_check_branch
          %277 = sbr.rel (%p275) target = $region36
        $region35: #{table_decoder_forward.3} parent=11 // pred_region
          _
        $region36: #{table_decoder_forward.3} parent=11 // pred_fallthru
          _
      $region12: #{table_decoder_forward.3} parent=5 // pred_fallthru
        _
      %p278 = scmp.lt.s32.totalorder %s15, 2
      // Predicated region
      $region37: #{table_decoder_forward.3} parent=5 // pred_check
        %p279 = pneg %p278
      $region38: #{table_decoder_forward.3} parent=5 // pred_check_branch
        %281 = sbr.rel (%p279) target = $region40
      $region39: #{table_decoder_forward.3} parent=5 // pred_region
        // Predicated region
        $region41: #{table_decoder_forward.3} parent=39 // pred_check
          %p282 = pneg %p35
        $region42: #{table_decoder_forward.3} parent=39 // pred_check_branch
          %284 = sbr.rel (%p282) target = $region44
        $region43: #{table_decoder_forward.3} parent=39 // pred_region
          %s285 = smul.u32 2, %s15
          %p286 = scmp.lt.s32.totalorder %s285, 3
          %s287 = scalar_select %p286, %s285, 3
          %s288 = smul.addr %s287, 4
          %s289 = smul.addr %s288, 4
          %s290 = scalar_lea.vmem %s0, %s289
          %s291 = smul.u32 2, %s15
        $region44: #{table_decoder_forward.3} parent=39 // pred_fallthru
          _
        // Predicated region
        $region45: #{table_decoder_forward.3} parent=39 // pred_check
          %p292 = pneg %p61
        $region46: #{table_decoder_forward.3} parent=39 // pred_check_branch
          %294 = sbr.rel (%p292) target = $region48
        $region47: #{table_decoder_forward.3} parent=39 // pred_region
          %s295 = sand.u32 %s51, 1
          %s296 = sand.u32 %s51, 1
          %s297 = smul.addr %s296, 32
          %s298 = scalar_lea.vmem [#allocation2], %s297
          %s299 = smul.u32 2, %s15
          %s300 = smul.addr %s299, 4
          %s301 = scalar_lea.vmem %s1, %s300
          // Predicated region
          $region49: #{table_decoder_forward.3} parent=47 // pred_check
            _
          $region50: #{table_decoder_forward.3} parent=47 // pred_check_branch
            %303 = sbr.rel (0) target = $region52
          $region51: #{table_decoder_forward.3} parent=47 // pred_region
            // Predicated region
            $region53: #{table_decoder_forward.3} parent=51 // pred_check
              _
            $region54: #{table_decoder_forward.3} parent=51 // pred_check_branch
              %305 = sbr.rel target = $region56
            $region55: #{table_decoder_forward.3} parent=51 // pred_region
              // Predicated region
              $region68: #{table_decoder_forward.3} parent=55 // pred_check
                _
              $region69: #{table_decoder_forward.3} parent=55 // pred_check_branch
                %335 = sbr.rel (0) target = $region71
              $region70: #{table_decoder_forward.3} parent=55 // pred_region
                loop: start=0, step=1, limit=1
                $region72: #{table_decoder_forward.3} parent=70 // loop_pre_header
                  _
                $region73: #{table_decoder_forward.3} parent=70 // loop_header
                  %s337 = sphi 0, %s341
                  %p338 = scmp.ge.s32.totalorder %s337, 1
                  %s342 = sphi %s301, %s301
                  %s343 = sphi %s298, %s298
                $region74: #{table_decoder_forward.3} parent=70 // loop_header_branch
                  %340 = sbr.rel (%p338) target = $region78
                $region75: #{table_decoder_forward.3} parent=70 // loop_body
                  _
                $region76: #{table_decoder_forward.3} parent=70 // loop_footer
                  %s341 = sadd.s32 1, %s337
                $region77: #{table_decoder_forward.3} parent=70 // loop_footer_branch
                  %336 = sbr.rel target = $region73
                $region78: #{table_decoder_forward.3} parent=70 // loop_exit
                  _
                %s345 = ssub.s32 16, 1
                loop: start=0, step=1, limit=1
                $region79: #{table_decoder_forward.3} parent=70 // loop_pre_header
                  _
                $region80: #{table_decoder_forward.3} parent=70 // loop_header
                  %s347 = sphi 0, %s351
                  %p348 = scmp.ge.s32.totalorder %s347, 1
                  %s352 = sphi %s301, %s301
                  %s353 = sphi %s298, %s298
                $region81: #{table_decoder_forward.3} parent=70 // loop_header_branch
                  %350 = sbr.rel (%p348) target = $region85
                $region82: #{table_decoder_forward.3} parent=70 // loop_body
                  %v354 = vld [vmem:[%s352] sm:%s345]
                  %355 = vst [vmem:[%s353] sm:%s345] %v354
                  %v356 = vld [vmem:[%s352 + $0x4] sm:%s345]
                  %357 = vst [vmem:[%s353 + $0x4] sm:%s345] %v356
                  %v358 = vld [vmem:[%s352 + $0x10] sm:%s345]
                  %359 = vst [vmem:[%s353 + $0x8] sm:%s345] %v358
                  %v360 = vld [vmem:[%s352 + $0x14] sm:%s345]
                  %361 = vst [vmem:[%s353 + $0xc] sm:%s345] %v360
                  %v362 = vld [vmem:[%s352 + $0x20] sm:%s345]
                  %363 = vst [vmem:[%s353 + $0x10] sm:%s345] %v362
                  %v364 = vld [vmem:[%s352 + $0x24] sm:%s345]
                  %365 = vst [vmem:[%s353 + $0x14] sm:%s345] %v364
                  %v366 = vld [vmem:[%s352 + $0x30] sm:%s345]
                  %367 = vst [vmem:[%s353 + $0x18] sm:%s345] %v366
                  %v368 = vld [vmem:[%s352 + $0x34] sm:%s345]
                  %369 = vst [vmem:[%s353 + $0x1c] sm:%s345] %v368
                $region83: #{table_decoder_forward.3} parent=70 // loop_footer
                  %s351 = sadd.s32 1, %s347
                $region84: #{table_decoder_forward.3} parent=70 // loop_footer_branch
                  %346 = sbr.rel target = $region80
                $region85: #{table_decoder_forward.3} parent=70 // loop_exit
                  _
              $region71: #{table_decoder_forward.3} parent=55 // pred_fallthru
                _
            $region56: #{table_decoder_forward.3} parent=51 // pred_fallthru
              _
            // Predicated region
            $region57: #{table_decoder_forward.3} parent=51 // pred_check
              _
            $region58: #{table_decoder_forward.3} parent=51 // pred_check_branch
              %307 = sbr.rel (0) target = $region60
            $region59: #{table_decoder_forward.3} parent=51 // pred_region
              %s309 = ssub.s32 16, 1
              loop: start=0, step=1, limit=1
              $region61: #{table_decoder_forward.3} parent=59 // loop_pre_header
                _
              $region62: #{table_decoder_forward.3} parent=59 // loop_header
                %s311 = sphi 0, %s315
                %p312 = scmp.ge.s32.totalorder %s311, 1
                %s316 = sphi %s301, %s301
                %s317 = sphi %s298, %s298
              $region63: #{table_decoder_forward.3} parent=59 // loop_header_branch
                %314 = sbr.rel (%p312) target = $region67
              $region64: #{table_decoder_forward.3} parent=59 // loop_body
                %v318 = vld [vmem:[%s316] sm:%s309]
                %319 = vst [vmem:[%s317] sm:%s309] %v318
                %v320 = vld [vmem:[%s316 + $0x4] sm:%s309]
                %321 = vst [vmem:[%s317 + $0x4] sm:%s309] %v320
                %v322 = vld [vmem:[%s316 + $0x10] sm:%s309]
                %323 = vst [vmem:[%s317 + $0x8] sm:%s309] %v322
                %v324 = vld [vmem:[%s316 + $0x14] sm:%s309]
                %325 = vst [vmem:[%s317 + $0xc] sm:%s309] %v324
                %v326 = vld [vmem:[%s316 + $0x20] sm:%s309]
                %327 = vst [vmem:[%s317 + $0x10] sm:%s309] %v326
                %v328 = vld [vmem:[%s316 + $0x24] sm:%s309]
                %329 = vst [vmem:[%s317 + $0x14] sm:%s309] %v328
                %v330 = vld [vmem:[%s316 + $0x30] sm:%s309]
                %331 = vst [vmem:[%s317 + $0x18] sm:%s309] %v330
                %v332 = vld [vmem:[%s316 + $0x34] sm:%s309]
                %333 = vst [vmem:[%s317 + $0x1c] sm:%s309] %v332
              $region65: #{table_decoder_forward.3} parent=59 // loop_footer
                %s315 = sadd.s32 1, %s311
              $region66: #{table_decoder_forward.3} parent=59 // loop_footer_branch
                %310 = sbr.rel target = $region62
              $region67: #{table_decoder_forward.3} parent=59 // loop_exit
                _
            $region60: #{table_decoder_forward.3} parent=51 // pred_fallthru
              _
          $region52: #{table_decoder_forward.3} parent=47 // pred_fallthru
            _
          %370 = vnop
        $region48: #{table_decoder_forward.3} parent=39 // pred_fallthru
          _
        // Predicated region
        $region86: #{table_decoder_forward.3} parent=39 // pred_check
          %p371 = pneg %p87
        $region87: #{table_decoder_forward.3} parent=39 // pred_check_branch
          %373 = sbr.rel (%p371) target = $region89
        $region88: #{table_decoder_forward.3} parent=39 // pred_region
          %s374 = smul.u32 2, %s15
          %p375 = scmp.lt.s32.totalorder %s374, 3
          %s376 = scalar_select %p375, %s374, 3
          %s377 = smul.addr %s376, 2
          %s378 = smul.addr %s377, 4
          %s379 = scalar_lea.vmem %s2, %s378
          %s380 = smul.u32 2, %s15
        $region89: #{table_decoder_forward.3} parent=39 // pred_fallthru
          _
      $region40: #{table_decoder_forward.3} parent=5 // pred_fallthru
        _
      %p381 = scmp.le.s32.totalorder 1, %s15
      %p382 = scmp.lt.s32.totalorder %s15, 3
      %p383 = pnand %p381, %p382
      %p384 = pneg %p383
      // Predicated region
      $region90: #{table_decoder_forward.3} parent=5 // pred_check
        _
      $region91: #{table_decoder_forward.3} parent=5 // pred_check_branch
        %386 = sbr.rel (%p383) target = $region93
      $region92: #{table_decoder_forward.3} parent=5 // pred_region
        %s387 = ssub.s32 %s15, 1
        %s388 = sand.u32 %s54, 1
        %s389 = sand.u32 %s54, 1
        %s390 = smul.addr %s389, 32
        %s391 = scalar_lea.vmem [#allocation2], %s390
        // Predicated region
        $region94: #{table_decoder_forward.3} parent=92 // pred_check
          %p392 = pneg %p67
        $region95: #{table_decoder_forward.3} parent=92 // pred_check_branch
          %394 = sbr.rel (%p392) target = $region97
        $region96: #{table_decoder_forward.3} parent=92 // pred_region
          _
        $region97: #{table_decoder_forward.3} parent=92 // pred_fallthru
          _
        %s395 = smul.u32 2, %s20
        %p396 = scmp.lt.s32.totalorder %s395, 3
        %s397 = scalar_select %p396, %s395, 3
        %s398 = smul.addr %s397, 4
        %s399 = smul.addr %s398, 4
        %s400 = scalar_lea.vmem %s0, %s399
        %p401 = pneg %p41
        %p402 = pneg %p38
        %s403 = sand.u32 %s54, 1
        %s404 = sand.u32 %s54, 1
        %s405 = smul.addr %s404, 32
        %s406 = scalar_lea.vmem [#allocation2], %s405
        %p407 = pneg %p67
        %p408 = pneg %p64
        %s409 = smul.u32 2, %s20
        %p410 = scmp.lt.s32.totalorder %s409, 3
        %s411 = scalar_select %p410, %s409, 3
        %s412 = smul.addr %s411, 2
        %s413 = smul.addr %s412, 4
        %s414 = scalar_lea.vmem %s2, %s413
        %p415 = pneg %p93
        %p416 = pneg %p90
        %p417 = pneg %p114
        %p418 = pneg %p111
        %p419 = pneg %p135
        %p420 = pneg %p132
        %p421 = pneg %p156
        %p422 = pneg %p153
        %p423 = pneg %p177
        %p424 = pneg %p174
        %p425 = pneg %p198
        %p426 = pneg %p195
        %p427 = pneg %p219
        %p428 = pneg %p216
        %p429 = pneg %p245
        %p430 = pneg %p242
        %s431 = smul.u32 2, %s20
        %p432 = scmp.lt.s32.totalorder %s431, 3
        %s433 = scalar_select %p432, %s431, 3
        %s434 = smul.addr %s433, 8
        %s435 = scalar_lea.vmem %s9, %s434
        %s436 = smul.u32 2, %s20
        %p437 = scmp.lt.s32.totalorder %s436, 3
        %s438 = scalar_select %p437, %s436, 3
        %s439 = smul.addr %s438, 4
        %s440 = smul.addr %s439, 4
        %s441 = scalar_lea.vmem %s0, %s440
        %s442 = smul.u32 2, %s20
        %s443 = smul.u32 2, %s20
        %s444 = smul.u32 2, %s20
        %p445 = scmp.lt.s32.totalorder %s444, 3
        %s446 = scalar_select %p445, %s444, 3
        %s447 = smul.addr %s446, 2
        %s448 = smul.addr %s447, 4
        %s449 = scalar_lea.vmem %s2, %s448
        %s450 = smul.u32 2, %s20
        %s451 = smul.u32 2, %s20
        %p452 = scmp.lt.s32.totalorder %s451, 3
        %s453 = scalar_select %p452, %s451, 3
        %s454 = smul.addr %s453, 8
        %s455 = scalar_lea.vmem %s9, %s454
        %s456 = smul.u32 2, %s20
        %v458 = vld [vmem:[%s449] sm:$0xff]
        %v459 = vld [vmem:[%s449 + $0x8] sm:$0xff]
        %v460 = vld [vmem:[%s7] sm:$0xf]
        %v461 = vld [vmem:[%s7 + $0x4] sm:$0xf]
        %v462 = vld [vmem:[%s7 + $0x8] sm:$0xf]
        %v463 = vld [vmem:[%s7 + $0xc] sm:$0xf]
        %v464 = vld [vmem:[%s7 + $0x10] sm:$0xf]
        %v465 = vld [vmem:[%s7 + $0x14] sm:$0xf]
        %v466 = vld [vmem:[%s7 + $0x18] sm:$0xf]
        %v467 = vld [vmem:[%s7 + $0x1c] sm:$0xf]
        %v468 = vld [vmem:[%s7 + $0x20] sm:$0xf]
        %v469 = vld [vmem:[%s7 + $0x24] sm:$0xf]
        %v470 = vld [vmem:[%s7 + $0x28] sm:$0xf]
        %v471 = vld [vmem:[%s7 + $0x2c] sm:$0xf]
        %v472 = vld [vmem:[%s7 + $0x30] sm:$0xf]
        %v473 = vld [vmem:[%s7 + $0x34] sm:$0xf]
        %v474 = vld [vmem:[%s7 + $0x38] sm:$0xf]
        %v475 = vld [vmem:[%s7 + $0x3c] sm:$0xf]
        %v476 = vld [vmem:[%s7 + $0x40] sm:$0xf]
        %v477 = vld [vmem:[%s7 + $0x44] sm:$0xf]
        %v478 = vld [vmem:[%s7 + $0x48] sm:$0xf]
        %v479 = vld [vmem:[%s7 + $0x4c] sm:$0xf]
        %v480 = vld [vmem:[%s7 + $0x50] sm:$0xf]
        %v481 = vld [vmem:[%s7 + $0x54] sm:$0xf]
        %v482 = vld [vmem:[%s7 + $0x58] sm:$0xf]
        %v483 = vld [vmem:[%s7 + $0x5c] sm:$0xf]
        %v484 = vld [vmem:[%s7 + $0x60] sm:$0xf]
        %v485 = vld [vmem:[%s7 + $0x64] sm:$0xf]
        %v486 = vld [vmem:[%s7 + $0x68] sm:$0xf]
        %v487 = vld [vmem:[%s7 + $0x6c] sm:$0xf]
        %v488 = vld [vmem:[%s7 + $0x70] sm:$0xf]
        %v489 = vld [vmem:[%s7 + $0x74] sm:$0xf]
        %v490 = vld [vmem:[%s7 + $0x78] sm:$0xf]
        %v491 = vld [vmem:[%s7 + $0x7c] sm:$0xf]
        %v492 = vld [vmem:[%s8] sm:$0x1]
        %v494 = vlaneseq
        %v495 = vshrl.u32 %v494, 7
        %v496 = vsub.s32 0, %v495
        %v497 = vrot.slane %v492, %v496
        %v501 = vunpack.c.l.b16 %v458
        %v502 = vunpack.c.h.b16 %v458
        %v503 = vunpack.c.l.b16 %v459
        %v504 = vunpack.c.h.b16 %v459
        %v505 = vpack.c.b16 %v503, %v501
        %v506 = vpack.c.b16 %v504, %v502
        %v541 = vunpack.c.l.b16 %v460
        %v542 = vunpack.c.l.b16 %v461
        %v543 = vunpack.c.l.b16 %v462
        %v544 = vunpack.c.l.b16 %v463
        %v545 = vunpack.c.l.b16 %v464
        %v546 = vunpack.c.l.b16 %v465
        %v547 = vunpack.c.l.b16 %v466
        %v548 = vunpack.c.l.b16 %v467
        %v549 = vunpack.c.l.b16 %v468
        %v550 = vunpack.c.l.b16 %v469
        %v551 = vunpack.c.l.b16 %v470
        %v552 = vunpack.c.l.b16 %v471
        %v553 = vunpack.c.l.b16 %v472
        %v554 = vunpack.c.l.b16 %v473
        %v555 = vunpack.c.l.b16 %v474
        %v556 = vunpack.c.l.b16 %v475
        %v557 = vunpack.c.l.b16 %v476
        %v558 = vunpack.c.l.b16 %v477
        %v559 = vunpack.c.l.b16 %v478
        %v560 = vunpack.c.l.b16 %v479
        %v561 = vunpack.c.l.b16 %v480
        %v562 = vunpack.c.l.b16 %v481
        %v563 = vunpack.c.l.b16 %v482
        %v564 = vunpack.c.l.b16 %v483
        %v565 = vunpack.c.l.b16 %v484
        %v566 = vunpack.c.l.b16 %v485
        %v567 = vunpack.c.l.b16 %v486
        %v568 = vunpack.c.l.b16 %v487
        %v569 = vunpack.c.l.b16 %v488
        %v570 = vunpack.c.l.b16 %v489
        %v571 = vunpack.c.l.b16 %v490
        %v572 = vunpack.c.l.b16 %v491
        %v573 = vpack.c.b16 %v542, %v541
        %v574 = vpack.c.b16 %v544, %v543
        %v575 = vpack.c.b16 %v546, %v545
        %v576 = vpack.c.b16 %v548, %v547
        %v577 = vpack.c.b16 %v550, %v549
        %v578 = vpack.c.b16 %v552, %v551
        %v579 = vpack.c.b16 %v554, %v553
        %v580 = vpack.c.b16 %v556, %v555
        %v581 = vpack.c.b16 %v558, %v557
        %v582 = vpack.c.b16 %v560, %v559
        %v583 = vpack.c.b16 %v562, %v561
        %v584 = vpack.c.b16 %v564, %v563
        %v585 = vpack.c.b16 %v566, %v565
        %v586 = vpack.c.b16 %v568, %v567
        %v587 = vpack.c.b16 %v570, %v569
        %v588 = vpack.c.b16 %v572, %v571
        %605 = vmatprep.subr.bf16.mxu0 0
        %606 = vmatpush1.bf16.msra.mxu0 %v580
        %607 = vmatprep.subr.bf16.mxu0 0
        %608 = vmatpush1.bf16.msra.mxu0 %v579
        %609 = vmatprep.subr.bf16.mxu0 0
        %610 = vmatpush1.bf16.msra.mxu0 %v578
        %611 = vmatprep.subr.bf16.mxu0 0
        %612 = vmatpush1.bf16.msra.mxu0 %v577
        %613 = vmatprep.subr.bf16.mxu0 0
        %614 = vmatpush1.bf16.msra.mxu0 %v576
        %615 = vmatprep.subr.bf16.mxu0 0
        %616 = vmatpush1.bf16.msra.mxu0 %v575
        %617 = vmatprep.subr.bf16.mxu0 0
        %618 = vmatpush1.bf16.msra.mxu0 %v574
        %619 = vmatprep.subr.bf16.mxu0 0
        %620 = vmatpush1.bf16.msra.mxu0 %v573
        %621 = vmatprep.subr.bf16.mxu0 0
        %622 = vmatpush2.bf16.msra.mxu0 %v588
        %623 = vmatprep.subr.bf16.mxu0 0
        %624 = vmatpush2.bf16.msra.mxu0 %v587
        %625 = vmatprep.subr.bf16.mxu0 0
        %626 = vmatpush2.bf16.msra.mxu0 %v586
        %627 = vmatprep.subr.bf16.mxu0 0
        %628 = vmatpush2.bf16.msra.mxu0 %v585
        %629 = vmatprep.subr.bf16.mxu0 0
        %630 = vmatpush2.bf16.msra.mxu0 %v584
        %631 = vmatprep.subr.bf16.mxu0 0
        %632 = vmatpush2.bf16.msra.mxu0 %v583
        %633 = vmatprep.subr.bf16.mxu0 0
        %634 = vmatpush2.bf16.msra.mxu0 %v582
        %635 = vmatprep.subr.bf16.mxu0 0
        %636 = vmatpush2.bf16.msra.mxu0 %v581
        %637 = vmatprep.mubr.bf16.mxu0 %v506
        %638 = vmatmul.mubr.bf16.gmra.mxu0 %v505
        %v639 = vpop.f32.mrf.mxu0
        %v640 = vadd.f32 %v497, %v639
        %v641 = vpop.f32.mrf.mxu0
        %v642 = vpop.f32.mrf.mxu0
        %v643 = vadd.f32 %v497, %v642
        %v644 = vpop.f32.mrf.mxu0
        %645 = vdwg.mxu0
        %v646 = vld [vmem:[%s3] sm:$0xff]
        %v647 = vld [vmem:[%s3 + $0x8] sm:$0xff]
        %v648 = vld [vmem:[%s3 + $0x10] sm:$0xff]
        %v649 = vld [vmem:[%s3 + $0x18] sm:$0xff]
        %v650 = vld [vmem:[%s3 + $0x20] sm:$0xff]
        %v651 = vld [vmem:[%s3 + $0x28] sm:$0xff]
        %v652 = vld [vmem:[%s3 + $0x30] sm:$0xff]
        %v653 = vld [vmem:[%s3 + $0x38] sm:$0xff]
        %v654 = vld [vmem:[%s3 + $0x40] sm:$0xff]
        %v655 = vld [vmem:[%s3 + $0x48] sm:$0xff]
        %v656 = vld [vmem:[%s3 + $0x50] sm:$0xff]
        %v657 = vld [vmem:[%s3 + $0x58] sm:$0xff]
        %v658 = vld [vmem:[%s3 + $0x60] sm:$0xff]
        %v659 = vld [vmem:[%s3 + $0x68] sm:$0xff]
        %v660 = vld [vmem:[%s3 + $0x70] sm:$0xff]
        %v661 = vld [vmem:[%s3 + $0x78] sm:$0xff]
        %v662 = vld [vmem:[%s3 + $0x80] sm:$0xff]
        %v663 = vld [vmem:[%s3 + $0x88] sm:$0xff]
        %v664 = vld [vmem:[%s3 + $0x90] sm:$0xff]
        %v665 = vld [vmem:[%s3 + $0x98] sm:$0xff]
        %v666 = vld [vmem:[%s3 + $0xa0] sm:$0xff]
        %v667 = vld [vmem:[%s3 + $0xa8] sm:$0xff]
        %v668 = vld [vmem:[%s3 + $0xb0] sm:$0xff]
        %v669 = vld [vmem:[%s3 + $0xb8] sm:$0xff]
        %v670 = vld [vmem:[%s3 + $0xc0] sm:$0xff]
        %v671 = vld [vmem:[%s3 + $0xc8] sm:$0xff]
        %v672 = vld [vmem:[%s3 + $0xd0] sm:$0xff]
        %v673 = vld [vmem:[%s3 + $0xd8] sm:$0xff]
        %v674 = vld [vmem:[%s3 + $0xe0] sm:$0xff]
        %v675 = vld [vmem:[%s3 + $0xe8] sm:$0xff]
        %v676 = vld [vmem:[%s3 + $0xf0] sm:$0xff]
        %v677 = vld [vmem:[%s3 + $0xf8] sm:$0xff]
        %v678 = vld [vmem:[%s3 + $0x100] sm:$0xff]
        %v679 = vld [vmem:[%s3 + $0x108] sm:$0xff]
        %v680 = vld [vmem:[%s3 + $0x110] sm:$0xff]
        %v681 = vld [vmem:[%s3 + $0x118] sm:$0xff]
        %v682 = vld [vmem:[%s3 + $0x120] sm:$0xff]
        %v683 = vld [vmem:[%s3 + $0x128] sm:$0xff]
        %v684 = vld [vmem:[%s3 + $0x130] sm:$0xff]
        %v685 = vld [vmem:[%s3 + $0x138] sm:$0xff]
        %v686 = vld [vmem:[%s3 + $0x140] sm:$0xff]
        %v687 = vld [vmem:[%s3 + $0x148] sm:$0xff]
        %v688 = vld [vmem:[%s3 + $0x150] sm:$0xff]
        %v689 = vld [vmem:[%s3 + $0x158] sm:$0xff]
        %v690 = vld [vmem:[%s3 + $0x160] sm:$0xff]
        %v691 = vld [vmem:[%s3 + $0x168] sm:$0xff]
        %v692 = vld [vmem:[%s3 + $0x170] sm:$0xff]
        %v693 = vld [vmem:[%s3 + $0x178] sm:$0xff]
        %v694 = vld [vmem:[%s3 + $0x180] sm:$0xff]
        %v695 = vld [vmem:[%s3 + $0x188] sm:$0xff]
        %v696 = vld [vmem:[%s3 + $0x190] sm:$0xff]
        %v697 = vld [vmem:[%s3 + $0x198] sm:$0xff]
        %v698 = vld [vmem:[%s3 + $0x1a0] sm:$0xff]
        %v699 = vld [vmem:[%s3 + $0x1a8] sm:$0xff]
        %v700 = vld [vmem:[%s3 + $0x1b0] sm:$0xff]
        %v701 = vld [vmem:[%s3 + $0x1b8] sm:$0xff]
        %v702 = vld [vmem:[%s3 + $0x1c0] sm:$0xff]
        %v703 = vld [vmem:[%s3 + $0x1c8] sm:$0xff]
        %v704 = vld [vmem:[%s3 + $0x1d0] sm:$0xff]
        %v705 = vld [vmem:[%s3 + $0x1d8] sm:$0xff]
        %v706 = vld [vmem:[%s3 + $0x1e0] sm:$0xff]
        %v707 = vld [vmem:[%s3 + $0x1e8] sm:$0xff]
        %v708 = vld [vmem:[%s3 + $0x1f0] sm:$0xff]
        %v709 = vld [vmem:[%s3 + $0x1f8] sm:$0xff]
        %v710 = vld [vmem:[%s4] sm:$0xff]
        %v711 = vld [vmem:[%s4 + $0x8] sm:$0xff]
        %v712 = vld [vmem:[%s4 + $0x10] sm:$0xff]
        %v713 = vld [vmem:[%s4 + $0x18] sm:$0xff]
        %v714 = vld [vmem:[%s4 + $0x20] sm:$0xff]
        %v715 = vld [vmem:[%s4 + $0x28] sm:$0xff]
        %v716 = vld [vmem:[%s4 + $0x30] sm:$0xff]
        %v717 = vld [vmem:[%s4 + $0x38] sm:$0xff]
        %v718 = vld [vmem:[%s4 + $0x40] sm:$0xff]
        %v719 = vld [vmem:[%s4 + $0x48] sm:$0xff]
        %v720 = vld [vmem:[%s4 + $0x50] sm:$0xff]
        %v721 = vld [vmem:[%s4 + $0x58] sm:$0xff]
        %v722 = vld [vmem:[%s4 + $0x60] sm:$0xff]
        %v723 = vld [vmem:[%s4 + $0x68] sm:$0xff]
        %v724 = vld [vmem:[%s4 + $0x70] sm:$0xff]
        %v725 = vld [vmem:[%s4 + $0x78] sm:$0xff]
        %v726 = vld [vmem:[%s5] sm:$0xff]
        %v727 = vld [vmem:[%s441] sm:$0xf]
        %v728 = vld [vmem:[%s441 + $0x10] sm:$0xf]
        %v729 = vld [vmem:[%s391] sm:$0xf]
        %v730 = vld [vmem:[%s391 + $0x4] sm:$0xf]
        %v733 = vunpack.c.l.b16 %v729
        %v734 = vunpack.c.l.b16 %v730
        %v735 = vpack.c.b16 %v734, %v733
        %v752 = vunpack.c.l.b16 %v710
        %v753 = vunpack.c.h.b16 %v710
        %v754 = vunpack.c.l.b16 %v711
        %v755 = vunpack.c.h.b16 %v711
        %v756 = vunpack.c.l.b16 %v712
        %v757 = vunpack.c.h.b16 %v712
        %v758 = vunpack.c.l.b16 %v713
        %v759 = vunpack.c.h.b16 %v713
        %v760 = vunpack.c.l.b16 %v714
        %v761 = vunpack.c.h.b16 %v714
        %v762 = vunpack.c.l.b16 %v715
        %v763 = vunpack.c.h.b16 %v715
        %v764 = vunpack.c.l.b16 %v716
        %v765 = vunpack.c.h.b16 %v716
        %v766 = vunpack.c.l.b16 %v717
        %v767 = vunpack.c.h.b16 %v717
        %v768 = vunpack.c.l.b16 %v718
        %v769 = vunpack.c.h.b16 %v718
        %v770 = vunpack.c.l.b16 %v719
        %v771 = vunpack.c.h.b16 %v719
        %v772 = vunpack.c.l.b16 %v720
        %v773 = vunpack.c.h.b16 %v720
        %v774 = vunpack.c.l.b16 %v721
        %v775 = vunpack.c.h.b16 %v721
        %v776 = vunpack.c.l.b16 %v722
        %v777 = vunpack.c.h.b16 %v722
        %v778 = vunpack.c.l.b16 %v723
        %v779 = vunpack.c.h.b16 %v723
        %v780 = vunpack.c.l.b16 %v724
        %v781 = vunpack.c.h.b16 %v724
        %v782 = vunpack.c.l.b16 %v725
        %v783 = vunpack.c.h.b16 %v725
        %v784 = vpack.c.b16 %v760, %v752
        %v785 = vpack.c.b16 %v761, %v753
        %v786 = vpack.c.b16 %v762, %v754
        %v787 = vpack.c.b16 %v763, %v755
        %v788 = vpack.c.b16 %v764, %v756
        %v789 = vpack.c.b16 %v765, %v757
        %v790 = vpack.c.b16 %v766, %v758
        %v791 = vpack.c.b16 %v767, %v759
        %v792 = vpack.c.b16 %v776, %v768
        %v793 = vpack.c.b16 %v777, %v769
        %v794 = vpack.c.b16 %v778, %v770
        %v795 = vpack.c.b16 %v779, %v771
        %v796 = vpack.c.b16 %v780, %v772
        %v797 = vpack.c.b16 %v781, %v773
        %v798 = vpack.c.b16 %v782, %v774
        %v799 = vpack.c.b16 %v783, %v775
        %vm816 = vcmask 261120
        %v818 = vsel %vm816, %v735, 0
        %820 = vmatprep.subr.bf16.mxu0 0
        %821 = vmatpush1.bf16.msra.mxu0 0
        %822 = vmatprep.subr.bf16.mxu0 0
        %823 = vmatpush1.bf16.msra.mxu0 0
        %824 = vmatprep.subr.bf16.mxu0 0
        %825 = vmatpush1.bf16.msra.mxu0 0
        %826 = vmatprep.subr.bf16.mxu0 0
        %827 = vmatpush1.bf16.msra.mxu0 0
        %828 = vmatprep.subr.bf16.mxu0 0
        %829 = vmatpush1.bf16.msra.mxu0 0
        %830 = vmatprep.subr.bf16.mxu0 0
        %831 = vmatpush1.bf16.msra.mxu0 0
        %832 = vmatprep.subr.bf16.mxu0 %v793
        %833 = vmatpush1.bf16.msra.mxu0 %v792
        %834 = vmatprep.subr.bf16.mxu0 %v785
        %835 = vmatpush1.bf16.msra.mxu0 %v784
        %836 = vmatprep.subr.bf16.mxu0 0
        %837 = vmatpush2.bf16.msra.mxu0 0
        %838 = vmatprep.subr.bf16.mxu0 0
        %839 = vmatpush2.bf16.msra.mxu0 0
        %840 = vmatprep.subr.bf16.mxu0 0
        %841 = vmatpush2.bf16.msra.mxu0 0
        %842 = vmatprep.subr.bf16.mxu0 0
        %843 = vmatpush2.bf16.msra.mxu0 0
        %844 = vmatprep.subr.bf16.mxu0 0
        %845 = vmatpush2.bf16.msra.mxu0 0
        %846 = vmatprep.subr.bf16.mxu0 0
        %847 = vmatpush2.bf16.msra.mxu0 0
        %848 = vmatprep.subr.bf16.mxu0 0
        %849 = vmatpush2.bf16.msra.mxu0 0
        %850 = vmatprep.subr.bf16.mxu0 0
        %851 = vmatpush2.bf16.msra.mxu0 0
        %852 = vmatprep.mubr.bf16.mxu0 0
        %853 = vmatmul.mubr.bf16.gmra.mxu0 %v818
        %v854 = vpop.f32.mrf.mxu0
        %v855 = vadd.f32 0.0, %v854
        %v856 = vpop.f32.mrf.mxu0
        %v857 = vadd.f32 0.0, %v856
        %v858 = vpop.f32.mrf.mxu0
        %v859 = vadd.f32 0.0, %v858
        %v860 = vpop.f32.mrf.mxu0
        %v861 = vadd.f32 0.0, %v860
        %862 = vdwg.mxu0
        %863 = vmatprep.subr.bf16.mxu0 0
        %864 = vmatpush1.bf16.msra.mxu0 0
        %865 = vmatprep.subr.bf16.mxu0 0
        %866 = vmatpush1.bf16.msra.mxu0 0
        %867 = vmatprep.subr.bf16.mxu0 0
        %868 = vmatpush1.bf16.msra.mxu0 0
        %869 = vmatprep.subr.bf16.mxu0 0
        %870 = vmatpush1.bf16.msra.mxu0 0
        %871 = vmatprep.subr.bf16.mxu0 0
        %872 = vmatpush1.bf16.msra.mxu0 0
        %873 = vmatprep.subr.bf16.mxu0 0
        %874 = vmatpush1.bf16.msra.mxu0 0
        %875 = vmatprep.subr.bf16.mxu0 %v795
        %876 = vmatpush1.bf16.msra.mxu0 %v794
        %877 = vmatprep.subr.bf16.mxu0 %v787
        %878 = vmatpush1.bf16.msra.mxu0 %v786
        %879 = vmatprep.subr.bf16.mxu0 0
        %880 = vmatpush2.bf16.msra.mxu0 0
        %881 = vmatprep.subr.bf16.mxu0 0
        %882 = vmatpush2.bf16.msra.mxu0 0
        %883 = vmatprep.subr.bf16.mxu0 0
        %884 = vmatpush2.bf16.msra.mxu0 0
        %885 = vmatprep.subr.bf16.mxu0 0
        %886 = vmatpush2.bf16.msra.mxu0 0
        %887 = vmatprep.subr.bf16.mxu0 0
        %888 = vmatpush2.bf16.msra.mxu0 0
        %889 = vmatprep.subr.bf16.mxu0 0
        %890 = vmatpush2.bf16.msra.mxu0 0
        %891 = vmatprep.subr.bf16.mxu0 0
        %892 = vmatpush2.bf16.msra.mxu0 0
        %893 = vmatprep.subr.bf16.mxu0 0
        %894 = vmatpush2.bf16.msra.mxu0 0
        %895 = vmatprep.mubr.bf16.mxu0 0
        %896 = vmatmul.mubr.bf16.gmra.mxu0 %v818
        %v897 = vpop.f32.mrf.mxu0
        %v898 = vadd.f32 0.0, %v897
        %v899 = vpop.f32.mrf.mxu0
        %v900 = vadd.f32 0.0, %v899
        %v901 = vpop.f32.mrf.mxu0
        %v902 = vadd.f32 0.0, %v901
        %v903 = vpop.f32.mrf.mxu0
        %v904 = vadd.f32 0.0, %v903
        %905 = vdwg.mxu0
        %906 = vmatprep.subr.bf16.mxu0 0
        %907 = vmatpush1.bf16.msra.mxu0 0
        %908 = vmatprep.subr.bf16.mxu0 0
        %909 = vmatpush1.bf16.msra.mxu0 0
        %910 = vmatprep.subr.bf16.mxu0 0
        %911 = vmatpush1.bf16.msra.mxu0 0
        %912 = vmatprep.subr.bf16.mxu0 0
        %913 = vmatpush1.bf16.msra.mxu0 0
        %914 = vmatprep.subr.bf16.mxu0 0
        %915 = vmatpush1.bf16.msra.mxu0 0
        %916 = vmatprep.subr.bf16.mxu0 0
        %917 = vmatpush1.bf16.msra.mxu0 0
        %918 = vmatprep.subr.bf16.mxu0 %v797
        %919 = vmatpush1.bf16.msra.mxu0 %v796
        %920 = vmatprep.subr.bf16.mxu0 %v789
        %921 = vmatpush1.bf16.msra.mxu0 %v788
        %922 = vmatprep.subr.bf16.mxu0 0
        %923 = vmatpush2.bf16.msra.mxu0 0
        %924 = vmatprep.subr.bf16.mxu0 0
        %925 = vmatpush2.bf16.msra.mxu0 0
        %926 = vmatprep.subr.bf16.mxu0 0
        %927 = vmatpush2.bf16.msra.mxu0 0
        %928 = vmatprep.subr.bf16.mxu0 0
        %929 = vmatpush2.bf16.msra.mxu0 0
        %930 = vmatprep.subr.bf16.mxu0 0
        %931 = vmatpush2.bf16.msra.mxu0 0
        %932 = vmatprep.subr.bf16.mxu0 0
        %933 = vmatpush2.bf16.msra.mxu0 0
        %934 = vmatprep.subr.bf16.mxu0 0
        %935 = vmatpush2.bf16.msra.mxu0 0
        %936 = vmatprep.subr.bf16.mxu0 0
        %937 = vmatpush2.bf16.msra.mxu0 0
        %938 = vmatprep.mubr.bf16.mxu0 0
        %939 = vmatmul.mubr.bf16.gmra.mxu0 %v818
        %v940 = vpop.f32.mrf.mxu0
        %v941 = vadd.f32 0.0, %v940
        %v942 = vpop.f32.mrf.mxu0
        %v943 = vadd.f32 0.0, %v942
        %v944 = vpop.f32.mrf.mxu0
        %v945 = vadd.f32 0.0, %v944
        %v946 = vpop.f32.mrf.mxu0
        %v947 = vadd.f32 0.0, %v946
        %948 = vdwg.mxu0
        %949 = vmatprep.subr.bf16.mxu0 0
        %950 = vmatpush1.bf16.msra.mxu0 0
        %951 = vmatprep.subr.bf16.mxu0 0
        %952 = vmatpush1.bf16.msra.mxu0 0
        %953 = vmatprep.subr.bf16.mxu0 0
        %954 = vmatpush1.bf16.msra.mxu0 0
        %955 = vmatprep.subr.bf16.mxu0 0
        %956 = vmatpush1.bf16.msra.mxu0 0
        %957 = vmatprep.subr.bf16.mxu0 0
        %958 = vmatpush1.bf16.msra.mxu0 0
        %959 = vmatprep.subr.bf16.mxu0 0
        %960 = vmatpush1.bf16.msra.mxu0 0
        %961 = vmatprep.subr.bf16.mxu0 %v799
        %962 = vmatpush1.bf16.msra.mxu0 %v798
        %963 = vmatprep.subr.bf16.mxu0 %v791
        %964 = vmatpush1.bf16.msra.mxu0 %v790
        %965 = vmatprep.subr.bf16.mxu0 0
        %966 = vmatpush2.bf16.msra.mxu0 0
        %967 = vmatprep.subr.bf16.mxu0 0
        %968 = vmatpush2.bf16.msra.mxu0 0
        %969 = vmatprep.subr.bf16.mxu0 0
        %970 = vmatpush2.bf16.msra.mxu0 0
        %971 = vmatprep.subr.bf16.mxu0 0
        %972 = vmatpush2.bf16.msra.mxu0 0
        %973 = vmatprep.subr.bf16.mxu0 0
        %974 = vmatpush2.bf16.msra.mxu0 0
        %975 = vmatprep.subr.bf16.mxu0 0
        %976 = vmatpush2.bf16.msra.mxu0 0
        %977 = vmatprep.subr.bf16.mxu0 0
        %978 = vmatpush2.bf16.msra.mxu0 0
        %979 = vmatprep.subr.bf16.mxu0 0
        %980 = vmatpush2.bf16.msra.mxu0 0
        %981 = vmatprep.mubr.bf16.mxu0 0
        %982 = vmatmul.mubr.bf16.gmra.mxu0 %v818
        %v983 = vpop.f32.mrf.mxu0
        %v984 = vadd.f32 0.0, %v983
        %v985 = vpop.f32.mrf.mxu0
        %v986 = vadd.f32 0.0, %v985
        %v987 = vpop.f32.mrf.mxu0
        %v988 = vadd.f32 0.0, %v987
        %v989 = vpop.f32.mrf.mxu0
        %v990 = vadd.f32 0.0, %v989
        %991 = vdwg.mxu0
        %v994 = vunpack.c.l.b16 %v727
        %v995 = vunpack.c.l.b16 %v728
        %v996 = vpack.c.b16 %v995, %v994
        %v1062 = vunpack.c.l.b16 %v646
        %v1063 = vunpack.c.h.b16 %v646
        %v1064 = vunpack.c.l.b16 %v647
        %v1065 = vunpack.c.h.b16 %v647
        %v1066 = vunpack.c.l.b16 %v648
        %v1067 = vunpack.c.h.b16 %v648
        %v1068 = vunpack.c.l.b16 %v649
        %v1069 = vunpack.c.h.b16 %v649
        %v1070 = vunpack.c.l.b16 %v650
        %v1071 = vunpack.c.h.b16 %v650
        %v1072 = vunpack.c.l.b16 %v651
        %v1073 = vunpack.c.h.b16 %v651
        %v1074 = vunpack.c.l.b16 %v652
        %v1075 = vunpack.c.h.b16 %v652
        %v1076 = vunpack.c.l.b16 %v653
        %v1077 = vunpack.c.h.b16 %v653
        %v1078 = vunpack.c.l.b16 %v654
        %v1079 = vunpack.c.h.b16 %v654
        %v1080 = vunpack.c.l.b16 %v655
        %v1081 = vunpack.c.h.b16 %v655
        %v1082 = vunpack.c.l.b16 %v656
        %v1083 = vunpack.c.h.b16 %v656
        %v1084 = vunpack.c.l.b16 %v657
        %v1085 = vunpack.c.h.b16 %v657
        %v1086 = vunpack.c.l.b16 %v658
        %v1087 = vunpack.c.h.b16 %v658
        %v1088 = vunpack.c.l.b16 %v659
        %v1089 = vunpack.c.h.b16 %v659
        %v1090 = vunpack.c.l.b16 %v660
        %v1091 = vunpack.c.h.b16 %v660
        %v1092 = vunpack.c.l.b16 %v661
        %v1093 = vunpack.c.h.b16 %v661
        %v1094 = vunpack.c.l.b16 %v662
        %v1095 = vunpack.c.h.b16 %v662
        %v1096 = vunpack.c.l.b16 %v663
        %v1097 = vunpack.c.h.b16 %v663
        %v1098 = vunpack.c.l.b16 %v664
        %v1099 = vunpack.c.h.b16 %v664
        %v1100 = vunpack.c.l.b16 %v665
        %v1101 = vunpack.c.h.b16 %v665
        %v1102 = vunpack.c.l.b16 %v666
        %v1103 = vunpack.c.h.b16 %v666
        %v1104 = vunpack.c.l.b16 %v667
        %v1105 = vunpack.c.h.b16 %v667
        %v1106 = vunpack.c.l.b16 %v668
        %v1107 = vunpack.c.h.b16 %v668
        %v1108 = vunpack.c.l.b16 %v669
        %v1109 = vunpack.c.h.b16 %v669
        %v1110 = vunpack.c.l.b16 %v670
        %v1111 = vunpack.c.h.b16 %v670
        %v1112 = vunpack.c.l.b16 %v671
        %v1113 = vunpack.c.h.b16 %v671
        %v1114 = vunpack.c.l.b16 %v672
        %v1115 = vunpack.c.h.b16 %v672
        %v1116 = vunpack.c.l.b16 %v673
        %v1117 = vunpack.c.h.b16 %v673
        %v1118 = vunpack.c.l.b16 %v674
        %v1119 = vunpack.c.h.b16 %v674
        %v1120 = vunpack.c.l.b16 %v675
        %v1121 = vunpack.c.h.b16 %v675
        %v1122 = vunpack.c.l.b16 %v676
        %v1123 = vunpack.c.h.b16 %v676
        %v1124 = vunpack.c.l.b16 %v677
        %v1125 = vunpack.c.h.b16 %v677
        %v1126 = vunpack.c.l.b16 %v678
        %v1127 = vunpack.c.h.b16 %v678
        %v1128 = vunpack.c.l.b16 %v679
        %v1129 = vunpack.c.h.b16 %v679
        %v1130 = vunpack.c.l.b16 %v680
        %v1131 = vunpack.c.h.b16 %v680
        %v1132 = vunpack.c.l.b16 %v681
        %v1133 = vunpack.c.h.b16 %v681
        %v1134 = vunpack.c.l.b16 %v682
        %v1135 = vunpack.c.h.b16 %v682
        %v1136 = vunpack.c.l.b16 %v683
        %v1137 = vunpack.c.h.b16 %v683
        %v1138 = vunpack.c.l.b16 %v684
        %v1139 = vunpack.c.h.b16 %v684
        %v1140 = vunpack.c.l.b16 %v685
        %v1141 = vunpack.c.h.b16 %v685
        %v1142 = vunpack.c.l.b16 %v686
        %v1143 = vunpack.c.h.b16 %v686
        %v1144 = vunpack.c.l.b16 %v687
        %v1145 = vunpack.c.h.b16 %v687
        %v1146 = vunpack.c.l.b16 %v688
        %v1147 = vunpack.c.h.b16 %v688
        %v1148 = vunpack.c.l.b16 %v689
        %v1149 = vunpack.c.h.b16 %v689
        %v1150 = vunpack.c.l.b16 %v690
        %v1151 = vunpack.c.h.b16 %v690
        %v1152 = vunpack.c.l.b16 %v691
        %v1153 = vunpack.c.h.b16 %v691
        %v1154 = vunpack.c.l.b16 %v692
        %v1155 = vunpack.c.h.b16 %v692
        %v1156 = vunpack.c.l.b16 %v693
        %v1157 = vunpack.c.h.b16 %v693
        %v1158 = vunpack.c.l.b16 %v694
        %v1159 = vunpack.c.h.b16 %v694
        %v1160 = vunpack.c.l.b16 %v695
        %v1161 = vunpack.c.h.b16 %v695
        %v1162 = vunpack.c.l.b16 %v696
        %v1163 = vunpack.c.h.b16 %v696
        %v1164 = vunpack.c.l.b16 %v697
        %v1165 = vunpack.c.h.b16 %v697
        %v1166 = vunpack.c.l.b16 %v698
        %v1167 = vunpack.c.h.b16 %v698
        %v1168 = vunpack.c.l.b16 %v699
        %v1169 = vunpack.c.h.b16 %v699
        %v1170 = vunpack.c.l.b16 %v700
        %v1171 = vunpack.c.h.b16 %v700
        %v1172 = vunpack.c.l.b16 %v701
        %v1173 = vunpack.c.h.b16 %v701
        %v1174 = vunpack.c.l.b16 %v702
        %v1175 = vunpack.c.h.b16 %v702
        %v1176 = vunpack.c.l.b16 %v703
        %v1177 = vunpack.c.h.b16 %v703
        %v1178 = vunpack.c.l.b16 %v704
        %v1179 = vunpack.c.h.b16 %v704
        %v1180 = vunpack.c.l.b16 %v705
        %v1181 = vunpack.c.h.b16 %v705
        %v1182 = vunpack.c.l.b16 %v706
        %v1183 = vunpack.c.h.b16 %v706
        %v1184 = vunpack.c.l.b16 %v707
        %v1185 = vunpack.c.h.b16 %v707
        %v1186 = vunpack.c.l.b16 %v708
        %v1187 = vunpack.c.h.b16 %v708
        %v1188 = vunpack.c.l.b16 %v709
        %v1189 = vunpack.c.h.b16 %v709
        %v1190 = vpack.c.b16 %v1070, %v1062
        %v1191 = vpack.c.b16 %v1071, %v1063
        %v1192 = vpack.c.b16 %v1072, %v1064
        %v1193 = vpack.c.b16 %v1073, %v1065
        %v1194 = vpack.c.b16 %v1074, %v1066
        %v1195 = vpack.c.b16 %v1075, %v1067
        %v1196 = vpack.c.b16 %v1076, %v1068
        %v1197 = vpack.c.b16 %v1077, %v1069
        %v1198 = vpack.c.b16 %v1086, %v1078
        %v1199 = vpack.c.b16 %v1087, %v1079
        %v1200 = vpack.c.b16 %v1088, %v1080
        %v1201 = vpack.c.b16 %v1089, %v1081
        %v1202 = vpack.c.b16 %v1090, %v1082
        %v1203 = vpack.c.b16 %v1091, %v1083
        %v1204 = vpack.c.b16 %v1092, %v1084
        %v1205 = vpack.c.b16 %v1093, %v1085
        %v1206 = vpack.c.b16 %v1102, %v1094
        %v1207 = vpack.c.b16 %v1103, %v1095
        %v1208 = vpack.c.b16 %v1104, %v1096
        %v1209 = vpack.c.b16 %v1105, %v1097
        %v1210 = vpack.c.b16 %v1106, %v1098
        %v1211 = vpack.c.b16 %v1107, %v1099
        %v1212 = vpack.c.b16 %v1108, %v1100
        %v1213 = vpack.c.b16 %v1109, %v1101
        %v1214 = vpack.c.b16 %v1118, %v1110
        %v1215 = vpack.c.b16 %v1119, %v1111
        %v1216 = vpack.c.b16 %v1120, %v1112
        %v1217 = vpack.c.b16 %v1121, %v1113
        %v1218 = vpack.c.b16 %v1122, %v1114
        %v1219 = vpack.c.b16 %v1123, %v1115
        %v1220 = vpack.c.b16 %v1124, %v1116
        %v1221 = vpack.c.b16 %v1125, %v1117
        %v1222 = vpack.c.b16 %v1134, %v1126
        %v1223 = vpack.c.b16 %v1135, %v1127
        %v1224 = vpack.c.b16 %v1136, %v1128
        %v1225 = vpack.c.b16 %v1137, %v1129
        %v1226 = vpack.c.b16 %v1138, %v1130
        %v1227 = vpack.c.b16 %v1139, %v1131
        %v1228 = vpack.c.b16 %v1140, %v1132
        %v1229 = vpack.c.b16 %v1141, %v1133
        %v1230 = vpack.c.b16 %v1150, %v1142
        %v1231 = vpack.c.b16 %v1151, %v1143
        %v1232 = vpack.c.b16 %v1152, %v1144
        %v1233 = vpack.c.b16 %v1153, %v1145
        %v1234 = vpack.c.b16 %v1154, %v1146
        %v1235 = vpack.c.b16 %v1155, %v1147
        %v1236 = vpack.c.b16 %v1156, %v1148
        %v1237 = vpack.c.b16 %v1157, %v1149
        %v1238 = vpack.c.b16 %v1166, %v1158
        %v1239 = vpack.c.b16 %v1167, %v1159
        %v1240 = vpack.c.b16 %v1168, %v1160
        %v1241 = vpack.c.b16 %v1169, %v1161
        %v1242 = vpack.c.b16 %v1170, %v1162
        %v1243 = vpack.c.b16 %v1171, %v1163
        %v1244 = vpack.c.b16 %v1172, %v1164
        %v1245 = vpack.c.b16 %v1173, %v1165
        %v1246 = vpack.c.b16 %v1182, %v1174
        %v1247 = vpack.c.b16 %v1183, %v1175
        %v1248 = vpack.c.b16 %v1184, %v1176
        %v1249 = vpack.c.b16 %v1185, %v1177
        %v1250 = vpack.c.b16 %v1186, %v1178
        %v1251 = vpack.c.b16 %v1187, %v1179
        %v1252 = vpack.c.b16 %v1188, %v1180
        %v1253 = vpack.c.b16 %v1189, %v1181
        %1318 = vmatprep.subr.bf16.mxu0 %v1247
        %1319 = vmatpush1.bf16.msra.mxu0 %v1246
        %1320 = vmatprep.subr.bf16.mxu0 %v1239
        %1321 = vmatpush1.bf16.msra.mxu0 %v1238
        %1322 = vmatprep.subr.bf16.mxu0 %v1231
        %1323 = vmatpush1.bf16.msra.mxu0 %v1230
        %1324 = vmatprep.subr.bf16.mxu0 %v1223
        %1325 = vmatpush1.bf16.msra.mxu0 %v1222
        %1326 = vmatprep.subr.bf16.mxu0 %v1215
        %1327 = vmatpush1.bf16.msra.mxu0 %v1214
        %1328 = vmatprep.subr.bf16.mxu0 %v1207
        %1329 = vmatpush1.bf16.msra.mxu0 %v1206
        %1330 = vmatprep.subr.bf16.mxu0 %v1199
        %1331 = vmatpush1.bf16.msra.mxu0 %v1198
        %1332 = vmatprep.subr.bf16.mxu0 %v1191
        %1333 = vmatpush1.bf16.msra.mxu0 %v1190
        %1334 = vmatprep.subr.bf16.mxu0 0
        %1335 = vmatpush2.bf16.msra.mxu0 0
        %1336 = vmatprep.subr.bf16.mxu0 0
        %1337 = vmatpush2.bf16.msra.mxu0 0
        %1338 = vmatprep.subr.bf16.mxu0 0
        %1339 = vmatpush2.bf16.msra.mxu0 0
        %1340 = vmatprep.subr.bf16.mxu0 0
        %1341 = vmatpush2.bf16.msra.mxu0 0
        %1342 = vmatprep.subr.bf16.mxu0 0
        %1343 = vmatpush2.bf16.msra.mxu0 0
        %1344 = vmatprep.subr.bf16.mxu0 0
        %1345 = vmatpush2.bf16.msra.mxu0 0
        %1346 = vmatprep.subr.bf16.mxu0 0
        %1347 = vmatpush2.bf16.msra.mxu0 0
        %1348 = vmatprep.subr.bf16.mxu0 0
        %1349 = vmatpush2.bf16.msra.mxu0 0
        %1350 = vmatprep.mubr.bf16.mxu0 0
        %1351 = vmatmul.mubr.bf16.gmra.mxu0 %v996
        %v1352 = vpop.f32.mrf.mxu0
        %v1353 = vadd.f32 %v855, %v1352
        %v1354 = vpop.f32.mrf.mxu0
        %v1355 = vadd.f32 %v857, %v1354
        %v1356 = vpop.f32.mrf.mxu0
        %v1357 = vadd.f32 %v859, %v1356
        %v1358 = vpop.f32.mrf.mxu0
        %v1359 = vadd.f32 %v861, %v1358
        %1360 = vdwg.mxu0
        %1361 = vmatprep.subr.bf16.mxu0 %v1249
        %1362 = vmatpush1.bf16.msra.mxu0 %v1248
        %1363 = vmatprep.subr.bf16.mxu0 %v1241
        %1364 = vmatpush1.bf16.msra.mxu0 %v1240
        %1365 = vmatprep.subr.bf16.mxu0 %v1233
        %1366 = vmatpush1.bf16.msra.mxu0 %v1232
        %1367 = vmatprep.subr.bf16.mxu0 %v1225
        %1368 = vmatpush1.bf16.msra.mxu0 %v1224
        %1369 = vmatprep.subr.bf16.mxu0 %v1217
        %1370 = vmatpush1.bf16.msra.mxu0 %v1216
        %1371 = vmatprep.subr.bf16.mxu0 %v1209
        %1372 = vmatpush1.bf16.msra.mxu0 %v1208
        %1373 = vmatprep.subr.bf16.mxu0 %v1201
        %1374 = vmatpush1.bf16.msra.mxu0 %v1200
        %1375 = vmatprep.subr.bf16.mxu0 %v1193
        %1376 = vmatpush1.bf16.msra.mxu0 %v1192
        %1377 = vmatprep.subr.bf16.mxu0 0
        %1378 = vmatpush2.bf16.msra.mxu0 0
        %1379 = vmatprep.subr.bf16.mxu0 0
        %1380 = vmatpush2.bf16.msra.mxu0 0
        %1381 = vmatprep.subr.bf16.mxu0 0
        %1382 = vmatpush2.bf16.msra.mxu0 0
        %1383 = vmatprep.subr.bf16.mxu0 0
        %1384 = vmatpush2.bf16.msra.mxu0 0
        %1385 = vmatprep.subr.bf16.mxu0 0
        %1386 = vmatpush2.bf16.msra.mxu0 0
        %1387 = vmatprep.subr.bf16.mxu0 0
        %1388 = vmatpush2.bf16.msra.mxu0 0
        %1389 = vmatprep.subr.bf16.mxu0 0
        %1390 = vmatpush2.bf16.msra.mxu0 0
        %1391 = vmatprep.subr.bf16.mxu0 0
        %1392 = vmatpush2.bf16.msra.mxu0 0
        %1393 = vmatprep.mubr.bf16.mxu0 0
        %1394 = vmatmul.mubr.bf16.gmra.mxu0 %v996
        %v1395 = vpop.f32.mrf.mxu0
        %v1396 = vadd.f32 %v898, %v1395
        %v1397 = vpop.f32.mrf.mxu0
        %v1398 = vadd.f32 %v900, %v1397
        %v1399 = vpop.f32.mrf.mxu0
        %v1400 = vadd.f32 %v902, %v1399
        %v1401 = vpop.f32.mrf.mxu0
        %v1402 = vadd.f32 %v904, %v1401
        %1403 = vdwg.mxu0
        %1404 = vmatprep.subr.bf16.mxu0 %v1251
        %1405 = vmatpush1.bf16.msra.mxu0 %v1250
        %1406 = vmatprep.subr.bf16.mxu0 %v1243
        %1407 = vmatpush1.bf16.msra.mxu0 %v1242
        %1408 = vmatprep.subr.bf16.mxu0 %v1235
        %1409 = vmatpush1.bf16.msra.mxu0 %v1234
        %1410 = vmatprep.subr.bf16.mxu0 %v1227
        %1411 = vmatpush1.bf16.msra.mxu0 %v1226
        %1412 = vmatprep.subr.bf16.mxu0 %v1219
        %1413 = vmatpush1.bf16.msra.mxu0 %v1218
        %1414 = vmatprep.subr.bf16.mxu0 %v1211
        %1415 = vmatpush1.bf16.msra.mxu0 %v1210
        %1416 = vmatprep.subr.bf16.mxu0 %v1203
        %1417 = vmatpush1.bf16.msra.mxu0 %v1202
        %1418 = vmatprep.subr.bf16.mxu0 %v1195
        %1419 = vmatpush1.bf16.msra.mxu0 %v1194
        %1420 = vmatprep.subr.bf16.mxu0 0
        %1421 = vmatpush2.bf16.msra.mxu0 0
        %1422 = vmatprep.subr.bf16.mxu0 0
        %1423 = vmatpush2.bf16.msra.mxu0 0
        %1424 = vmatprep.subr.bf16.mxu0 0
        %1425 = vmatpush2.bf16.msra.mxu0 0
        %1426 = vmatprep.subr.bf16.mxu0 0
        %1427 = vmatpush2.bf16.msra.mxu0 0
        %1428 = vmatprep.subr.bf16.mxu0 0
        %1429 = vmatpush2.bf16.msra.mxu0 0
        %1430 = vmatprep.subr.bf16.mxu0 0
        %1431 = vmatpush2.bf16.msra.mxu0 0
        %1432 = vmatprep.subr.bf16.mxu0 0
        %1433 = vmatpush2.bf16.msra.mxu0 0
        %1434 = vmatprep.subr.bf16.mxu0 0
        %1435 = vmatpush2.bf16.msra.mxu0 0
        %1436 = vmatprep.mubr.bf16.mxu0 0
        %1437 = vmatmul.mubr.bf16.gmra.mxu0 %v996
        %v1438 = vpop.f32.mrf.mxu0
        %v1439 = vadd.f32 %v941, %v1438
        %v1440 = vpop.f32.mrf.mxu0
        %v1441 = vadd.f32 %v943, %v1440
        %v1442 = vpop.f32.mrf.mxu0
        %v1443 = vadd.f32 %v945, %v1442
        %v1444 = vpop.f32.mrf.mxu0
        %v1445 = vadd.f32 %v947, %v1444
        %1446 = vdwg.mxu0
        %1447 = vmatprep.subr.bf16.mxu0 %v1253
        %1448 = vmatpush1.bf16.msra.mxu0 %v1252
        %1449 = vmatprep.subr.bf16.mxu0 %v1245
        %1450 = vmatpush1.bf16.msra.mxu0 %v1244
        %1451 = vmatprep.subr.bf16.mxu0 %v1237
        %1452 = vmatpush1.bf16.msra.mxu0 %v1236
        %1453 = vmatprep.subr.bf16.mxu0 %v1229
        %1454 = vmatpush1.bf16.msra.mxu0 %v1228
        %1455 = vmatprep.subr.bf16.mxu0 %v1221
        %1456 = vmatpush1.bf16.msra.mxu0 %v1220
        %1457 = vmatprep.subr.bf16.mxu0 %v1213
        %1458 = vmatpush1.bf16.msra.mxu0 %v1212
        %1459 = vmatprep.subr.bf16.mxu0 %v1205
        %1460 = vmatpush1.bf16.msra.mxu0 %v1204
        %1461 = vmatprep.subr.bf16.mxu0 %v1197
        %1462 = vmatpush1.bf16.msra.mxu0 %v1196
        %1463 = vmatprep.subr.bf16.mxu0 0
        %1464 = vmatpush2.bf16.msra.mxu0 0
        %1465 = vmatprep.subr.bf16.mxu0 0
        %1466 = vmatpush2.bf16.msra.mxu0 0
        %1467 = vmatprep.subr.bf16.mxu0 0
        %1468 = vmatpush2.bf16.msra.mxu0 0
        %1469 = vmatprep.subr.bf16.mxu0 0
        %1470 = vmatpush2.bf16.msra.mxu0 0
        %1471 = vmatprep.subr.bf16.mxu0 0
        %1472 = vmatpush2.bf16.msra.mxu0 0
        %1473 = vmatprep.subr.bf16.mxu0 0
        %1474 = vmatpush2.bf16.msra.mxu0 0
        %1475 = vmatprep.subr.bf16.mxu0 0
        %1476 = vmatpush2.bf16.msra.mxu0 0
        %1477 = vmatprep.subr.bf16.mxu0 0
        %1478 = vmatpush2.bf16.msra.mxu0 0
        %1479 = vmatprep.mubr.bf16.mxu0 0
        %1480 = vmatmul.mubr.bf16.gmra.mxu0 %v996
        %v1481 = vpop.f32.mrf.mxu0
        %v1482 = vadd.f32 %v984, %v1481
        %v1483 = vpop.f32.mrf.mxu0
        %v1484 = vadd.f32 %v986, %v1483
        %v1485 = vpop.f32.mrf.mxu0
        %v1486 = vadd.f32 %v988, %v1485
        %v1487 = vpop.f32.mrf.mxu0
        %v1488 = vadd.f32 %v990, %v1487
        %1489 = vdwg.mxu0
        %v1491 = vlaneseq
        %v1492 = vshrl.u32 %v1491, 7
        %v1493 = vsub.s32 0, %v1492
        %v1494 = vrot.slane %v726, %v1493
        %v1495 = vlaneseq
        %v1496 = vshrl.u32 %v1495, 7
        %v1497 = vsub.s32 1, %v1496
        %v1498 = vrot.slane %v726, %v1497
        %v1499 = vlaneseq
        %v1500 = vshrl.u32 %v1499, 7
        %v1501 = vsub.s32 2, %v1500
        %v1502 = vrot.slane %v726, %v1501
        %v1503 = vlaneseq
        %v1504 = vshrl.u32 %v1503, 7
        %v1505 = vsub.s32 3, %v1504
        %v1506 = vrot.slane %v726, %v1505
        %v1507 = vlaneseq
        %v1508 = vshrl.u32 %v1507, 7
        %v1509 = vsub.s32 4, %v1508
        %v1510 = vrot.slane %v726, %v1509
        %v1511 = vlaneseq
        %v1512 = vshrl.u32 %v1511, 7
        %v1513 = vsub.s32 5, %v1512
        %v1514 = vrot.slane %v726, %v1513
        %v1515 = vlaneseq
        %v1516 = vshrl.u32 %v1515, 7
        %v1517 = vsub.s32 6, %v1516
        %v1518 = vrot.slane %v726, %v1517
        %v1519 = vlaneseq
        %v1520 = vshrl.u32 %v1519, 7
        %v1521 = vsub.s32 7, %v1520
        %v1522 = vrot.slane %v726, %v1521
        %v1531 = vadd.f32 %v1353, %v1494
        %v1532 = vadd.f32 %v1355, %v1498
        %v1533 = vadd.f32 %v1396, %v1502
        %v1534 = vadd.f32 %v1398, %v1506
        %v1535 = vadd.f32 %v1439, %v1510
        %v1536 = vadd.f32 %v1441, %v1514
        %v1537 = vadd.f32 %v1482, %v1518
        %v1538 = vadd.f32 %v1484, %v1522
        %v1539 = vadd.f32 %v1357, %v1494
        %v1540 = vadd.f32 %v1359, %v1498
        %v1541 = vadd.f32 %v1400, %v1502
        %v1542 = vadd.f32 %v1402, %v1506
        %v1543 = vadd.f32 %v1443, %v1510
        %v1544 = vadd.f32 %v1445, %v1514
        %v1545 = vadd.f32 %v1486, %v1518
        %v1546 = vadd.f32 %v1488, %v1522
        %v1547 = vpack.c.bf16 %v1539, %v1531
        %v1548 = vpack.c.bf16 %v1540, %v1532
        %v1549 = vpack.c.bf16 %v1541, %v1533
        %v1550 = vpack.c.bf16 %v1542, %v1534
        %v1551 = vpack.c.bf16 %v1543, %v1535
        %v1552 = vpack.c.bf16 %v1544, %v1536
        %v1553 = vpack.c.bf16 %v1545, %v1537
        %v1554 = vpack.c.bf16 %v1546, %v1538
        %v1555 = vld [vmem:[%s6] sm:$0xf]
        %v1556 = vld [vmem:[%s6 + $0x4] sm:$0xf]
        %v1557 = vld [vmem:[%s6 + $0x8] sm:$0xf]
        %v1558 = vld [vmem:[%s6 + $0xc] sm:$0xf]
        %v1559 = vld [vmem:[%s6 + $0x10] sm:$0xf]
        %v1560 = vld [vmem:[%s6 + $0x14] sm:$0xf]
        %v1561 = vld [vmem:[%s6 + $0x18] sm:$0xf]
        %v1562 = vld [vmem:[%s6 + $0x1c] sm:$0xf]
        %v1563 = vld [vmem:[%s6 + $0x20] sm:$0xf]
        %v1564 = vld [vmem:[%s6 + $0x24] sm:$0xf]
        %v1565 = vld [vmem:[%s6 + $0x28] sm:$0xf]
        %v1566 = vld [vmem:[%s6 + $0x2c] sm:$0xf]
        %v1567 = vld [vmem:[%s6 + $0x30] sm:$0xf]
        %v1568 = vld [vmem:[%s6 + $0x34] sm:$0xf]
        %v1569 = vld [vmem:[%s6 + $0x38] sm:$0xf]
        %v1570 = vld [vmem:[%s6 + $0x3c] sm:$0xf]
        %v1571 = vld [vmem:[%s6 + $0x40] sm:$0xf]
        %v1572 = vld [vmem:[%s6 + $0x44] sm:$0xf]
        %v1573 = vld [vmem:[%s6 + $0x48] sm:$0xf]
        %v1574 = vld [vmem:[%s6 + $0x4c] sm:$0xf]
        %v1575 = vld [vmem:[%s6 + $0x50] sm:$0xf]
        %v1576 = vld [vmem:[%s6 + $0x54] sm:$0xf]
        %v1577 = vld [vmem:[%s6 + $0x58] sm:$0xf]
        %v1578 = vld [vmem:[%s6 + $0x5c] sm:$0xf]
        %v1579 = vld [vmem:[%s6 + $0x60] sm:$0xf]
        %v1580 = vld [vmem:[%s6 + $0x64] sm:$0xf]
        %v1581 = vld [vmem:[%s6 + $0x68] sm:$0xf]
        %v1582 = vld [vmem:[%s6 + $0x6c] sm:$0xf]
        %v1583 = vld [vmem:[%s6 + $0x70] sm:$0xf]
        %v1584 = vld [vmem:[%s6 + $0x74] sm:$0xf]
        %v1585 = vld [vmem:[%s6 + $0x78] sm:$0xf]
        %v1586 = vld [vmem:[%s6 + $0x7c] sm:$0xf]
        %v1587 = vld [vmem:[%s6 + $0x80] sm:$0xf]
        %v1588 = vld [vmem:[%s6 + $0x84] sm:$0xf]
        %v1589 = vld [vmem:[%s6 + $0x88] sm:$0xf]
        %v1590 = vld [vmem:[%s6 + $0x8c] sm:$0xf]
        %v1591 = vld [vmem:[%s6 + $0x90] sm:$0xf]
        %v1592 = vld [vmem:[%s6 + $0x94] sm:$0xf]
        %v1593 = vld [vmem:[%s6 + $0x98] sm:$0xf]
        %v1594 = vld [vmem:[%s6 + $0x9c] sm:$0xf]
        %v1595 = vld [vmem:[%s6 + $0xa0] sm:$0xf]
        %v1596 = vld [vmem:[%s6 + $0xa4] sm:$0xf]
        %v1597 = vld [vmem:[%s6 + $0xa8] sm:$0xf]
        %v1598 = vld [vmem:[%s6 + $0xac] sm:$0xf]
        %v1599 = vld [vmem:[%s6 + $0xb0] sm:$0xf]
        %v1600 = vld [vmem:[%s6 + $0xb4] sm:$0xf]
        %v1601 = vld [vmem:[%s6 + $0xb8] sm:$0xf]
        %v1602 = vld [vmem:[%s6 + $0xbc] sm:$0xf]
        %v1603 = vld [vmem:[%s6 + $0xc0] sm:$0xf]
        %v1604 = vld [vmem:[%s6 + $0xc4] sm:$0xf]
        %v1605 = vld [vmem:[%s6 + $0xc8] sm:$0xf]
        %v1606 = vld [vmem:[%s6 + $0xcc] sm:$0xf]
        %v1607 = vld [vmem:[%s6 + $0xd0] sm:$0xf]
        %v1608 = vld [vmem:[%s6 + $0xd4] sm:$0xf]
        %v1609 = vld [vmem:[%s6 + $0xd8] sm:$0xf]
        %v1610 = vld [vmem:[%s6 + $0xdc] sm:$0xf]
        %v1611 = vld [vmem:[%s6 + $0xe0] sm:$0xf]
        %v1612 = vld [vmem:[%s6 + $0xe4] sm:$0xf]
        %v1613 = vld [vmem:[%s6 + $0xe8] sm:$0xf]
        %v1614 = vld [vmem:[%s6 + $0xec] sm:$0xf]
        %v1615 = vld [vmem:[%s6 + $0xf0] sm:$0xf]
        %v1616 = vld [vmem:[%s6 + $0xf4] sm:$0xf]
        %v1617 = vld [vmem:[%s6 + $0xf8] sm:$0xf]
        %v1618 = vld [vmem:[%s6 + $0xfc] sm:$0xf]
        %v1619 = vld [vmem:[%s6 + $0x100] sm:$0xf]
        %v1620 = vld [vmem:[%s6 + $0x104] sm:$0xf]
        %v1621 = vld [vmem:[%s6 + $0x108] sm:$0xf]
        %v1622 = vld [vmem:[%s6 + $0x10c] sm:$0xf]
        %v1623 = vld [vmem:[%s6 + $0x110] sm:$0xf]
        %v1624 = vld [vmem:[%s6 + $0x114] sm:$0xf]
        %v1625 = vld [vmem:[%s6 + $0x118] sm:$0xf]
        %v1626 = vld [vmem:[%s6 + $0x11c] sm:$0xf]
        %v1627 = vld [vmem:[%s6 + $0x120] sm:$0xf]
        %v1628 = vld [vmem:[%s6 + $0x124] sm:$0xf]
        %v1629 = vld [vmem:[%s6 + $0x128] sm:$0xf]
        %v1630 = vld [vmem:[%s6 + $0x12c] sm:$0xf]
        %v1631 = vld [vmem:[%s6 + $0x130] sm:$0xf]
        %v1632 = vld [vmem:[%s6 + $0x134] sm:$0xf]
        %v1633 = vld [vmem:[%s6 + $0x138] sm:$0xf]
        %v1634 = vld [vmem:[%s6 + $0x13c] sm:$0xf]
        %v1635 = vld [vmem:[%s6 + $0x140] sm:$0xf]
        %v1636 = vld [vmem:[%s6 + $0x144] sm:$0xf]
        %v1637 = vld [vmem:[%s6 + $0x148] sm:$0xf]
        %v1638 = vld [vmem:[%s6 + $0x14c] sm:$0xf]
        %v1639 = vld [vmem:[%s6 + $0x150] sm:$0xf]
        %v1640 = vld [vmem:[%s6 + $0x154] sm:$0xf]
        %v1641 = vld [vmem:[%s6 + $0x158] sm:$0xf]
        %v1642 = vld [vmem:[%s6 + $0x15c] sm:$0xf]
        %v1643 = vld [vmem:[%s6 + $0x160] sm:$0xf]
        %v1644 = vld [vmem:[%s6 + $0x164] sm:$0xf]
        %v1645 = vld [vmem:[%s6 + $0x168] sm:$0xf]
        %v1646 = vld [vmem:[%s6 + $0x16c] sm:$0xf]
        %v1647 = vld [vmem:[%s6 + $0x170] sm:$0xf]
        %v1648 = vld [vmem:[%s6 + $0x174] sm:$0xf]
        %v1649 = vld [vmem:[%s6 + $0x178] sm:$0xf]
        %v1650 = vld [vmem:[%s6 + $0x17c] sm:$0xf]
        %v1651 = vld [vmem:[%s6 + $0x180] sm:$0xf]
        %v1652 = vld [vmem:[%s6 + $0x184] sm:$0xf]
        %v1653 = vld [vmem:[%s6 + $0x188] sm:$0xf]
        %v1654 = vld [vmem:[%s6 + $0x18c] sm:$0xf]
        %v1655 = vld [vmem:[%s6 + $0x190] sm:$0xf]
        %v1656 = vld [vmem:[%s6 + $0x194] sm:$0xf]
        %v1657 = vld [vmem:[%s6 + $0x198] sm:$0xf]
        %v1658 = vld [vmem:[%s6 + $0x19c] sm:$0xf]
        %v1659 = vld [vmem:[%s6 + $0x1a0] sm:$0xf]
        %v1660 = vld [vmem:[%s6 + $0x1a4] sm:$0xf]
        %v1661 = vld [vmem:[%s6 + $0x1a8] sm:$0xf]
        %v1662 = vld [vmem:[%s6 + $0x1ac] sm:$0xf]
        %v1663 = vld [vmem:[%s6 + $0x1b0] sm:$0xf]
        %v1664 = vld [vmem:[%s6 + $0x1b4] sm:$0xf]
        %v1665 = vld [vmem:[%s6 + $0x1b8] sm:$0xf]
        %v1666 = vld [vmem:[%s6 + $0x1bc] sm:$0xf]
        %v1667 = vld [vmem:[%s6 + $0x1c0] sm:$0xf]
        %v1668 = vld [vmem:[%s6 + $0x1c4] sm:$0xf]
        %v1669 = vld [vmem:[%s6 + $0x1c8] sm:$0xf]
        %v1670 = vld [vmem:[%s6 + $0x1cc] sm:$0xf]
        %v1671 = vld [vmem:[%s6 + $0x1d0] sm:$0xf]
        %v1672 = vld [vmem:[%s6 + $0x1d4] sm:$0xf]
        %v1673 = vld [vmem:[%s6 + $0x1d8] sm:$0xf]
        %v1674 = vld [vmem:[%s6 + $0x1dc] sm:$0xf]
        %v1675 = vld [vmem:[%s6 + $0x1e0] sm:$0xf]
        %v1676 = vld [vmem:[%s6 + $0x1e4] sm:$0xf]
        %v1677 = vld [vmem:[%s6 + $0x1e8] sm:$0xf]
        %v1678 = vld [vmem:[%s6 + $0x1ec] sm:$0xf]
        %v1679 = vld [vmem:[%s6 + $0x1f0] sm:$0xf]
        %v1680 = vld [vmem:[%s6 + $0x1f4] sm:$0xf]
        %v1681 = vld [vmem:[%s6 + $0x1f8] sm:$0xf]
        %v1682 = vld [vmem:[%s6 + $0x1fc] sm:$0xf]
        %v1811 = vunpack.c.l.b16 %v1555
        %v1812 = vunpack.c.l.b16 %v1556
        %v1813 = vunpack.c.l.b16 %v1557
        %v1814 = vunpack.c.l.b16 %v1558
        %v1815 = vunpack.c.l.b16 %v1559
        %v1816 = vunpack.c.l.b16 %v1560
        %v1817 = vunpack.c.l.b16 %v1561
        %v1818 = vunpack.c.l.b16 %v1562
        %v1819 = vunpack.c.l.b16 %v1563
        %v1820 = vunpack.c.l.b16 %v1564
        %v1821 = vunpack.c.l.b16 %v1565
        %v1822 = vunpack.c.l.b16 %v1566
        %v1823 = vunpack.c.l.b16 %v1567
        %v1824 = vunpack.c.l.b16 %v1568
        %v1825 = vunpack.c.l.b16 %v1569
        %v1826 = vunpack.c.l.b16 %v1570
        %v1827 = vunpack.c.l.b16 %v1571
        %v1828 = vunpack.c.l.b16 %v1572
        %v1829 = vunpack.c.l.b16 %v1573
        %v1830 = vunpack.c.l.b16 %v1574
        %v1831 = vunpack.c.l.b16 %v1575
        %v1832 = vunpack.c.l.b16 %v1576
        %v1833 = vunpack.c.l.b16 %v1577
        %v1834 = vunpack.c.l.b16 %v1578
        %v1835 = vunpack.c.l.b16 %v1579
        %v1836 = vunpack.c.l.b16 %v1580
        %v1837 = vunpack.c.l.b16 %v1581
        %v1838 = vunpack.c.l.b16 %v1582
        %v1839 = vunpack.c.l.b16 %v1583
        %v1840 = vunpack.c.l.b16 %v1584
        %v1841 = vunpack.c.l.b16 %v1585
        %v1842 = vunpack.c.l.b16 %v1586
        %v1843 = vunpack.c.l.b16 %v1587
        %v1844 = vunpack.c.l.b16 %v1588
        %v1845 = vunpack.c.l.b16 %v1589
        %v1846 = vunpack.c.l.b16 %v1590
        %v1847 = vunpack.c.l.b16 %v1591
        %v1848 = vunpack.c.l.b16 %v1592
        %v1849 = vunpack.c.l.b16 %v1593
        %v1850 = vunpack.c.l.b16 %v1594
        %v1851 = vunpack.c.l.b16 %v1595
        %v1852 = vunpack.c.l.b16 %v1596
        %v1853 = vunpack.c.l.b16 %v1597
        %v1854 = vunpack.c.l.b16 %v1598
        %v1855 = vunpack.c.l.b16 %v1599
        %v1856 = vunpack.c.l.b16 %v1600
        %v1857 = vunpack.c.l.b16 %v1601
        %v1858 = vunpack.c.l.b16 %v1602
        %v1859 = vunpack.c.l.b16 %v1603
        %v1860 = vunpack.c.l.b16 %v1604
        %v1861 = vunpack.c.l.b16 %v1605
        %v1862 = vunpack.c.l.b16 %v1606
        %v1863 = vunpack.c.l.b16 %v1607
        %v1864 = vunpack.c.l.b16 %v1608
        %v1865 = vunpack.c.l.b16 %v1609
        %v1866 = vunpack.c.l.b16 %v1610
        %v1867 = vunpack.c.l.b16 %v1611
        %v1868 = vunpack.c.l.b16 %v1612
        %v1869 = vunpack.c.l.b16 %v1613
        %v1870 = vunpack.c.l.b16 %v1614
        %v1871 = vunpack.c.l.b16 %v1615
        %v1872 = vunpack.c.l.b16 %v1616
        %v1873 = vunpack.c.l.b16 %v1617
        %v1874 = vunpack.c.l.b16 %v1618
        %v1875 = vunpack.c.l.b16 %v1619
        %v1876 = vunpack.c.l.b16 %v1620
        %v1877 = vunpack.c.l.b16 %v1621
        %v1878 = vunpack.c.l.b16 %v1622
        %v1879 = vunpack.c.l.b16 %v1623
        %v1880 = vunpack.c.l.b16 %v1624
        %v1881 = vunpack.c.l.b16 %v1625
        %v1882 = vunpack.c.l.b16 %v1626
        %v1883 = vunpack.c.l.b16 %v1627
        %v1884 = vunpack.c.l.b16 %v1628
        %v1885 = vunpack.c.l.b16 %v1629
        %v1886 = vunpack.c.l.b16 %v1630
        %v1887 = vunpack.c.l.b16 %v1631
        %v1888 = vunpack.c.l.b16 %v1632
        %v1889 = vunpack.c.l.b16 %v1633
        %v1890 = vunpack.c.l.b16 %v1634
        %v1891 = vunpack.c.l.b16 %v1635
        %v1892 = vunpack.c.l.b16 %v1636
        %v1893 = vunpack.c.l.b16 %v1637
        %v1894 = vunpack.c.l.b16 %v1638
        %v1895 = vunpack.c.l.b16 %v1639
        %v1896 = vunpack.c.l.b16 %v1640
        %v1897 = vunpack.c.l.b16 %v1641
        %v1898 = vunpack.c.l.b16 %v1642
        %v1899 = vunpack.c.l.b16 %v1643
        %v1900 = vunpack.c.l.b16 %v1644
        %v1901 = vunpack.c.l.b16 %v1645
        %v1902 = vunpack.c.l.b16 %v1646
        %v1903 = vunpack.c.l.b16 %v1647
        %v1904 = vunpack.c.l.b16 %v1648
        %v1905 = vunpack.c.l.b16 %v1649
        %v1906 = vunpack.c.l.b16 %v1650
        %v1907 = vunpack.c.l.b16 %v1651
        %v1908 = vunpack.c.l.b16 %v1652
        %v1909 = vunpack.c.l.b16 %v1653
        %v1910 = vunpack.c.l.b16 %v1654
        %v1911 = vunpack.c.l.b16 %v1655
        %v1912 = vunpack.c.l.b16 %v1656
        %v1913 = vunpack.c.l.b16 %v1657
        %v1914 = vunpack.c.l.b16 %v1658
        %v1915 = vunpack.c.l.b16 %v1659
        %v1916 = vunpack.c.l.b16 %v1660
        %v1917 = vunpack.c.l.b16 %v1661
        %v1918 = vunpack.c.l.b16 %v1662
        %v1919 = vunpack.c.l.b16 %v1663
        %v1920 = vunpack.c.l.b16 %v1664
        %v1921 = vunpack.c.l.b16 %v1665
        %v1922 = vunpack.c.l.b16 %v1666
        %v1923 = vunpack.c.l.b16 %v1667
        %v1924 = vunpack.c.l.b16 %v1668
        %v1925 = vunpack.c.l.b16 %v1669
        %v1926 = vunpack.c.l.b16 %v1670
        %v1927 = vunpack.c.l.b16 %v1671
        %v1928 = vunpack.c.l.b16 %v1672
        %v1929 = vunpack.c.l.b16 %v1673
        %v1930 = vunpack.c.l.b16 %v1674
        %v1931 = vunpack.c.l.b16 %v1675
        %v1932 = vunpack.c.l.b16 %v1676
        %v1933 = vunpack.c.l.b16 %v1677
        %v1934 = vunpack.c.l.b16 %v1678
        %v1935 = vunpack.c.l.b16 %v1679
        %v1936 = vunpack.c.l.b16 %v1680
        %v1937 = vunpack.c.l.b16 %v1681
        %v1938 = vunpack.c.l.b16 %v1682
        %v1939 = vpack.c.b16 %v1812, %v1811
        %v1940 = vpack.c.b16 %v1814, %v1813
        %v1941 = vpack.c.b16 %v1816, %v1815
        %v1942 = vpack.c.b16 %v1818, %v1817
        %v1943 = vpack.c.b16 %v1820, %v1819
        %v1944 = vpack.c.b16 %v1822, %v1821
        %v1945 = vpack.c.b16 %v1824, %v1823
        %v1946 = vpack.c.b16 %v1826, %v1825
        %v1947 = vpack.c.b16 %v1828, %v1827
        %v1948 = vpack.c.b16 %v1830, %v1829
        %v1949 = vpack.c.b16 %v1832, %v1831
        %v1950 = vpack.c.b16 %v1834, %v1833
        %v1951 = vpack.c.b16 %v1836, %v1835
        %v1952 = vpack.c.b16 %v1838, %v1837
        %v1953 = vpack.c.b16 %v1840, %v1839
        %v1954 = vpack.c.b16 %v1842, %v1841
        %v1955 = vpack.c.b16 %v1844, %v1843
        %v1956 = vpack.c.b16 %v1846, %v1845
        %v1957 = vpack.c.b16 %v1848, %v1847
        %v1958 = vpack.c.b16 %v1850, %v1849
        %v1959 = vpack.c.b16 %v1852, %v1851
        %v1960 = vpack.c.b16 %v1854, %v1853
        %v1961 = vpack.c.b16 %v1856, %v1855
        %v1962 = vpack.c.b16 %v1858, %v1857
        %v1963 = vpack.c.b16 %v1860, %v1859
        %v1964 = vpack.c.b16 %v1862, %v1861
        %v1965 = vpack.c.b16 %v1864, %v1863
        %v1966 = vpack.c.b16 %v1866, %v1865
        %v1967 = vpack.c.b16 %v1868, %v1867
        %v1968 = vpack.c.b16 %v1870, %v1869
        %v1969 = vpack.c.b16 %v1872, %v1871
        %v1970 = vpack.c.b16 %v1874, %v1873
        %v1971 = vpack.c.b16 %v1876, %v1875
        %v1972 = vpack.c.b16 %v1878, %v1877
        %v1973 = vpack.c.b16 %v1880, %v1879
        %v1974 = vpack.c.b16 %v1882, %v1881
        %v1975 = vpack.c.b16 %v1884, %v1883
        %v1976 = vpack.c.b16 %v1886, %v1885
        %v1977 = vpack.c.b16 %v1888, %v1887
        %v1978 = vpack.c.b16 %v1890, %v1889
        %v1979 = vpack.c.b16 %v1892, %v1891
        %v1980 = vpack.c.b16 %v1894, %v1893
        %v1981 = vpack.c.b16 %v1896, %v1895
        %v1982 = vpack.c.b16 %v1898, %v1897
        %v1983 = vpack.c.b16 %v1900, %v1899
        %v1984 = vpack.c.b16 %v1902, %v1901
        %v1985 = vpack.c.b16 %v1904, %v1903
        %v1986 = vpack.c.b16 %v1906, %v1905
        %v1987 = vpack.c.b16 %v1908, %v1907
        %v1988 = vpack.c.b16 %v1910, %v1909
        %v1989 = vpack.c.b16 %v1912, %v1911
        %v1990 = vpack.c.b16 %v1914, %v1913
        %v1991 = vpack.c.b16 %v1916, %v1915
        %v1992 = vpack.c.b16 %v1918, %v1917
        %v1993 = vpack.c.b16 %v1920, %v1919
        %v1994 = vpack.c.b16 %v1922, %v1921
        %v1995 = vpack.c.b16 %v1924, %v1923
        %v1996 = vpack.c.b16 %v1926, %v1925
        %v1997 = vpack.c.b16 %v1928, %v1927
        %v1998 = vpack.c.b16 %v1930, %v1929
        %v1999 = vpack.c.b16 %v1932, %v1931
        %v2000 = vpack.c.b16 %v1934, %v1933
        %v2001 = vpack.c.b16 %v1936, %v1935
        %v2002 = vpack.c.b16 %v1938, %v1937
        %2067 = vmatprep.subr.bf16.mxu0 0
        %2068 = vmatpush1.bf16.msra.mxu0 %v1946
        %2069 = vmatprep.subr.bf16.mxu0 0
        %2070 = vmatpush1.bf16.msra.mxu0 %v1945
        %2071 = vmatprep.subr.bf16.mxu0 0
        %2072 = vmatpush1.bf16.msra.mxu0 %v1944
        %2073 = vmatprep.subr.bf16.mxu0 0
        %2074 = vmatpush1.bf16.msra.mxu0 %v1943
        %2075 = vmatprep.subr.bf16.mxu0 0
        %2076 = vmatpush1.bf16.msra.mxu0 %v1942
        %2077 = vmatprep.subr.bf16.mxu0 0
        %2078 = vmatpush1.bf16.msra.mxu0 %v1941
        %2079 = vmatprep.subr.bf16.mxu0 0
        %2080 = vmatpush1.bf16.msra.mxu0 %v1940
        %2081 = vmatprep.subr.bf16.mxu0 0
        %2082 = vmatpush1.bf16.msra.mxu0 %v1939
        %2083 = vmatprep.subr.bf16.mxu0 0
        %2084 = vmatpush2.bf16.msra.mxu0 %v1954
        %2085 = vmatprep.subr.bf16.mxu0 0
        %2086 = vmatpush2.bf16.msra.mxu0 %v1953
        %2087 = vmatprep.subr.bf16.mxu0 0
        %2088 = vmatpush2.bf16.msra.mxu0 %v1952
        %2089 = vmatprep.subr.bf16.mxu0 0
        %2090 = vmatpush2.bf16.msra.mxu0 %v1951
        %2091 = vmatprep.subr.bf16.mxu0 0
        %2092 = vmatpush2.bf16.msra.mxu0 %v1950
        %2093 = vmatprep.subr.bf16.mxu0 0
        %2094 = vmatpush2.bf16.msra.mxu0 %v1949
        %2095 = vmatprep.subr.bf16.mxu0 0
        %2096 = vmatpush2.bf16.msra.mxu0 %v1948
        %2097 = vmatprep.subr.bf16.mxu0 0
        %2098 = vmatpush2.bf16.msra.mxu0 %v1947
        %2099 = vmatprep.mubr.bf16.mxu0 %v1548
        %2100 = vmatmul.mubr.bf16.gmra.mxu0 %v1547
        %v2101 = vpop.f32.mrf.mxu0
        %v2102 = vadd.f32 0.0, %v2101
        %v2103 = vpop.f32.mrf.mxu0
        %v2104 = vpop.f32.mrf.mxu0
        %v2105 = vadd.f32 0.0, %v2104
        %v2106 = vpop.f32.mrf.mxu0
        %2107 = vdwg.mxu0
        %2108 = vmatprep.subr.bf16.mxu0 0
        %2109 = vmatpush1.bf16.msra.mxu0 %v1962
        %2110 = vmatprep.subr.bf16.mxu0 0
        %2111 = vmatpush1.bf16.msra.mxu0 %v1961
        %2112 = vmatprep.subr.bf16.mxu0 0
        %2113 = vmatpush1.bf16.msra.mxu0 %v1960
        %2114 = vmatprep.subr.bf16.mxu0 0
        %2115 = vmatpush1.bf16.msra.mxu0 %v1959
        %2116 = vmatprep.subr.bf16.mxu0 0
        %2117 = vmatpush1.bf16.msra.mxu0 %v1958
        %2118 = vmatprep.subr.bf16.mxu0 0
        %2119 = vmatpush1.bf16.msra.mxu0 %v1957
        %2120 = vmatprep.subr.bf16.mxu0 0
        %2121 = vmatpush1.bf16.msra.mxu0 %v1956
        %2122 = vmatprep.subr.bf16.mxu0 0
        %2123 = vmatpush1.bf16.msra.mxu0 %v1955
        %2124 = vmatprep.subr.bf16.mxu0 0
        %2125 = vmatpush2.bf16.msra.mxu0 %v1970
        %2126 = vmatprep.subr.bf16.mxu0 0
        %2127 = vmatpush2.bf16.msra.mxu0 %v1969
        %2128 = vmatprep.subr.bf16.mxu0 0
        %2129 = vmatpush2.bf16.msra.mxu0 %v1968
        %2130 = vmatprep.subr.bf16.mxu0 0
        %2131 = vmatpush2.bf16.msra.mxu0 %v1967
        %2132 = vmatprep.subr.bf16.mxu0 0
        %2133 = vmatpush2.bf16.msra.mxu0 %v1966
        %2134 = vmatprep.subr.bf16.mxu0 0
        %2135 = vmatpush2.bf16.msra.mxu0 %v1965
        %2136 = vmatprep.subr.bf16.mxu0 0
        %2137 = vmatpush2.bf16.msra.mxu0 %v1964
        %2138 = vmatprep.subr.bf16.mxu0 0
        %2139 = vmatpush2.bf16.msra.mxu0 %v1963
        %2140 = vmatprep.mubr.bf16.mxu0 %v1550
        %2141 = vmatmul.mubr.bf16.gmra.mxu0 %v1549
        %v2142 = vpop.f32.mrf.mxu0
        %v2143 = vadd.f32 %v2102, %v2142
        %v2144 = vpop.f32.mrf.mxu0
        %v2145 = vpop.f32.mrf.mxu0
        %v2146 = vadd.f32 %v2105, %v2145
        %v2147 = vpop.f32.mrf.mxu0
        %2148 = vdwg.mxu0
        %2149 = vmatprep.subr.bf16.mxu0 0
        %2150 = vmatpush1.bf16.msra.mxu0 %v1978
        %2151 = vmatprep.subr.bf16.mxu0 0
        %2152 = vmatpush1.bf16.msra.mxu0 %v1977
        %2153 = vmatprep.subr.bf16.mxu0 0
        %2154 = vmatpush1.bf16.msra.mxu0 %v1976
        %2155 = vmatprep.subr.bf16.mxu0 0
        %2156 = vmatpush1.bf16.msra.mxu0 %v1975
        %2157 = vmatprep.subr.bf16.mxu0 0
        %2158 = vmatpush1.bf16.msra.mxu0 %v1974
        %2159 = vmatprep.subr.bf16.mxu0 0
        %2160 = vmatpush1.bf16.msra.mxu0 %v1973
        %2161 = vmatprep.subr.bf16.mxu0 0
        %2162 = vmatpush1.bf16.msra.mxu0 %v1972
        %2163 = vmatprep.subr.bf16.mxu0 0
        %2164 = vmatpush1.bf16.msra.mxu0 %v1971
        %2165 = vmatprep.subr.bf16.mxu0 0
        %2166 = vmatpush2.bf16.msra.mxu0 %v1986
        %2167 = vmatprep.subr.bf16.mxu0 0
        %2168 = vmatpush2.bf16.msra.mxu0 %v1985
        %2169 = vmatprep.subr.bf16.mxu0 0
        %2170 = vmatpush2.bf16.msra.mxu0 %v1984
        %2171 = vmatprep.subr.bf16.mxu0 0
        %2172 = vmatpush2.bf16.msra.mxu0 %v1983
        %2173 = vmatprep.subr.bf16.mxu0 0
        %2174 = vmatpush2.bf16.msra.mxu0 %v1982
        %2175 = vmatprep.subr.bf16.mxu0 0
        %2176 = vmatpush2.bf16.msra.mxu0 %v1981
        %2177 = vmatprep.subr.bf16.mxu0 0
        %2178 = vmatpush2.bf16.msra.mxu0 %v1980
        %2179 = vmatprep.subr.bf16.mxu0 0
        %2180 = vmatpush2.bf16.msra.mxu0 %v1979
        %2181 = vmatprep.mubr.bf16.mxu0 %v1552
        %2182 = vmatmul.mubr.bf16.gmra.mxu0 %v1551
        %v2183 = vpop.f32.mrf.mxu0
        %v2184 = vadd.f32 %v2143, %v2183
        %v2185 = vpop.f32.mrf.mxu0
        %v2186 = vpop.f32.mrf.mxu0
        %v2187 = vadd.f32 %v2146, %v2186
        %v2188 = vpop.f32.mrf.mxu0
        %2189 = vdwg.mxu0
        %2190 = vmatprep.subr.bf16.mxu0 0
        %2191 = vmatpush1.bf16.msra.mxu0 %v1994
        %2192 = vmatprep.subr.bf16.mxu0 0
        %2193 = vmatpush1.bf16.msra.mxu0 %v1993
        %2194 = vmatprep.subr.bf16.mxu0 0
        %2195 = vmatpush1.bf16.msra.mxu0 %v1992
        %2196 = vmatprep.subr.bf16.mxu0 0
        %2197 = vmatpush1.bf16.msra.mxu0 %v1991
        %2198 = vmatprep.subr.bf16.mxu0 0
        %2199 = vmatpush1.bf16.msra.mxu0 %v1990
        %2200 = vmatprep.subr.bf16.mxu0 0
        %2201 = vmatpush1.bf16.msra.mxu0 %v1989
        %2202 = vmatprep.subr.bf16.mxu0 0
        %2203 = vmatpush1.bf16.msra.mxu0 %v1988
        %2204 = vmatprep.subr.bf16.mxu0 0
        %2205 = vmatpush1.bf16.msra.mxu0 %v1987
        %2206 = vmatprep.subr.bf16.mxu0 0
        %2207 = vmatpush2.bf16.msra.mxu0 %v2002
        %2208 = vmatprep.subr.bf16.mxu0 0
        %2209 = vmatpush2.bf16.msra.mxu0 %v2001
        %2210 = vmatprep.subr.bf16.mxu0 0
        %2211 = vmatpush2.bf16.msra.mxu0 %v2000
        %2212 = vmatprep.subr.bf16.mxu0 0
        %2213 = vmatpush2.bf16.msra.mxu0 %v1999
        %2214 = vmatprep.subr.bf16.mxu0 0
        %2215 = vmatpush2.bf16.msra.mxu0 %v1998
        %2216 = vmatprep.subr.bf16.mxu0 0
        %2217 = vmatpush2.bf16.msra.mxu0 %v1997
        %2218 = vmatprep.subr.bf16.mxu0 0
        %2219 = vmatpush2.bf16.msra.mxu0 %v1996
        %2220 = vmatprep.subr.bf16.mxu0 0
        %2221 = vmatpush2.bf16.msra.mxu0 %v1995
        %2222 = vmatprep.mubr.bf16.mxu0 %v1554
        %2223 = vmatmul.mubr.bf16.gmra.mxu0 %v1553
        %v2224 = vpop.f32.mrf.mxu0
        %v2225 = vadd.f32 %v2184, %v2224
        %v2226 = vpop.f32.mrf.mxu0
        %v2227 = vpop.f32.mrf.mxu0
        %v2228 = vadd.f32 %v2187, %v2227
        %v2229 = vpop.f32.mrf.mxu0
        %2230 = vdwg.mxu0
        %v2231 = vadd.f32 %v640, %v2225
        %v2232 = vadd.f32 %v643, %v2228
        %v2233 = vld [vmem:[%s441 + $0x4] sm:$0xf]
        %v2234 = vld [vmem:[%s441 + $0x14] sm:$0xf]
        %s2235 = scalar_lea.vmem %s391, 8 [#allocation2]
        %v2236 = vld [vmem:[%s2235] sm:$0xf]
        %v2237 = vld [vmem:[%s2235 + $0x4] sm:$0xf]
        %v2240 = vunpack.c.l.b16 %v2236
        %v2241 = vunpack.c.l.b16 %v2237
        %v2242 = vpack.c.b16 %v2241, %v2240
        %v2244 = vsel %vm816, %v2242, 0
        %2246 = vmatprep.subr.bf16.mxu0 0
        %2247 = vmatpush1.bf16.msra.mxu0 0
        %2248 = vmatprep.subr.bf16.mxu0 0
        %2249 = vmatpush1.bf16.msra.mxu0 0
        %2250 = vmatprep.subr.bf16.mxu0 0
        %2251 = vmatpush1.bf16.msra.mxu0 0
        %2252 = vmatprep.subr.bf16.mxu0 0
        %2253 = vmatpush1.bf16.msra.mxu0 0
        %2254 = vmatprep.subr.bf16.mxu0 0
        %2255 = vmatpush1.bf16.msra.mxu0 0
        %2256 = vmatprep.subr.bf16.mxu0 0
        %2257 = vmatpush1.bf16.msra.mxu0 0
        %2258 = vmatprep.subr.bf16.mxu0 %v793
        %2259 = vmatpush1.bf16.msra.mxu0 %v792
        %2260 = vmatprep.subr.bf16.mxu0 %v785
        %2261 = vmatpush1.bf16.msra.mxu0 %v784
        %2262 = vmatprep.subr.bf16.mxu0 0
        %2263 = vmatpush2.bf16.msra.mxu0 0
        %2264 = vmatprep.subr.bf16.mxu0 0
        %2265 = vmatpush2.bf16.msra.mxu0 0
        %2266 = vmatprep.subr.bf16.mxu0 0
        %2267 = vmatpush2.bf16.msra.mxu0 0
        %2268 = vmatprep.subr.bf16.mxu0 0
        %2269 = vmatpush2.bf16.msra.mxu0 0
        %2270 = vmatprep.subr.bf16.mxu0 0
        %2271 = vmatpush2.bf16.msra.mxu0 0
        %2272 = vmatprep.subr.bf16.mxu0 0
        %2273 = vmatpush2.bf16.msra.mxu0 0
        %2274 = vmatprep.subr.bf16.mxu0 0
        %2275 = vmatpush2.bf16.msra.mxu0 0
        %2276 = vmatprep.subr.bf16.mxu0 0
        %2277 = vmatpush2.bf16.msra.mxu0 0
        %2278 = vmatprep.mubr.bf16.mxu0 0
        %2279 = vmatmul.mubr.bf16.gmra.mxu0 %v2244
        %v2280 = vpop.f32.mrf.mxu0
        %v2281 = vadd.f32 0.0, %v2280
        %v2282 = vpop.f32.mrf.mxu0
        %v2283 = vadd.f32 0.0, %v2282
        %v2284 = vpop.f32.mrf.mxu0
        %v2285 = vadd.f32 0.0, %v2284
        %v2286 = vpop.f32.mrf.mxu0
        %v2287 = vadd.f32 0.0, %v2286
        %2288 = vdwg.mxu0
        %2289 = vmatprep.subr.bf16.mxu0 0
        %2290 = vmatpush1.bf16.msra.mxu0 0
        %2291 = vmatprep.subr.bf16.mxu0 0
        %2292 = vmatpush1.bf16.msra.mxu0 0
        %2293 = vmatprep.subr.bf16.mxu0 0
        %2294 = vmatpush1.bf16.msra.mxu0 0
        %2295 = vmatprep.subr.bf16.mxu0 0
        %2296 = vmatpush1.bf16.msra.mxu0 0
        %2297 = vmatprep.subr.bf16.mxu0 0
        %2298 = vmatpush1.bf16.msra.mxu0 0
        %2299 = vmatprep.subr.bf16.mxu0 0
        %2300 = vmatpush1.bf16.msra.mxu0 0
        %2301 = vmatprep.subr.bf16.mxu0 %v795
        %2302 = vmatpush1.bf16.msra.mxu0 %v794
        %2303 = vmatprep.subr.bf16.mxu0 %v787
        %2304 = vmatpush1.bf16.msra.mxu0 %v786
        %2305 = vmatprep.subr.bf16.mxu0 0
        %2306 = vmatpush2.bf16.msra.mxu0 0
        %2307 = vmatprep.subr.bf16.mxu0 0
        %2308 = vmatpush2.bf16.msra.mxu0 0
        %2309 = vmatprep.subr.bf16.mxu0 0
        %2310 = vmatpush2.bf16.msra.mxu0 0
        %2311 = vmatprep.subr.bf16.mxu0 0
        %2312 = vmatpush2.bf16.msra.mxu0 0
        %2313 = vmatprep.subr.bf16.mxu0 0
        %2314 = vmatpush2.bf16.msra.mxu0 0
        %2315 = vmatprep.subr.bf16.mxu0 0
        %2316 = vmatpush2.bf16.msra.mxu0 0
        %2317 = vmatprep.subr.bf16.mxu0 0
        %2318 = vmatpush2.bf16.msra.mxu0 0
        %2319 = vmatprep.subr.bf16.mxu0 0
        %2320 = vmatpush2.bf16.msra.mxu0 0
        %2321 = vmatprep.mubr.bf16.mxu0 0
        %2322 = vmatmul.mubr.bf16.gmra.mxu0 %v2244
        %v2323 = vpop.f32.mrf.mxu0
        %v2324 = vadd.f32 0.0, %v2323
        %v2325 = vpop.f32.mrf.mxu0
        %v2326 = vadd.f32 0.0, %v2325
        %v2327 = vpop.f32.mrf.mxu0
        %v2328 = vadd.f32 0.0, %v2327
        %v2329 = vpop.f32.mrf.mxu0
        %v2330 = vadd.f32 0.0, %v2329
        %2331 = vdwg.mxu0
        %2332 = vmatprep.subr.bf16.mxu0 0
        %2333 = vmatpush1.bf16.msra.mxu0 0
        %2334 = vmatprep.subr.bf16.mxu0 0
        %2335 = vmatpush1.bf16.msra.mxu0 0
        %2336 = vmatprep.subr.bf16.mxu0 0
        %2337 = vmatpush1.bf16.msra.mxu0 0
        %2338 = vmatprep.subr.bf16.mxu0 0
        %2339 = vmatpush1.bf16.msra.mxu0 0
        %2340 = vmatprep.subr.bf16.mxu0 0
        %2341 = vmatpush1.bf16.msra.mxu0 0
        %2342 = vmatprep.subr.bf16.mxu0 0
        %2343 = vmatpush1.bf16.msra.mxu0 0
        %2344 = vmatprep.subr.bf16.mxu0 %v797
        %2345 = vmatpush1.bf16.msra.mxu0 %v796
        %2346 = vmatprep.subr.bf16.mxu0 %v789
        %2347 = vmatpush1.bf16.msra.mxu0 %v788
        %2348 = vmatprep.subr.bf16.mxu0 0
        %2349 = vmatpush2.bf16.msra.mxu0 0
        %2350 = vmatprep.subr.bf16.mxu0 0
        %2351 = vmatpush2.bf16.msra.mxu0 0
        %2352 = vmatprep.subr.bf16.mxu0 0
        %2353 = vmatpush2.bf16.msra.mxu0 0
        %2354 = vmatprep.subr.bf16.mxu0 0
        %2355 = vmatpush2.bf16.msra.mxu0 0
        %2356 = vmatprep.subr.bf16.mxu0 0
        %2357 = vmatpush2.bf16.msra.mxu0 0
        %2358 = vmatprep.subr.bf16.mxu0 0
        %2359 = vmatpush2.bf16.msra.mxu0 0
        %2360 = vmatprep.subr.bf16.mxu0 0
        %2361 = vmatpush2.bf16.msra.mxu0 0
        %2362 = vmatprep.subr.bf16.mxu0 0
        %2363 = vmatpush2.bf16.msra.mxu0 0
        %2364 = vmatprep.mubr.bf16.mxu0 0
        %2365 = vmatmul.mubr.bf16.gmra.mxu0 %v2244
        %v2366 = vpop.f32.mrf.mxu0
        %v2367 = vadd.f32 0.0, %v2366
        %v2368 = vpop.f32.mrf.mxu0
        %v2369 = vadd.f32 0.0, %v2368
        %v2370 = vpop.f32.mrf.mxu0
        %v2371 = vadd.f32 0.0, %v2370
        %v2372 = vpop.f32.mrf.mxu0
        %v2373 = vadd.f32 0.0, %v2372
        %2374 = vdwg.mxu0
        %2375 = vmatprep.subr.bf16.mxu0 0
        %2376 = vmatpush1.bf16.msra.mxu0 0
        %2377 = vmatprep.subr.bf16.mxu0 0
        %2378 = vmatpush1.bf16.msra.mxu0 0
        %2379 = vmatprep.subr.bf16.mxu0 0
        %2380 = vmatpush1.bf16.msra.mxu0 0
        %2381 = vmatprep.subr.bf16.mxu0 0
        %2382 = vmatpush1.bf16.msra.mxu0 0
        %2383 = vmatprep.subr.bf16.mxu0 0
        %2384 = vmatpush1.bf16.msra.mxu0 0
        %2385 = vmatprep.subr.bf16.mxu0 0
        %2386 = vmatpush1.bf16.msra.mxu0 0
        %2387 = vmatprep.subr.bf16.mxu0 %v799
        %2388 = vmatpush1.bf16.msra.mxu0 %v798
        %2389 = vmatprep.subr.bf16.mxu0 %v791
        %2390 = vmatpush1.bf16.msra.mxu0 %v790
        %2391 = vmatprep.subr.bf16.mxu0 0
        %2392 = vmatpush2.bf16.msra.mxu0 0
        %2393 = vmatprep.subr.bf16.mxu0 0
        %2394 = vmatpush2.bf16.msra.mxu0 0
        %2395 = vmatprep.subr.bf16.mxu0 0
        %2396 = vmatpush2.bf16.msra.mxu0 0
        %2397 = vmatprep.subr.bf16.mxu0 0
        %2398 = vmatpush2.bf16.msra.mxu0 0
        %2399 = vmatprep.subr.bf16.mxu0 0
        %2400 = vmatpush2.bf16.msra.mxu0 0
        %2401 = vmatprep.subr.bf16.mxu0 0
        %2402 = vmatpush2.bf16.msra.mxu0 0
        %2403 = vmatprep.subr.bf16.mxu0 0
        %2404 = vmatpush2.bf16.msra.mxu0 0
        %2405 = vmatprep.subr.bf16.mxu0 0
        %2406 = vmatpush2.bf16.msra.mxu0 0
        %2407 = vmatprep.mubr.bf16.mxu0 0
        %2408 = vmatmul.mubr.bf16.gmra.mxu0 %v2244
        %v2409 = vpop.f32.mrf.mxu0
        %v2410 = vadd.f32 0.0, %v2409
        %v2411 = vpop.f32.mrf.mxu0
        %v2412 = vadd.f32 0.0, %v2411
        %v2413 = vpop.f32.mrf.mxu0
        %v2414 = vadd.f32 0.0, %v2413
        %v2415 = vpop.f32.mrf.mxu0
        %v2416 = vadd.f32 0.0, %v2415
        %2417 = vdwg.mxu0
        %v2420 = vunpack.c.l.b16 %v2233
        %v2421 = vunpack.c.l.b16 %v2234
        %v2422 = vpack.c.b16 %v2421, %v2420
        %2424 = vmatprep.subr.bf16.mxu0 %v1247
        %2425 = vmatpush1.bf16.msra.mxu0 %v1246
        %2426 = vmatprep.subr.bf16.mxu0 %v1239
        %2427 = vmatpush1.bf16.msra.mxu0 %v1238
        %2428 = vmatprep.subr.bf16.mxu0 %v1231
        %2429 = vmatpush1.bf16.msra.mxu0 %v1230
        %2430 = vmatprep.subr.bf16.mxu0 %v1223
        %2431 = vmatpush1.bf16.msra.mxu0 %v1222
        %2432 = vmatprep.subr.bf16.mxu0 %v1215
        %2433 = vmatpush1.bf16.msra.mxu0 %v1214
        %2434 = vmatprep.subr.bf16.mxu0 %v1207
        %2435 = vmatpush1.bf16.msra.mxu0 %v1206
        %2436 = vmatprep.subr.bf16.mxu0 %v1199
        %2437 = vmatpush1.bf16.msra.mxu0 %v1198
        %2438 = vmatprep.subr.bf16.mxu0 %v1191
        %2439 = vmatpush1.bf16.msra.mxu0 %v1190
        %2440 = vmatprep.subr.bf16.mxu0 0
        %2441 = vmatpush2.bf16.msra.mxu0 0
        %2442 = vmatprep.subr.bf16.mxu0 0
        %2443 = vmatpush2.bf16.msra.mxu0 0
        %2444 = vmatprep.subr.bf16.mxu0 0
        %2445 = vmatpush2.bf16.msra.mxu0 0
        %2446 = vmatprep.subr.bf16.mxu0 0
        %2447 = vmatpush2.bf16.msra.mxu0 0
        %2448 = vmatprep.subr.bf16.mxu0 0
        %2449 = vmatpush2.bf16.msra.mxu0 0
        %2450 = vmatprep.subr.bf16.mxu0 0
        %2451 = vmatpush2.bf16.msra.mxu0 0
        %2452 = vmatprep.subr.bf16.mxu0 0
        %2453 = vmatpush2.bf16.msra.mxu0 0
        %2454 = vmatprep.subr.bf16.mxu0 0
        %2455 = vmatpush2.bf16.msra.mxu0 0
        %2456 = vmatprep.mubr.bf16.mxu0 0
        %2457 = vmatmul.mubr.bf16.gmra.mxu0 %v2422
        %v2458 = vpop.f32.mrf.mxu0
        %v2459 = vadd.f32 %v2281, %v2458
        %v2460 = vpop.f32.mrf.mxu0
        %v2461 = vadd.f32 %v2283, %v2460
        %v2462 = vpop.f32.mrf.mxu0
        %v2463 = vadd.f32 %v2285, %v2462
        %v2464 = vpop.f32.mrf.mxu0
        %v2465 = vadd.f32 %v2287, %v2464
        %2466 = vdwg.mxu0
        %2467 = vmatprep.subr.bf16.mxu0 %v1249
        %2468 = vmatpush1.bf16.msra.mxu0 %v1248
        %2469 = vmatprep.subr.bf16.mxu0 %v1241
        %2470 = vmatpush1.bf16.msra.mxu0 %v1240
        %2471 = vmatprep.subr.bf16.mxu0 %v1233
        %2472 = vmatpush1.bf16.msra.mxu0 %v1232
        %2473 = vmatprep.subr.bf16.mxu0 %v1225
        %2474 = vmatpush1.bf16.msra.mxu0 %v1224
        %2475 = vmatprep.subr.bf16.mxu0 %v1217
        %2476 = vmatpush1.bf16.msra.mxu0 %v1216
        %2477 = vmatprep.subr.bf16.mxu0 %v1209
        %2478 = vmatpush1.bf16.msra.mxu0 %v1208
        %2479 = vmatprep.subr.bf16.mxu0 %v1201
        %2480 = vmatpush1.bf16.msra.mxu0 %v1200
        %2481 = vmatprep.subr.bf16.mxu0 %v1193
        %2482 = vmatpush1.bf16.msra.mxu0 %v1192
        %2483 = vmatprep.subr.bf16.mxu0 0
        %2484 = vmatpush2.bf16.msra.mxu0 0
        %2485 = vmatprep.subr.bf16.mxu0 0
        %2486 = vmatpush2.bf16.msra.mxu0 0
        %2487 = vmatprep.subr.bf16.mxu0 0
        %2488 = vmatpush2.bf16.msra.mxu0 0
        %2489 = vmatprep.subr.bf16.mxu0 0
        %2490 = vmatpush2.bf16.msra.mxu0 0
        %2491 = vmatprep.subr.bf16.mxu0 0
        %2492 = vmatpush2.bf16.msra.mxu0 0
        %2493 = vmatprep.subr.bf16.mxu0 0
        %2494 = vmatpush2.bf16.msra.mxu0 0
        %2495 = vmatprep.subr.bf16.mxu0 0
        %2496 = vmatpush2.bf16.msra.mxu0 0
        %2497 = vmatprep.subr.bf16.mxu0 0
        %2498 = vmatpush2.bf16.msra.mxu0 0
        %2499 = vmatprep.mubr.bf16.mxu0 0
        %2500 = vmatmul.mubr.bf16.gmra.mxu0 %v2422
        %v2501 = vpop.f32.mrf.mxu0
        %v2502 = vadd.f32 %v2324, %v2501
        %v2503 = vpop.f32.mrf.mxu0
        %v2504 = vadd.f32 %v2326, %v2503
        %v2505 = vpop.f32.mrf.mxu0
        %v2506 = vadd.f32 %v2328, %v2505
        %v2507 = vpop.f32.mrf.mxu0
        %v2508 = vadd.f32 %v2330, %v2507
        %2509 = vdwg.mxu0
        %2510 = vmatprep.subr.bf16.mxu0 %v1251
        %2511 = vmatpush1.bf16.msra.mxu0 %v1250
        %2512 = vmatprep.subr.bf16.mxu0 %v1243
        %2513 = vmatpush1.bf16.msra.mxu0 %v1242
        %2514 = vmatprep.subr.bf16.mxu0 %v1235
        %2515 = vmatpush1.bf16.msra.mxu0 %v1234
        %2516 = vmatprep.subr.bf16.mxu0 %v1227
        %2517 = vmatpush1.bf16.msra.mxu0 %v1226
        %2518 = vmatprep.subr.bf16.mxu0 %v1219
        %2519 = vmatpush1.bf16.msra.mxu0 %v1218
        %2520 = vmatprep.subr.bf16.mxu0 %v1211
        %2521 = vmatpush1.bf16.msra.mxu0 %v1210
        %2522 = vmatprep.subr.bf16.mxu0 %v1203
        %2523 = vmatpush1.bf16.msra.mxu0 %v1202
        %2524 = vmatprep.subr.bf16.mxu0 %v1195
        %2525 = vmatpush1.bf16.msra.mxu0 %v1194
        %2526 = vmatprep.subr.bf16.mxu0 0
        %2527 = vmatpush2.bf16.msra.mxu0 0
        %2528 = vmatprep.subr.bf16.mxu0 0
        %2529 = vmatpush2.bf16.msra.mxu0 0
        %2530 = vmatprep.subr.bf16.mxu0 0
        %2531 = vmatpush2.bf16.msra.mxu0 0
        %2532 = vmatprep.subr.bf16.mxu0 0
        %2533 = vmatpush2.bf16.msra.mxu0 0
        %2534 = vmatprep.subr.bf16.mxu0 0
        %2535 = vmatpush2.bf16.msra.mxu0 0
        %2536 = vmatprep.subr.bf16.mxu0 0
        %2537 = vmatpush2.bf16.msra.mxu0 0
        %2538 = vmatprep.subr.bf16.mxu0 0
        %2539 = vmatpush2.bf16.msra.mxu0 0
        %2540 = vmatprep.subr.bf16.mxu0 0
        %2541 = vmatpush2.bf16.msra.mxu0 0
        %2542 = vmatprep.mubr.bf16.mxu0 0
        %2543 = vmatmul.mubr.bf16.gmra.mxu0 %v2422
        %v2544 = vpop.f32.mrf.mxu0
        %v2545 = vadd.f32 %v2367, %v2544
        %v2546 = vpop.f32.mrf.mxu0
        %v2547 = vadd.f32 %v2369, %v2546
        %v2548 = vpop.f32.mrf.mxu0
        %v2549 = vadd.f32 %v2371, %v2548
        %v2550 = vpop.f32.mrf.mxu0
        %v2551 = vadd.f32 %v2373, %v2550
        %2552 = vdwg.mxu0
        %2553 = vmatprep.subr.bf16.mxu0 %v1253
        %2554 = vmatpush1.bf16.msra.mxu0 %v1252
        %2555 = vmatprep.subr.bf16.mxu0 %v1245
        %2556 = vmatpush1.bf16.msra.mxu0 %v1244
        %2557 = vmatprep.subr.bf16.mxu0 %v1237
        %2558 = vmatpush1.bf16.msra.mxu0 %v1236
        %2559 = vmatprep.subr.bf16.mxu0 %v1229
        %2560 = vmatpush1.bf16.msra.mxu0 %v1228
        %2561 = vmatprep.subr.bf16.mxu0 %v1221
        %2562 = vmatpush1.bf16.msra.mxu0 %v1220
        %2563 = vmatprep.subr.bf16.mxu0 %v1213
        %2564 = vmatpush1.bf16.msra.mxu0 %v1212
        %2565 = vmatprep.subr.bf16.mxu0 %v1205
        %2566 = vmatpush1.bf16.msra.mxu0 %v1204
        %2567 = vmatprep.subr.bf16.mxu0 %v1197
        %2568 = vmatpush1.bf16.msra.mxu0 %v1196
        %2569 = vmatprep.subr.bf16.mxu0 0
        %2570 = vmatpush2.bf16.msra.mxu0 0
        %2571 = vmatprep.subr.bf16.mxu0 0
        %2572 = vmatpush2.bf16.msra.mxu0 0
        %2573 = vmatprep.subr.bf16.mxu0 0
        %2574 = vmatpush2.bf16.msra.mxu0 0
        %2575 = vmatprep.subr.bf16.mxu0 0
        %2576 = vmatpush2.bf16.msra.mxu0 0
        %2577 = vmatprep.subr.bf16.mxu0 0
        %2578 = vmatpush2.bf16.msra.mxu0 0
        %2579 = vmatprep.subr.bf16.mxu0 0
        %2580 = vmatpush2.bf16.msra.mxu0 0
        %2581 = vmatprep.subr.bf16.mxu0 0
        %2582 = vmatpush2.bf16.msra.mxu0 0
        %2583 = vmatprep.subr.bf16.mxu0 0
        %2584 = vmatpush2.bf16.msra.mxu0 0
        %2585 = vmatprep.mubr.bf16.mxu0 0
        %2586 = vmatmul.mubr.bf16.gmra.mxu0 %v2422
        %v2587 = vpop.f32.mrf.mxu0
        %v2588 = vadd.f32 %v2410, %v2587
        %v2589 = vpop.f32.mrf.mxu0
        %v2590 = vadd.f32 %v2412, %v2589
        %v2591 = vpop.f32.mrf.mxu0
        %v2592 = vadd.f32 %v2414, %v2591
        %v2593 = vpop.f32.mrf.mxu0
        %v2594 = vadd.f32 %v2416, %v2593
        %2595 = vdwg.mxu0
        %v2596 = vadd.f32 %v2459, %v1494
        %v2597 = vadd.f32 %v2461, %v1498
        %v2598 = vadd.f32 %v2502, %v1502
        %v2599 = vadd.f32 %v2504, %v1506
        %v2600 = vadd.f32 %v2545, %v1510
        %v2601 = vadd.f32 %v2547, %v1514
        %v2602 = vadd.f32 %v2588, %v1518
        %v2603 = vadd.f32 %v2590, %v1522
        %v2604 = vadd.f32 %v2463, %v1494
        %v2605 = vadd.f32 %v2465, %v1498
        %v2606 = vadd.f32 %v2506, %v1502
        %v2607 = vadd.f32 %v2508, %v1506
        %v2608 = vadd.f32 %v2549, %v1510
        %v2609 = vadd.f32 %v2551, %v1514
        %v2610 = vadd.f32 %v2592, %v1518
        %v2611 = vadd.f32 %v2594, %v1522
        %v2612 = vpack.c.bf16 %v2604, %v2596
        %v2613 = vpack.c.bf16 %v2605, %v2597
        %v2614 = vpack.c.bf16 %v2606, %v2598
        %v2615 = vpack.c.bf16 %v2607, %v2599
        %v2616 = vpack.c.bf16 %v2608, %v2600
        %v2617 = vpack.c.bf16 %v2609, %v2601
        %v2618 = vpack.c.bf16 %v2610, %v2602
        %v2619 = vpack.c.bf16 %v2611, %v2603
        %v2620 = vld [vmem:[%s6 + $0x200] sm:$0xf]
        %v2621 = vld [vmem:[%s6 + $0x204] sm:$0xf]
        %v2622 = vld [vmem:[%s6 + $0x208] sm:$0xf]
        %v2623 = vld [vmem:[%s6 + $0x20c] sm:$0xf]
        %v2624 = vld [vmem:[%s6 + $0x210] sm:$0xf]
        %v2625 = vld [vmem:[%s6 + $0x214] sm:$0xf]
        %v2626 = vld [vmem:[%s6 + $0x218] sm:$0xf]
        %v2627 = vld [vmem:[%s6 + $0x21c] sm:$0xf]
        %v2628 = vld [vmem:[%s6 + $0x220] sm:$0xf]
        %v2629 = vld [vmem:[%s6 + $0x224] sm:$0xf]
        %v2630 = vld [vmem:[%s6 + $0x228] sm:$0xf]
        %v2631 = vld [vmem:[%s6 + $0x22c] sm:$0xf]
        %v2632 = vld [vmem:[%s6 + $0x230] sm:$0xf]
        %v2633 = vld [vmem:[%s6 + $0x234] sm:$0xf]
        %v2634 = vld [vmem:[%s6 + $0x238] sm:$0xf]
        %v2635 = vld [vmem:[%s6 + $0x23c] sm:$0xf]
        %v2636 = vld [vmem:[%s6 + $0x240] sm:$0xf]
        %v2637 = vld [vmem:[%s6 + $0x244] sm:$0xf]
        %v2638 = vld [vmem:[%s6 + $0x248] sm:$0xf]
        %v2639 = vld [vmem:[%s6 + $0x24c] sm:$0xf]
        %v2640 = vld [vmem:[%s6 + $0x250] sm:$0xf]
        %v2641 = vld [vmem:[%s6 + $0x254] sm:$0xf]
        %v2642 = vld [vmem:[%s6 + $0x258] sm:$0xf]
        %v2643 = vld [vmem:[%s6 + $0x25c] sm:$0xf]
        %v2644 = vld [vmem:[%s6 + $0x260] sm:$0xf]
        %v2645 = vld [vmem:[%s6 + $0x264] sm:$0xf]
        %v2646 = vld [vmem:[%s6 + $0x268] sm:$0xf]
        %v2647 = vld [vmem:[%s6 + $0x26c] sm:$0xf]
        %v2648 = vld [vmem:[%s6 + $0x270] sm:$0xf]
        %v2649 = vld [vmem:[%s6 + $0x274] sm:$0xf]
        %v2650 = vld [vmem:[%s6 + $0x278] sm:$0xf]
        %v2651 = vld [vmem:[%s6 + $0x27c] sm:$0xf]
        %v2652 = vld [vmem:[%s6 + $0x280] sm:$0xf]
        %v2653 = vld [vmem:[%s6 + $0x284] sm:$0xf]
        %v2654 = vld [vmem:[%s6 + $0x288] sm:$0xf]
        %v2655 = vld [vmem:[%s6 + $0x28c] sm:$0xf]
        %v2656 = vld [vmem:[%s6 + $0x290] sm:$0xf]
        %v2657 = vld [vmem:[%s6 + $0x294] sm:$0xf]
        %v2658 = vld [vmem:[%s6 + $0x298] sm:$0xf]
        %v2659 = vld [vmem:[%s6 + $0x29c] sm:$0xf]
        %v2660 = vld [vmem:[%s6 + $0x2a0] sm:$0xf]
        %v2661 = vld [vmem:[%s6 + $0x2a4] sm:$0xf]
        %v2662 = vld [vmem:[%s6 + $0x2a8] sm:$0xf]
        %v2663 = vld [vmem:[%s6 + $0x2ac] sm:$0xf]
        %v2664 = vld [vmem:[%s6 + $0x2b0] sm:$0xf]
        %v2665 = vld [vmem:[%s6 + $0x2b4] sm:$0xf]
        %v2666 = vld [vmem:[%s6 + $0x2b8] sm:$0xf]
        %v2667 = vld [vmem:[%s6 + $0x2bc] sm:$0xf]
        %v2668 = vld [vmem:[%s6 + $0x2c0] sm:$0xf]
        %v2669 = vld [vmem:[%s6 + $0x2c4] sm:$0xf]
        %v2670 = vld [vmem:[%s6 + $0x2c8] sm:$0xf]
        %v2671 = vld [vmem:[%s6 + $0x2cc] sm:$0xf]
        %v2672 = vld [vmem:[%s6 + $0x2d0] sm:$0xf]
        %v2673 = vld [vmem:[%s6 + $0x2d4] sm:$0xf]
        %v2674 = vld [vmem:[%s6 + $0x2d8] sm:$0xf]
        %v2675 = vld [vmem:[%s6 + $0x2dc] sm:$0xf]
        %v2676 = vld [vmem:[%s6 + $0x2e0] sm:$0xf]
        %v2677 = vld [vmem:[%s6 + $0x2e4] sm:$0xf]
        %v2678 = vld [vmem:[%s6 + $0x2e8] sm:$0xf]
        %v2679 = vld [vmem:[%s6 + $0x2ec] sm:$0xf]
        %v2680 = vld [vmem:[%s6 + $0x2f0] sm:$0xf]
        %v2681 = vld [vmem:[%s6 + $0x2f4] sm:$0xf]
        %v2682 = vld [vmem:[%s6 + $0x2f8] sm:$0xf]
        %v2683 = vld [vmem:[%s6 + $0x2fc] sm:$0xf]
        %v2684 = vld [vmem:[%s6 + $0x300] sm:$0xf]
        %v2685 = vld [vmem:[%s6 + $0x304] sm:$0xf]
        %v2686 = vld [vmem:[%s6 + $0x308] sm:$0xf]
        %v2687 = vld [vmem:[%s6 + $0x30c] sm:$0xf]
        %v2688 = vld [vmem:[%s6 + $0x310] sm:$0xf]
        %v2689 = vld [vmem:[%s6 + $0x314] sm:$0xf]
        %v2690 = vld [vmem:[%s6 + $0x318] sm:$0xf]
        %v2691 = vld [vmem:[%s6 + $0x31c] sm:$0xf]
        %v2692 = vld [vmem:[%s6 + $0x320] sm:$0xf]
        %v2693 = vld [vmem:[%s6 + $0x324] sm:$0xf]
        %v2694 = vld [vmem:[%s6 + $0x328] sm:$0xf]
        %v2695 = vld [vmem:[%s6 + $0x32c] sm:$0xf]
        %v2696 = vld [vmem:[%s6 + $0x330] sm:$0xf]
        %v2697 = vld [vmem:[%s6 + $0x334] sm:$0xf]
        %v2698 = vld [vmem:[%s6 + $0x338] sm:$0xf]
        %v2699 = vld [vmem:[%s6 + $0x33c] sm:$0xf]
        %v2700 = vld [vmem:[%s6 + $0x340] sm:$0xf]
        %v2701 = vld [vmem:[%s6 + $0x344] sm:$0xf]
        %v2702 = vld [vmem:[%s6 + $0x348] sm:$0xf]
        %v2703 = vld [vmem:[%s6 + $0x34c] sm:$0xf]
        %v2704 = vld [vmem:[%s6 + $0x350] sm:$0xf]
        %v2705 = vld [vmem:[%s6 + $0x354] sm:$0xf]
        %v2706 = vld [vmem:[%s6 + $0x358] sm:$0xf]
        %v2707 = vld [vmem:[%s6 + $0x35c] sm:$0xf]
        %v2708 = vld [vmem:[%s6 + $0x360] sm:$0xf]
        %v2709 = vld [vmem:[%s6 + $0x364] sm:$0xf]
        %v2710 = vld [vmem:[%s6 + $0x368] sm:$0xf]
        %v2711 = vld [vmem:[%s6 + $0x36c] sm:$0xf]
        %v2712 = vld [vmem:[%s6 + $0x370] sm:$0xf]
        %v2713 = vld [vmem:[%s6 + $0x374] sm:$0xf]
        %v2714 = vld [vmem:[%s6 + $0x378] sm:$0xf]
        %v2715 = vld [vmem:[%s6 + $0x37c] sm:$0xf]
        %v2716 = vld [vmem:[%s6 + $0x380] sm:$0xf]
        %v2717 = vld [vmem:[%s6 + $0x384] sm:$0xf]
        %v2718 = vld [vmem:[%s6 + $0x388] sm:$0xf]
        %v2719 = vld [vmem:[%s6 + $0x38c] sm:$0xf]
        %v2720 = vld [vmem:[%s6 + $0x390] sm:$0xf]
        %v2721 = vld [vmem:[%s6 + $0x394] sm:$0xf]
        %v2722 = vld [vmem:[%s6 + $0x398] sm:$0xf]
        %v2723 = vld [vmem:[%s6 + $0x39c] sm:$0xf]
        %v2724 = vld [vmem:[%s6 + $0x3a0] sm:$0xf]
        %v2725 = vld [vmem:[%s6 + $0x3a4] sm:$0xf]
        %v2726 = vld [vmem:[%s6 + $0x3a8] sm:$0xf]
        %v2727 = vld [vmem:[%s6 + $0x3ac] sm:$0xf]
        %v2728 = vld [vmem:[%s6 + $0x3b0] sm:$0xf]
        %v2729 = vld [vmem:[%s6 + $0x3b4] sm:$0xf]
        %v2730 = vld [vmem:[%s6 + $0x3b8] sm:$0xf]
        %v2731 = vld [vmem:[%s6 + $0x3bc] sm:$0xf]
        %v2732 = vld [vmem:[%s6 + $0x3c0] sm:$0xf]
        %v2733 = vld [vmem:[%s6 + $0x3c4] sm:$0xf]
        %v2734 = vld [vmem:[%s6 + $0x3c8] sm:$0xf]
        %v2735 = vld [vmem:[%s6 + $0x3cc] sm:$0xf]
        %v2736 = vld [vmem:[%s6 + $0x3d0] sm:$0xf]
        %v2737 = vld [vmem:[%s6 + $0x3d4] sm:$0xf]
        %v2738 = vld [vmem:[%s6 + $0x3d8] sm:$0xf]
        %v2739 = vld [vmem:[%s6 + $0x3dc] sm:$0xf]
        %v2740 = vld [vmem:[%s6 + $0x3e0] sm:$0xf]
        %v2741 = vld [vmem:[%s6 + $0x3e4] sm:$0xf]
        %v2742 = vld [vmem:[%s6 + $0x3e8] sm:$0xf]
        %v2743 = vld [vmem:[%s6 + $0x3ec] sm:$0xf]
        %v2744 = vld [vmem:[%s6 + $0x3f0] sm:$0xf]
        %v2745 = vld [vmem:[%s6 + $0x3f4] sm:$0xf]
        %v2746 = vld [vmem:[%s6 + $0x3f8] sm:$0xf]
        %v2747 = vld [vmem:[%s6 + $0x3fc] sm:$0xf]
        %v2876 = vunpack.c.l.b16 %v2620
        %v2877 = vunpack.c.l.b16 %v2621
        %v2878 = vunpack.c.l.b16 %v2622
        %v2879 = vunpack.c.l.b16 %v2623
        %v2880 = vunpack.c.l.b16 %v2624
        %v2881 = vunpack.c.l.b16 %v2625
        %v2882 = vunpack.c.l.b16 %v2626
        %v2883 = vunpack.c.l.b16 %v2627
        %v2884 = vunpack.c.l.b16 %v2628
        %v2885 = vunpack.c.l.b16 %v2629
        %v2886 = vunpack.c.l.b16 %v2630
        %v2887 = vunpack.c.l.b16 %v2631
        %v2888 = vunpack.c.l.b16 %v2632
        %v2889 = vunpack.c.l.b16 %v2633
        %v2890 = vunpack.c.l.b16 %v2634
        %v2891 = vunpack.c.l.b16 %v2635
        %v2892 = vunpack.c.l.b16 %v2636
        %v2893 = vunpack.c.l.b16 %v2637
        %v2894 = vunpack.c.l.b16 %v2638
        %v2895 = vunpack.c.l.b16 %v2639
        %v2896 = vunpack.c.l.b16 %v2640
        %v2897 = vunpack.c.l.b16 %v2641
        %v2898 = vunpack.c.l.b16 %v2642
        %v2899 = vunpack.c.l.b16 %v2643
        %v2900 = vunpack.c.l.b16 %v2644
        %v2901 = vunpack.c.l.b16 %v2645
        %v2902 = vunpack.c.l.b16 %v2646
        %v2903 = vunpack.c.l.b16 %v2647
        %v2904 = vunpack.c.l.b16 %v2648
        %v2905 = vunpack.c.l.b16 %v2649
        %v2906 = vunpack.c.l.b16 %v2650
        %v2907 = vunpack.c.l.b16 %v2651
        %v2908 = vunpack.c.l.b16 %v2652
        %v2909 = vunpack.c.l.b16 %v2653
        %v2910 = vunpack.c.l.b16 %v2654
        %v2911 = vunpack.c.l.b16 %v2655
        %v2912 = vunpack.c.l.b16 %v2656
        %v2913 = vunpack.c.l.b16 %v2657
        %v2914 = vunpack.c.l.b16 %v2658
        %v2915 = vunpack.c.l.b16 %v2659
        %v2916 = vunpack.c.l.b16 %v2660
        %v2917 = vunpack.c.l.b16 %v2661
        %v2918 = vunpack.c.l.b16 %v2662
        %v2919 = vunpack.c.l.b16 %v2663
        %v2920 = vunpack.c.l.b16 %v2664
        %v2921 = vunpack.c.l.b16 %v2665
        %v2922 = vunpack.c.l.b16 %v2666
        %v2923 = vunpack.c.l.b16 %v2667
        %v2924 = vunpack.c.l.b16 %v2668
        %v2925 = vunpack.c.l.b16 %v2669
        %v2926 = vunpack.c.l.b16 %v2670
        %v2927 = vunpack.c.l.b16 %v2671
        %v2928 = vunpack.c.l.b16 %v2672
        %v2929 = vunpack.c.l.b16 %v2673
        %v2930 = vunpack.c.l.b16 %v2674
        %v2931 = vunpack.c.l.b16 %v2675
        %v2932 = vunpack.c.l.b16 %v2676
        %v2933 = vunpack.c.l.b16 %v2677
        %v2934 = vunpack.c.l.b16 %v2678
        %v2935 = vunpack.c.l.b16 %v2679
        %v2936 = vunpack.c.l.b16 %v2680
        %v2937 = vunpack.c.l.b16 %v2681
        %v2938 = vunpack.c.l.b16 %v2682
        %v2939 = vunpack.c.l.b16 %v2683
        %v2940 = vunpack.c.l.b16 %v2684
        %v2941 = vunpack.c.l.b16 %v2685
        %v2942 = vunpack.c.l.b16 %v2686
        %v2943 = vunpack.c.l.b16 %v2687
        %v2944 = vunpack.c.l.b16 %v2688
        %v2945 = vunpack.c.l.b16 %v2689
        %v2946 = vunpack.c.l.b16 %v2690
        %v2947 = vunpack.c.l.b16 %v2691
        %v2948 = vunpack.c.l.b16 %v2692
        %v2949 = vunpack.c.l.b16 %v2693
        %v2950 = vunpack.c.l.b16 %v2694
        %v2951 = vunpack.c.l.b16 %v2695
        %v2952 = vunpack.c.l.b16 %v2696
        %v2953 = vunpack.c.l.b16 %v2697
        %v2954 = vunpack.c.l.b16 %v2698
        %v2955 = vunpack.c.l.b16 %v2699
        %v2956 = vunpack.c.l.b16 %v2700
        %v2957 = vunpack.c.l.b16 %v2701
        %v2958 = vunpack.c.l.b16 %v2702
        %v2959 = vunpack.c.l.b16 %v2703
        %v2960 = vunpack.c.l.b16 %v2704
        %v2961 = vunpack.c.l.b16 %v2705
        %v2962 = vunpack.c.l.b16 %v2706
        %v2963 = vunpack.c.l.b16 %v2707
        %v2964 = vunpack.c.l.b16 %v2708
        %v2965 = vunpack.c.l.b16 %v2709
        %v2966 = vunpack.c.l.b16 %v2710
        %v2967 = vunpack.c.l.b16 %v2711
        %v2968 = vunpack.c.l.b16 %v2712
        %v2969 = vunpack.c.l.b16 %v2713
        %v2970 = vunpack.c.l.b16 %v2714
        %v2971 = vunpack.c.l.b16 %v2715
        %v2972 = vunpack.c.l.b16 %v2716
        %v2973 = vunpack.c.l.b16 %v2717
        %v2974 = vunpack.c.l.b16 %v2718
        %v2975 = vunpack.c.l.b16 %v2719
        %v2976 = vunpack.c.l.b16 %v2720
        %v2977 = vunpack.c.l.b16 %v2721
        %v2978 = vunpack.c.l.b16 %v2722
        %v2979 = vunpack.c.l.b16 %v2723
        %v2980 = vunpack.c.l.b16 %v2724
        %v2981 = vunpack.c.l.b16 %v2725
        %v2982 = vunpack.c.l.b16 %v2726
        %v2983 = vunpack.c.l.b16 %v2727
        %v2984 = vunpack.c.l.b16 %v2728
        %v2985 = vunpack.c.l.b16 %v2729
        %v2986 = vunpack.c.l.b16 %v2730
        %v2987 = vunpack.c.l.b16 %v2731
        %v2988 = vunpack.c.l.b16 %v2732
        %v2989 = vunpack.c.l.b16 %v2733
        %v2990 = vunpack.c.l.b16 %v2734
        %v2991 = vunpack.c.l.b16 %v2735
        %v2992 = vunpack.c.l.b16 %v2736
        %v2993 = vunpack.c.l.b16 %v2737
        %v2994 = vunpack.c.l.b16 %v2738
        %v2995 = vunpack.c.l.b16 %v2739
        %v2996 = vunpack.c.l.b16 %v2740
        %v2997 = vunpack.c.l.b16 %v2741
        %v2998 = vunpack.c.l.b16 %v2742
        %v2999 = vunpack.c.l.b16 %v2743
        %v3000 = vunpack.c.l.b16 %v2744
        %v3001 = vunpack.c.l.b16 %v2745
        %v3002 = vunpack.c.l.b16 %v2746
        %v3003 = vunpack.c.l.b16 %v2747
        %v3004 = vpack.c.b16 %v2877, %v2876
        %v3005 = vpack.c.b16 %v2879, %v2878
        %v3006 = vpack.c.b16 %v2881, %v2880
        %v3007 = vpack.c.b16 %v2883, %v2882
        %v3008 = vpack.c.b16 %v2885, %v2884
        %v3009 = vpack.c.b16 %v2887, %v2886
        %v3010 = vpack.c.b16 %v2889, %v2888
        %v3011 = vpack.c.b16 %v2891, %v2890
        %v3012 = vpack.c.b16 %v2893, %v2892
        %v3013 = vpack.c.b16 %v2895, %v2894
        %v3014 = vpack.c.b16 %v2897, %v2896
        %v3015 = vpack.c.b16 %v2899, %v2898
        %v3016 = vpack.c.b16 %v2901, %v2900
        %v3017 = vpack.c.b16 %v2903, %v2902
        %v3018 = vpack.c.b16 %v2905, %v2904
        %v3019 = vpack.c.b16 %v2907, %v2906
        %v3020 = vpack.c.b16 %v2909, %v2908
        %v3021 = vpack.c.b16 %v2911, %v2910
        %v3022 = vpack.c.b16 %v2913, %v2912
        %v3023 = vpack.c.b16 %v2915, %v2914
        %v3024 = vpack.c.b16 %v2917, %v2916
        %v3025 = vpack.c.b16 %v2919, %v2918
        %v3026 = vpack.c.b16 %v2921, %v2920
        %v3027 = vpack.c.b16 %v2923, %v2922
        %v3028 = vpack.c.b16 %v2925, %v2924
        %v3029 = vpack.c.b16 %v2927, %v2926
        %v3030 = vpack.c.b16 %v2929, %v2928
        %v3031 = vpack.c.b16 %v2931, %v2930
        %v3032 = vpack.c.b16 %v2933, %v2932
        %v3033 = vpack.c.b16 %v2935, %v2934
        %v3034 = vpack.c.b16 %v2937, %v2936
        %v3035 = vpack.c.b16 %v2939, %v2938
        %v3036 = vpack.c.b16 %v2941, %v2940
        %v3037 = vpack.c.b16 %v2943, %v2942
        %v3038 = vpack.c.b16 %v2945, %v2944
        %v3039 = vpack.c.b16 %v2947, %v2946
        %v3040 = vpack.c.b16 %v2949, %v2948
        %v3041 = vpack.c.b16 %v2951, %v2950
        %v3042 = vpack.c.b16 %v2953, %v2952
        %v3043 = vpack.c.b16 %v2955, %v2954
        %v3044 = vpack.c.b16 %v2957, %v2956
        %v3045 = vpack.c.b16 %v2959, %v2958
        %v3046 = vpack.c.b16 %v2961, %v2960
        %v3047 = vpack.c.b16 %v2963, %v2962
        %v3048 = vpack.c.b16 %v2965, %v2964
        %v3049 = vpack.c.b16 %v2967, %v2966
        %v3050 = vpack.c.b16 %v2969, %v2968
        %v3051 = vpack.c.b16 %v2971, %v2970
        %v3052 = vpack.c.b16 %v2973, %v2972
        %v3053 = vpack.c.b16 %v2975, %v2974
        %v3054 = vpack.c.b16 %v2977, %v2976
        %v3055 = vpack.c.b16 %v2979, %v2978
        %v3056 = vpack.c.b16 %v2981, %v2980
        %v3057 = vpack.c.b16 %v2983, %v2982
        %v3058 = vpack.c.b16 %v2985, %v2984
        %v3059 = vpack.c.b16 %v2987, %v2986
        %v3060 = vpack.c.b16 %v2989, %v2988
        %v3061 = vpack.c.b16 %v2991, %v2990
        %v3062 = vpack.c.b16 %v2993, %v2992
        %v3063 = vpack.c.b16 %v2995, %v2994
        %v3064 = vpack.c.b16 %v2997, %v2996
        %v3065 = vpack.c.b16 %v2999, %v2998
        %v3066 = vpack.c.b16 %v3001, %v3000
        %v3067 = vpack.c.b16 %v3003, %v3002
        %3132 = vmatprep.subr.bf16.mxu0 0
        %3133 = vmatpush1.bf16.msra.mxu0 %v3011
        %3134 = vmatprep.subr.bf16.mxu0 0
        %3135 = vmatpush1.bf16.msra.mxu0 %v3010
        %3136 = vmatprep.subr.bf16.mxu0 0
        %3137 = vmatpush1.bf16.msra.mxu0 %v3009
        %3138 = vmatprep.subr.bf16.mxu0 0
        %3139 = vmatpush1.bf16.msra.mxu0 %v3008
        %3140 = vmatprep.subr.bf16.mxu0 0
        %3141 = vmatpush1.bf16.msra.mxu0 %v3007
        %3142 = vmatprep.subr.bf16.mxu0 0
        %3143 = vmatpush1.bf16.msra.mxu0 %v3006
        %3144 = vmatprep.subr.bf16.mxu0 0
        %3145 = vmatpush1.bf16.msra.mxu0 %v3005
        %3146 = vmatprep.subr.bf16.mxu0 0
        %3147 = vmatpush1.bf16.msra.mxu0 %v3004
        %3148 = vmatprep.subr.bf16.mxu0 0
        %3149 = vmatpush2.bf16.msra.mxu0 %v3019
        %3150 = vmatprep.subr.bf16.mxu0 0
        %3151 = vmatpush2.bf16.msra.mxu0 %v3018
        %3152 = vmatprep.subr.bf16.mxu0 0
        %3153 = vmatpush2.bf16.msra.mxu0 %v3017
        %3154 = vmatprep.subr.bf16.mxu0 0
        %3155 = vmatpush2.bf16.msra.mxu0 %v3016
        %3156 = vmatprep.subr.bf16.mxu0 0
        %3157 = vmatpush2.bf16.msra.mxu0 %v3015
        %3158 = vmatprep.subr.bf16.mxu0 0
        %3159 = vmatpush2.bf16.msra.mxu0 %v3014
        %3160 = vmatprep.subr.bf16.mxu0 0
        %3161 = vmatpush2.bf16.msra.mxu0 %v3013
        %3162 = vmatprep.subr.bf16.mxu0 0
        %3163 = vmatpush2.bf16.msra.mxu0 %v3012
        %3164 = vmatprep.mubr.bf16.mxu0 %v2613
        %3165 = vmatmul.mubr.bf16.gmra.mxu0 %v2612
        %v3166 = vpop.f32.mrf.mxu0
        %v3167 = vadd.f32 0.0, %v3166
        %v3168 = vpop.f32.mrf.mxu0
        %v3169 = vpop.f32.mrf.mxu0
        %v3170 = vadd.f32 0.0, %v3169
        %v3171 = vpop.f32.mrf.mxu0
        %3172 = vdwg.mxu0
        %3173 = vmatprep.subr.bf16.mxu0 0
        %3174 = vmatpush1.bf16.msra.mxu0 %v3027
        %3175 = vmatprep.subr.bf16.mxu0 0
        %3176 = vmatpush1.bf16.msra.mxu0 %v3026
        %3177 = vmatprep.subr.bf16.mxu0 0
        %3178 = vmatpush1.bf16.msra.mxu0 %v3025
        %3179 = vmatprep.subr.bf16.mxu0 0
        %3180 = vmatpush1.bf16.msra.mxu0 %v3024
        %3181 = vmatprep.subr.bf16.mxu0 0
        %3182 = vmatpush1.bf16.msra.mxu0 %v3023
        %3183 = vmatprep.subr.bf16.mxu0 0
        %3184 = vmatpush1.bf16.msra.mxu0 %v3022
        %3185 = vmatprep.subr.bf16.mxu0 0
        %3186 = vmatpush1.bf16.msra.mxu0 %v3021
        %3187 = vmatprep.subr.bf16.mxu0 0
        %3188 = vmatpush1.bf16.msra.mxu0 %v3020
        %3189 = vmatprep.subr.bf16.mxu0 0
        %3190 = vmatpush2.bf16.msra.mxu0 %v3035
        %3191 = vmatprep.subr.bf16.mxu0 0
        %3192 = vmatpush2.bf16.msra.mxu0 %v3034
        %3193 = vmatprep.subr.bf16.mxu0 0
        %3194 = vmatpush2.bf16.msra.mxu0 %v3033
        %3195 = vmatprep.subr.bf16.mxu0 0
        %3196 = vmatpush2.bf16.msra.mxu0 %v3032
        %3197 = vmatprep.subr.bf16.mxu0 0
        %3198 = vmatpush2.bf16.msra.mxu0 %v3031
        %3199 = vmatprep.subr.bf16.mxu0 0
        %3200 = vmatpush2.bf16.msra.mxu0 %v3030
        %3201 = vmatprep.subr.bf16.mxu0 0
        %3202 = vmatpush2.bf16.msra.mxu0 %v3029
        %3203 = vmatprep.subr.bf16.mxu0 0
        %3204 = vmatpush2.bf16.msra.mxu0 %v3028
        %3205 = vmatprep.mubr.bf16.mxu0 %v2615
        %3206 = vmatmul.mubr.bf16.gmra.mxu0 %v2614
        %v3207 = vpop.f32.mrf.mxu0
        %v3208 = vadd.f32 %v3167, %v3207
        %v3209 = vpop.f32.mrf.mxu0
        %v3210 = vpop.f32.mrf.mxu0
        %v3211 = vadd.f32 %v3170, %v3210
        %v3212 = vpop.f32.mrf.mxu0
        %3213 = vdwg.mxu0
        %3214 = vmatprep.subr.bf16.mxu0 0
        %3215 = vmatpush1.bf16.msra.mxu0 %v3043
        %3216 = vmatprep.subr.bf16.mxu0 0
        %3217 = vmatpush1.bf16.msra.mxu0 %v3042
        %3218 = vmatprep.subr.bf16.mxu0 0
        %3219 = vmatpush1.bf16.msra.mxu0 %v3041
        %3220 = vmatprep.subr.bf16.mxu0 0
        %3221 = vmatpush1.bf16.msra.mxu0 %v3040
        %3222 = vmatprep.subr.bf16.mxu0 0
        %3223 = vmatpush1.bf16.msra.mxu0 %v3039
        %3224 = vmatprep.subr.bf16.mxu0 0
        %3225 = vmatpush1.bf16.msra.mxu0 %v3038
        %3226 = vmatprep.subr.bf16.mxu0 0
        %3227 = vmatpush1.bf16.msra.mxu0 %v3037
        %3228 = vmatprep.subr.bf16.mxu0 0
        %3229 = vmatpush1.bf16.msra.mxu0 %v3036
        %3230 = vmatprep.subr.bf16.mxu0 0
        %3231 = vmatpush2.bf16.msra.mxu0 %v3051
        %3232 = vmatprep.subr.bf16.mxu0 0
        %3233 = vmatpush2.bf16.msra.mxu0 %v3050
        %3234 = vmatprep.subr.bf16.mxu0 0
        %3235 = vmatpush2.bf16.msra.mxu0 %v3049
        %3236 = vmatprep.subr.bf16.mxu0 0
        %3237 = vmatpush2.bf16.msra.mxu0 %v3048
        %3238 = vmatprep.subr.bf16.mxu0 0
        %3239 = vmatpush2.bf16.msra.mxu0 %v3047
        %3240 = vmatprep.subr.bf16.mxu0 0
        %3241 = vmatpush2.bf16.msra.mxu0 %v3046
        %3242 = vmatprep.subr.bf16.mxu0 0
        %3243 = vmatpush2.bf16.msra.mxu0 %v3045
        %3244 = vmatprep.subr.bf16.mxu0 0
        %3245 = vmatpush2.bf16.msra.mxu0 %v3044
        %3246 = vmatprep.mubr.bf16.mxu0 %v2617
        %3247 = vmatmul.mubr.bf16.gmra.mxu0 %v2616
        %v3248 = vpop.f32.mrf.mxu0
        %v3249 = vadd.f32 %v3208, %v3248
        %v3250 = vpop.f32.mrf.mxu0
        %v3251 = vpop.f32.mrf.mxu0
        %v3252 = vadd.f32 %v3211, %v3251
        %v3253 = vpop.f32.mrf.mxu0
        %3254 = vdwg.mxu0
        %3255 = vmatprep.subr.bf16.mxu0 0
        %3256 = vmatpush1.bf16.msra.mxu0 %v3059
        %3257 = vmatprep.subr.bf16.mxu0 0
        %3258 = vmatpush1.bf16.msra.mxu0 %v3058
        %3259 = vmatprep.subr.bf16.mxu0 0
        %3260 = vmatpush1.bf16.msra.mxu0 %v3057
        %3261 = vmatprep.subr.bf16.mxu0 0
        %3262 = vmatpush1.bf16.msra.mxu0 %v3056
        %3263 = vmatprep.subr.bf16.mxu0 0
        %3264 = vmatpush1.bf16.msra.mxu0 %v3055
        %3265 = vmatprep.subr.bf16.mxu0 0
        %3266 = vmatpush1.bf16.msra.mxu0 %v3054
        %3267 = vmatprep.subr.bf16.mxu0 0
        %3268 = vmatpush1.bf16.msra.mxu0 %v3053
        %3269 = vmatprep.subr.bf16.mxu0 0
        %3270 = vmatpush1.bf16.msra.mxu0 %v3052
        %3271 = vmatprep.subr.bf16.mxu0 0
        %3272 = vmatpush2.bf16.msra.mxu0 %v3067
        %3273 = vmatprep.subr.bf16.mxu0 0
        %3274 = vmatpush2.bf16.msra.mxu0 %v3066
        %3275 = vmatprep.subr.bf16.mxu0 0
        %3276 = vmatpush2.bf16.msra.mxu0 %v3065
        %3277 = vmatprep.subr.bf16.mxu0 0
        %3278 = vmatpush2.bf16.msra.mxu0 %v3064
        %3279 = vmatprep.subr.bf16.mxu0 0
        %3280 = vmatpush2.bf16.msra.mxu0 %v3063
        %3281 = vmatprep.subr.bf16.mxu0 0
        %3282 = vmatpush2.bf16.msra.mxu0 %v3062
        %3283 = vmatprep.subr.bf16.mxu0 0
        %3284 = vmatpush2.bf16.msra.mxu0 %v3061
        %3285 = vmatprep.subr.bf16.mxu0 0
        %3286 = vmatpush2.bf16.msra.mxu0 %v3060
        %3287 = vmatprep.mubr.bf16.mxu0 %v2619
        %3288 = vmatmul.mubr.bf16.gmra.mxu0 %v2618
        %v3289 = vpop.f32.mrf.mxu0
        %v3290 = vadd.f32 %v3249, %v3289
        %v3291 = vpop.f32.mrf.mxu0
        %v3292 = vpop.f32.mrf.mxu0
        %v3293 = vadd.f32 %v3252, %v3292
        %v3294 = vpop.f32.mrf.mxu0
        %3295 = vdwg.mxu0
        %v3296 = vadd.f32 %v2231, %v3290
        %v3297 = vadd.f32 %v2232, %v3293
        %v3298 = vld [vmem:[%s441 + $0x8] sm:$0xf]
        %v3299 = vld [vmem:[%s441 + $0x18] sm:$0xf]
        %s3300 = scalar_lea.vmem %s391, 16 [#allocation2]
        %v3301 = vld [vmem:[%s3300] sm:$0xf]
        %v3302 = vld [vmem:[%s3300 + $0x4] sm:$0xf]
        %v3305 = vunpack.c.l.b16 %v3301
        %v3306 = vunpack.c.l.b16 %v3302
        %v3307 = vpack.c.b16 %v3306, %v3305
        %v3309 = vsel %vm816, %v3307, 0
        %3311 = vmatprep.subr.bf16.mxu0 0
        %3312 = vmatpush1.bf16.msra.mxu0 0
        %3313 = vmatprep.subr.bf16.mxu0 0
        %3314 = vmatpush1.bf16.msra.mxu0 0
        %3315 = vmatprep.subr.bf16.mxu0 0
        %3316 = vmatpush1.bf16.msra.mxu0 0
        %3317 = vmatprep.subr.bf16.mxu0 0
        %3318 = vmatpush1.bf16.msra.mxu0 0
        %3319 = vmatprep.subr.bf16.mxu0 0
        %3320 = vmatpush1.bf16.msra.mxu0 0
        %3321 = vmatprep.subr.bf16.mxu0 0
        %3322 = vmatpush1.bf16.msra.mxu0 0
        %3323 = vmatprep.subr.bf16.mxu0 %v793
        %3324 = vmatpush1.bf16.msra.mxu0 %v792
        %3325 = vmatprep.subr.bf16.mxu0 %v785
        %3326 = vmatpush1.bf16.msra.mxu0 %v784
        %3327 = vmatprep.subr.bf16.mxu0 0
        %3328 = vmatpush2.bf16.msra.mxu0 0
        %3329 = vmatprep.subr.bf16.mxu0 0
        %3330 = vmatpush2.bf16.msra.mxu0 0
        %3331 = vmatprep.subr.bf16.mxu0 0
        %3332 = vmatpush2.bf16.msra.mxu0 0
        %3333 = vmatprep.subr.bf16.mxu0 0
        %3334 = vmatpush2.bf16.msra.mxu0 0
        %3335 = vmatprep.subr.bf16.mxu0 0
        %3336 = vmatpush2.bf16.msra.mxu0 0
        %3337 = vmatprep.subr.bf16.mxu0 0
        %3338 = vmatpush2.bf16.msra.mxu0 0
        %3339 = vmatprep.subr.bf16.mxu0 0
        %3340 = vmatpush2.bf16.msra.mxu0 0
        %3341 = vmatprep.subr.bf16.mxu0 0
        %3342 = vmatpush2.bf16.msra.mxu0 0
        %3343 = vmatprep.mubr.bf16.mxu0 0
        %3344 = vmatmul.mubr.bf16.gmra.mxu0 %v3309
        %v3345 = vpop.f32.mrf.mxu0
        %v3346 = vadd.f32 0.0, %v3345
        %v3347 = vpop.f32.mrf.mxu0
        %v3348 = vadd.f32 0.0, %v3347
        %v3349 = vpop.f32.mrf.mxu0
        %v3350 = vadd.f32 0.0, %v3349
        %v3351 = vpop.f32.mrf.mxu0
        %v3352 = vadd.f32 0.0, %v3351
        %3353 = vdwg.mxu0
        %3354 = vmatprep.subr.bf16.mxu0 0
        %3355 = vmatpush1.bf16.msra.mxu0 0
        %3356 = vmatprep.subr.bf16.mxu0 0
        %3357 = vmatpush1.bf16.msra.mxu0 0
        %3358 = vmatprep.subr.bf16.mxu0 0
        %3359 = vmatpush1.bf16.msra.mxu0 0
        %3360 = vmatprep.subr.bf16.mxu0 0
        %3361 = vmatpush1.bf16.msra.mxu0 0
        %3362 = vmatprep.subr.bf16.mxu0 0
        %3363 = vmatpush1.bf16.msra.mxu0 0
        %3364 = vmatprep.subr.bf16.mxu0 0
        %3365 = vmatpush1.bf16.msra.mxu0 0
        %3366 = vmatprep.subr.bf16.mxu0 %v795
        %3367 = vmatpush1.bf16.msra.mxu0 %v794
        %3368 = vmatprep.subr.bf16.mxu0 %v787
        %3369 = vmatpush1.bf16.msra.mxu0 %v786
        %3370 = vmatprep.subr.bf16.mxu0 0
        %3371 = vmatpush2.bf16.msra.mxu0 0
        %3372 = vmatprep.subr.bf16.mxu0 0
        %3373 = vmatpush2.bf16.msra.mxu0 0
        %3374 = vmatprep.subr.bf16.mxu0 0
        %3375 = vmatpush2.bf16.msra.mxu0 0
        %3376 = vmatprep.subr.bf16.mxu0 0
        %3377 = vmatpush2.bf16.msra.mxu0 0
        %3378 = vmatprep.subr.bf16.mxu0 0
        %3379 = vmatpush2.bf16.msra.mxu0 0
        %3380 = vmatprep.subr.bf16.mxu0 0
        %3381 = vmatpush2.bf16.msra.mxu0 0
        %3382 = vmatprep.subr.bf16.mxu0 0
        %3383 = vmatpush2.bf16.msra.mxu0 0
        %3384 = vmatprep.subr.bf16.mxu0 0
        %3385 = vmatpush2.bf16.msra.mxu0 0
        %3386 = vmatprep.mubr.bf16.mxu0 0
        %3387 = vmatmul.mubr.bf16.gmra.mxu0 %v3309
        %v3388 = vpop.f32.mrf.mxu0
        %v3389 = vadd.f32 0.0, %v3388
        %v3390 = vpop.f32.mrf.mxu0
        %v3391 = vadd.f32 0.0, %v3390
        %v3392 = vpop.f32.mrf.mxu0
        %v3393 = vadd.f32 0.0, %v3392
        %v3394 = vpop.f32.mrf.mxu0
        %v3395 = vadd.f32 0.0, %v3394
        %3396 = vdwg.mxu0
        %3397 = vmatprep.subr.bf16.mxu0 0
        %3398 = vmatpush1.bf16.msra.mxu0 0
        %3399 = vmatprep.subr.bf16.mxu0 0
        %3400 = vmatpush1.bf16.msra.mxu0 0
        %3401 = vmatprep.subr.bf16.mxu0 0
        %3402 = vmatpush1.bf16.msra.mxu0 0
        %3403 = vmatprep.subr.bf16.mxu0 0
        %3404 = vmatpush1.bf16.msra.mxu0 0
        %3405 = vmatprep.subr.bf16.mxu0 0
        %3406 = vmatpush1.bf16.msra.mxu0 0
        %3407 = vmatprep.subr.bf16.mxu0 0
        %3408 = vmatpush1.bf16.msra.mxu0 0
        %3409 = vmatprep.subr.bf16.mxu0 %v797
        %3410 = vmatpush1.bf16.msra.mxu0 %v796
        %3411 = vmatprep.subr.bf16.mxu0 %v789
        %3412 = vmatpush1.bf16.msra.mxu0 %v788
        %3413 = vmatprep.subr.bf16.mxu0 0
        %3414 = vmatpush2.bf16.msra.mxu0 0
        %3415 = vmatprep.subr.bf16.mxu0 0
        %3416 = vmatpush2.bf16.msra.mxu0 0
        %3417 = vmatprep.subr.bf16.mxu0 0
        %3418 = vmatpush2.bf16.msra.mxu0 0
        %3419 = vmatprep.subr.bf16.mxu0 0
        %3420 = vmatpush2.bf16.msra.mxu0 0
        %3421 = vmatprep.subr.bf16.mxu0 0
        %3422 = vmatpush2.bf16.msra.mxu0 0
        %3423 = vmatprep.subr.bf16.mxu0 0
        %3424 = vmatpush2.bf16.msra.mxu0 0
        %3425 = vmatprep.subr.bf16.mxu0 0
        %3426 = vmatpush2.bf16.msra.mxu0 0
        %3427 = vmatprep.subr.bf16.mxu0 0
        %3428 = vmatpush2.bf16.msra.mxu0 0
        %3429 = vmatprep.mubr.bf16.mxu0 0
        %3430 = vmatmul.mubr.bf16.gmra.mxu0 %v3309
        %v3431 = vpop.f32.mrf.mxu0
        %v3432 = vadd.f32 0.0, %v3431
        %v3433 = vpop.f32.mrf.mxu0
        %v3434 = vadd.f32 0.0, %v3433
        %v3435 = vpop.f32.mrf.mxu0
        %v3436 = vadd.f32 0.0, %v3435
        %v3437 = vpop.f32.mrf.mxu0
        %v3438 = vadd.f32 0.0, %v3437
        %3439 = vdwg.mxu0
        %3440 = vmatprep.subr.bf16.mxu0 0
        %3441 = vmatpush1.bf16.msra.mxu0 0
        %3442 = vmatprep.subr.bf16.mxu0 0
        %3443 = vmatpush1.bf16.msra.mxu0 0
        %3444 = vmatprep.subr.bf16.mxu0 0
        %3445 = vmatpush1.bf16.msra.mxu0 0
        %3446 = vmatprep.subr.bf16.mxu0 0
        %3447 = vmatpush1.bf16.msra.mxu0 0
        %3448 = vmatprep.subr.bf16.mxu0 0
        %3449 = vmatpush1.bf16.msra.mxu0 0
        %3450 = vmatprep.subr.bf16.mxu0 0
        %3451 = vmatpush1.bf16.msra.mxu0 0
        %3452 = vmatprep.subr.bf16.mxu0 %v799
        %3453 = vmatpush1.bf16.msra.mxu0 %v798
        %3454 = vmatprep.subr.bf16.mxu0 %v791
        %3455 = vmatpush1.bf16.msra.mxu0 %v790
        %3456 = vmatprep.subr.bf16.mxu0 0
        %3457 = vmatpush2.bf16.msra.mxu0 0
        %3458 = vmatprep.subr.bf16.mxu0 0
        %3459 = vmatpush2.bf16.msra.mxu0 0
        %3460 = vmatprep.subr.bf16.mxu0 0
        %3461 = vmatpush2.bf16.msra.mxu0 0
        %3462 = vmatprep.subr.bf16.mxu0 0
        %3463 = vmatpush2.bf16.msra.mxu0 0
        %3464 = vmatprep.subr.bf16.mxu0 0
        %3465 = vmatpush2.bf16.msra.mxu0 0
        %3466 = vmatprep.subr.bf16.mxu0 0
        %3467 = vmatpush2.bf16.msra.mxu0 0
        %3468 = vmatprep.subr.bf16.mxu0 0
        %3469 = vmatpush2.bf16.msra.mxu0 0
        %3470 = vmatprep.subr.bf16.mxu0 0
        %3471 = vmatpush2.bf16.msra.mxu0 0
        %3472 = vmatprep.mubr.bf16.mxu0 0
        %3473 = vmatmul.mubr.bf16.gmra.mxu0 %v3309
        %v3474 = vpop.f32.mrf.mxu0
        %v3475 = vadd.f32 0.0, %v3474
        %v3476 = vpop.f32.mrf.mxu0
        %v3477 = vadd.f32 0.0, %v3476
        %v3478 = vpop.f32.mrf.mxu0
        %v3479 = vadd.f32 0.0, %v3478
        %v3480 = vpop.f32.mrf.mxu0
        %v3481 = vadd.f32 0.0, %v3480
        %3482 = vdwg.mxu0
        %v3485 = vunpack.c.l.b16 %v3298
        %v3486 = vunpack.c.l.b16 %v3299
        %v3487 = vpack.c.b16 %v3486, %v3485
        %3489 = vmatprep.subr.bf16.mxu0 %v1247
        %3490 = vmatpush1.bf16.msra.mxu0 %v1246
        %3491 = vmatprep.subr.bf16.mxu0 %v1239
        %3492 = vmatpush1.bf16.msra.mxu0 %v1238
        %3493 = vmatprep.subr.bf16.mxu0 %v1231
        %3494 = vmatpush1.bf16.msra.mxu0 %v1230
        %3495 = vmatprep.subr.bf16.mxu0 %v1223
        %3496 = vmatpush1.bf16.msra.mxu0 %v1222
        %3497 = vmatprep.subr.bf16.mxu0 %v1215
        %3498 = vmatpush1.bf16.msra.mxu0 %v1214
        %3499 = vmatprep.subr.bf16.mxu0 %v1207
        %3500 = vmatpush1.bf16.msra.mxu0 %v1206
        %3501 = vmatprep.subr.bf16.mxu0 %v1199
        %3502 = vmatpush1.bf16.msra.mxu0 %v1198
        %3503 = vmatprep.subr.bf16.mxu0 %v1191
        %3504 = vmatpush1.bf16.msra.mxu0 %v1190
        %3505 = vmatprep.subr.bf16.mxu0 0
        %3506 = vmatpush2.bf16.msra.mxu0 0
        %3507 = vmatprep.subr.bf16.mxu0 0
        %3508 = vmatpush2.bf16.msra.mxu0 0
        %3509 = vmatprep.subr.bf16.mxu0 0
        %3510 = vmatpush2.bf16.msra.mxu0 0
        %3511 = vmatprep.subr.bf16.mxu0 0
        %3512 = vmatpush2.bf16.msra.mxu0 0
        %3513 = vmatprep.subr.bf16.mxu0 0
        %3514 = vmatpush2.bf16.msra.mxu0 0
        %3515 = vmatprep.subr.bf16.mxu0 0
        %3516 = vmatpush2.bf16.msra.mxu0 0
        %3517 = vmatprep.subr.bf16.mxu0 0
        %3518 = vmatpush2.bf16.msra.mxu0 0
        %3519 = vmatprep.subr.bf16.mxu0 0
        %3520 = vmatpush2.bf16.msra.mxu0 0
        %3521 = vmatprep.mubr.bf16.mxu0 0
        %3522 = vmatmul.mubr.bf16.gmra.mxu0 %v3487
        %v3523 = vpop.f32.mrf.mxu0
        %v3524 = vadd.f32 %v3346, %v3523
        %v3525 = vpop.f32.mrf.mxu0
        %v3526 = vadd.f32 %v3348, %v3525
        %v3527 = vpop.f32.mrf.mxu0
        %v3528 = vadd.f32 %v3350, %v3527
        %v3529 = vpop.f32.mrf.mxu0
        %v3530 = vadd.f32 %v3352, %v3529
        %3531 = vdwg.mxu0
        %3532 = vmatprep.subr.bf16.mxu0 %v1249
        %3533 = vmatpush1.bf16.msra.mxu0 %v1248
        %3534 = vmatprep.subr.bf16.mxu0 %v1241
        %3535 = vmatpush1.bf16.msra.mxu0 %v1240
        %3536 = vmatprep.subr.bf16.mxu0 %v1233
        %3537 = vmatpush1.bf16.msra.mxu0 %v1232
        %3538 = vmatprep.subr.bf16.mxu0 %v1225
        %3539 = vmatpush1.bf16.msra.mxu0 %v1224
        %3540 = vmatprep.subr.bf16.mxu0 %v1217
        %3541 = vmatpush1.bf16.msra.mxu0 %v1216
        %3542 = vmatprep.subr.bf16.mxu0 %v1209
        %3543 = vmatpush1.bf16.msra.mxu0 %v1208
        %3544 = vmatprep.subr.bf16.mxu0 %v1201
        %3545 = vmatpush1.bf16.msra.mxu0 %v1200
        %3546 = vmatprep.subr.bf16.mxu0 %v1193
        %3547 = vmatpush1.bf16.msra.mxu0 %v1192
        %3548 = vmatprep.subr.bf16.mxu0 0
        %3549 = vmatpush2.bf16.msra.mxu0 0
        %3550 = vmatprep.subr.bf16.mxu0 0
        %3551 = vmatpush2.bf16.msra.mxu0 0
        %3552 = vmatprep.subr.bf16.mxu0 0
        %3553 = vmatpush2.bf16.msra.mxu0 0
        %3554 = vmatprep.subr.bf16.mxu0 0
        %3555 = vmatpush2.bf16.msra.mxu0 0
        %3556 = vmatprep.subr.bf16.mxu0 0
        %3557 = vmatpush2.bf16.msra.mxu0 0
        %3558 = vmatprep.subr.bf16.mxu0 0
        %3559 = vmatpush2.bf16.msra.mxu0 0
        %3560 = vmatprep.subr.bf16.mxu0 0
        %3561 = vmatpush2.bf16.msra.mxu0 0
        %3562 = vmatprep.subr.bf16.mxu0 0
        %3563 = vmatpush2.bf16.msra.mxu0 0
        %3564 = vmatprep.mubr.bf16.mxu0 0
        %3565 = vmatmul.mubr.bf16.gmra.mxu0 %v3487
        %v3566 = vpop.f32.mrf.mxu0
        %v3567 = vadd.f32 %v3389, %v3566
        %v3568 = vpop.f32.mrf.mxu0
        %v3569 = vadd.f32 %v3391, %v3568
        %v3570 = vpop.f32.mrf.mxu0
        %v3571 = vadd.f32 %v3393, %v3570
        %v3572 = vpop.f32.mrf.mxu0
        %v3573 = vadd.f32 %v3395, %v3572
        %3574 = vdwg.mxu0
        %3575 = vmatprep.subr.bf16.mxu0 %v1251
        %3576 = vmatpush1.bf16.msra.mxu0 %v1250
        %3577 = vmatprep.subr.bf16.mxu0 %v1243
        %3578 = vmatpush1.bf16.msra.mxu0 %v1242
        %3579 = vmatprep.subr.bf16.mxu0 %v1235
        %3580 = vmatpush1.bf16.msra.mxu0 %v1234
        %3581 = vmatprep.subr.bf16.mxu0 %v1227
        %3582 = vmatpush1.bf16.msra.mxu0 %v1226
        %3583 = vmatprep.subr.bf16.mxu0 %v1219
        %3584 = vmatpush1.bf16.msra.mxu0 %v1218
        %3585 = vmatprep.subr.bf16.mxu0 %v1211
        %3586 = vmatpush1.bf16.msra.mxu0 %v1210
        %3587 = vmatprep.subr.bf16.mxu0 %v1203
        %3588 = vmatpush1.bf16.msra.mxu0 %v1202
        %3589 = vmatprep.subr.bf16.mxu0 %v1195
        %3590 = vmatpush1.bf16.msra.mxu0 %v1194
        %3591 = vmatprep.subr.bf16.mxu0 0
        %3592 = vmatpush2.bf16.msra.mxu0 0
        %3593 = vmatprep.subr.bf16.mxu0 0
        %3594 = vmatpush2.bf16.msra.mxu0 0
        %3595 = vmatprep.subr.bf16.mxu0 0
        %3596 = vmatpush2.bf16.msra.mxu0 0
        %3597 = vmatprep.subr.bf16.mxu0 0
        %3598 = vmatpush2.bf16.msra.mxu0 0
        %3599 = vmatprep.subr.bf16.mxu0 0
        %3600 = vmatpush2.bf16.msra.mxu0 0
        %3601 = vmatprep.subr.bf16.mxu0 0
        %3602 = vmatpush2.bf16.msra.mxu0 0
        %3603 = vmatprep.subr.bf16.mxu0 0
        %3604 = vmatpush2.bf16.msra.mxu0 0
        %3605 = vmatprep.subr.bf16.mxu0 0
        %3606 = vmatpush2.bf16.msra.mxu0 0
        %3607 = vmatprep.mubr.bf16.mxu0 0
        %3608 = vmatmul.mubr.bf16.gmra.mxu0 %v3487
        %v3609 = vpop.f32.mrf.mxu0
        %v3610 = vadd.f32 %v3432, %v3609
        %v3611 = vpop.f32.mrf.mxu0
        %v3612 = vadd.f32 %v3434, %v3611
        %v3613 = vpop.f32.mrf.mxu0
        %v3614 = vadd.f32 %v3436, %v3613
        %v3615 = vpop.f32.mrf.mxu0
        %v3616 = vadd.f32 %v3438, %v3615
        %3617 = vdwg.mxu0
        %3618 = vmatprep.subr.bf16.mxu0 %v1253
        %3619 = vmatpush1.bf16.msra.mxu0 %v1252
        %3620 = vmatprep.subr.bf16.mxu0 %v1245
        %3621 = vmatpush1.bf16.msra.mxu0 %v1244
        %3622 = vmatprep.subr.bf16.mxu0 %v1237
        %3623 = vmatpush1.bf16.msra.mxu0 %v1236
        %3624 = vmatprep.subr.bf16.mxu0 %v1229
        %3625 = vmatpush1.bf16.msra.mxu0 %v1228
        %3626 = vmatprep.subr.bf16.mxu0 %v1221
        %3627 = vmatpush1.bf16.msra.mxu0 %v1220
        %3628 = vmatprep.subr.bf16.mxu0 %v1213
        %3629 = vmatpush1.bf16.msra.mxu0 %v1212
        %3630 = vmatprep.subr.bf16.mxu0 %v1205
        %3631 = vmatpush1.bf16.msra.mxu0 %v1204
        %3632 = vmatprep.subr.bf16.mxu0 %v1197
        %3633 = vmatpush1.bf16.msra.mxu0 %v1196
        %3634 = vmatprep.subr.bf16.mxu0 0
        %3635 = vmatpush2.bf16.msra.mxu0 0
        %3636 = vmatprep.subr.bf16.mxu0 0
        %3637 = vmatpush2.bf16.msra.mxu0 0
        %3638 = vmatprep.subr.bf16.mxu0 0
        %3639 = vmatpush2.bf16.msra.mxu0 0
        %3640 = vmatprep.subr.bf16.mxu0 0
        %3641 = vmatpush2.bf16.msra.mxu0 0
        %3642 = vmatprep.subr.bf16.mxu0 0
        %3643 = vmatpush2.bf16.msra.mxu0 0
        %3644 = vmatprep.subr.bf16.mxu0 0
        %3645 = vmatpush2.bf16.msra.mxu0 0
        %3646 = vmatprep.subr.bf16.mxu0 0
        %3647 = vmatpush2.bf16.msra.mxu0 0
        %3648 = vmatprep.subr.bf16.mxu0 0
        %3649 = vmatpush2.bf16.msra.mxu0 0
        %3650 = vmatprep.mubr.bf16.mxu0 0
        %3651 = vmatmul.mubr.bf16.gmra.mxu0 %v3487
        %v3652 = vpop.f32.mrf.mxu0
        %v3653 = vadd.f32 %v3475, %v3652
        %v3654 = vpop.f32.mrf.mxu0
        %v3655 = vadd.f32 %v3477, %v3654
        %v3656 = vpop.f32.mrf.mxu0
        %v3657 = vadd.f32 %v3479, %v3656
        %v3658 = vpop.f32.mrf.mxu0
        %v3659 = vadd.f32 %v3481, %v3658
        %3660 = vdwg.mxu0
        %v3661 = vadd.f32 %v3524, %v1494
        %v3662 = vadd.f32 %v3526, %v1498
        %v3663 = vadd.f32 %v3567, %v1502
        %v3664 = vadd.f32 %v3569, %v1506
        %v3665 = vadd.f32 %v3610, %v1510
        %v3666 = vadd.f32 %v3612, %v1514
        %v3667 = vadd.f32 %v3653, %v1518
        %v3668 = vadd.f32 %v3655, %v1522
        %v3669 = vadd.f32 %v3528, %v1494
        %v3670 = vadd.f32 %v3530, %v1498
        %v3671 = vadd.f32 %v3571, %v1502
        %v3672 = vadd.f32 %v3573, %v1506
        %v3673 = vadd.f32 %v3614, %v1510
        %v3674 = vadd.f32 %v3616, %v1514
        %v3675 = vadd.f32 %v3657, %v1518
        %v3676 = vadd.f32 %v3659, %v1522
        %v3677 = vpack.c.bf16 %v3669, %v3661
        %v3678 = vpack.c.bf16 %v3670, %v3662
        %v3679 = vpack.c.bf16 %v3671, %v3663
        %v3680 = vpack.c.bf16 %v3672, %v3664
        %v3681 = vpack.c.bf16 %v3673, %v3665
        %v3682 = vpack.c.bf16 %v3674, %v3666
        %v3683 = vpack.c.bf16 %v3675, %v3667
        %v3684 = vpack.c.bf16 %v3676, %v3668
        %v3685 = vld [vmem:[%s6 + $0x400] sm:$0xf]
        %v3686 = vld [vmem:[%s6 + $0x404] sm:$0xf]
        %v3687 = vld [vmem:[%s6 + $0x408] sm:$0xf]
        %v3688 = vld [vmem:[%s6 + $0x40c] sm:$0xf]
        %v3689 = vld [vmem:[%s6 + $0x410] sm:$0xf]
        %v3690 = vld [vmem:[%s6 + $0x414] sm:$0xf]
        %v3691 = vld [vmem:[%s6 + $0x418] sm:$0xf]
        %v3692 = vld [vmem:[%s6 + $0x41c] sm:$0xf]
        %v3693 = vld [vmem:[%s6 + $0x420] sm:$0xf]
        %v3694 = vld [vmem:[%s6 + $0x424] sm:$0xf]
        %v3695 = vld [vmem:[%s6 + $0x428] sm:$0xf]
        %v3696 = vld [vmem:[%s6 + $0x42c] sm:$0xf]
        %v3697 = vld [vmem:[%s6 + $0x430] sm:$0xf]
        %v3698 = vld [vmem:[%s6 + $0x434] sm:$0xf]
        %v3699 = vld [vmem:[%s6 + $0x438] sm:$0xf]
        %v3700 = vld [vmem:[%s6 + $0x43c] sm:$0xf]
        %v3701 = vld [vmem:[%s6 + $0x440] sm:$0xf]
        %v3702 = vld [vmem:[%s6 + $0x444] sm:$0xf]
        %v3703 = vld [vmem:[%s6 + $0x448] sm:$0xf]
        %v3704 = vld [vmem:[%s6 + $0x44c] sm:$0xf]
        %v3705 = vld [vmem:[%s6 + $0x450] sm:$0xf]
        %v3706 = vld [vmem:[%s6 + $0x454] sm:$0xf]
        %v3707 = vld [vmem:[%s6 + $0x458] sm:$0xf]
        %v3708 = vld [vmem:[%s6 + $0x45c] sm:$0xf]
        %v3709 = vld [vmem:[%s6 + $0x460] sm:$0xf]
        %v3710 = vld [vmem:[%s6 + $0x464] sm:$0xf]
        %v3711 = vld [vmem:[%s6 + $0x468] sm:$0xf]
        %v3712 = vld [vmem:[%s6 + $0x46c] sm:$0xf]
        %v3713 = vld [vmem:[%s6 + $0x470] sm:$0xf]
        %v3714 = vld [vmem:[%s6 + $0x474] sm:$0xf]
        %v3715 = vld [vmem:[%s6 + $0x478] sm:$0xf]
        %v3716 = vld [vmem:[%s6 + $0x47c] sm:$0xf]
        %v3717 = vld [vmem:[%s6 + $0x480] sm:$0xf]
        %v3718 = vld [vmem:[%s6 + $0x484] sm:$0xf]
        %v3719 = vld [vmem:[%s6 + $0x488] sm:$0xf]
        %v3720 = vld [vmem:[%s6 + $0x48c] sm:$0xf]
        %v3721 = vld [vmem:[%s6 + $0x490] sm:$0xf]
        %v3722 = vld [vmem:[%s6 + $0x494] sm:$0xf]
        %v3723 = vld [vmem:[%s6 + $0x498] sm:$0xf]
        %v3724 = vld [vmem:[%s6 + $0x49c] sm:$0xf]
        %v3725 = vld [vmem:[%s6 + $0x4a0] sm:$0xf]
        %v3726 = vld [vmem:[%s6 + $0x4a4] sm:$0xf]
        %v3727 = vld [vmem:[%s6 + $0x4a8] sm:$0xf]
        %v3728 = vld [vmem:[%s6 + $0x4ac] sm:$0xf]
        %v3729 = vld [vmem:[%s6 + $0x4b0] sm:$0xf]
        %v3730 = vld [vmem:[%s6 + $0x4b4] sm:$0xf]
        %v3731 = vld [vmem:[%s6 + $0x4b8] sm:$0xf]
        %v3732 = vld [vmem:[%s6 + $0x4bc] sm:$0xf]
        %v3733 = vld [vmem:[%s6 + $0x4c0] sm:$0xf]
        %v3734 = vld [vmem:[%s6 + $0x4c4] sm:$0xf]
        %v3735 = vld [vmem:[%s6 + $0x4c8] sm:$0xf]
        %v3736 = vld [vmem:[%s6 + $0x4cc] sm:$0xf]
        %v3737 = vld [vmem:[%s6 + $0x4d0] sm:$0xf]
        %v3738 = vld [vmem:[%s6 + $0x4d4] sm:$0xf]
        %v3739 = vld [vmem:[%s6 + $0x4d8] sm:$0xf]
        %v3740 = vld [vmem:[%s6 + $0x4dc] sm:$0xf]
        %v3741 = vld [vmem:[%s6 + $0x4e0] sm:$0xf]
        %v3742 = vld [vmem:[%s6 + $0x4e4] sm:$0xf]
        %v3743 = vld [vmem:[%s6 + $0x4e8] sm:$0xf]
        %v3744 = vld [vmem:[%s6 + $0x4ec] sm:$0xf]
        %v3745 = vld [vmem:[%s6 + $0x4f0] sm:$0xf]
        %v3746 = vld [vmem:[%s6 + $0x4f4] sm:$0xf]
        %v3747 = vld [vmem:[%s6 + $0x4f8] sm:$0xf]
        %v3748 = vld [vmem:[%s6 + $0x4fc] sm:$0xf]
        %v3749 = vld [vmem:[%s6 + $0x500] sm:$0xf]
        %v3750 = vld [vmem:[%s6 + $0x504] sm:$0xf]
        %v3751 = vld [vmem:[%s6 + $0x508] sm:$0xf]
        %v3752 = vld [vmem:[%s6 + $0x50c] sm:$0xf]
        %v3753 = vld [vmem:[%s6 + $0x510] sm:$0xf]
        %v3754 = vld [vmem:[%s6 + $0x514] sm:$0xf]
        %v3755 = vld [vmem:[%s6 + $0x518] sm:$0xf]
        %v3756 = vld [vmem:[%s6 + $0x51c] sm:$0xf]
        %v3757 = vld [vmem:[%s6 + $0x520] sm:$0xf]
        %v3758 = vld [vmem:[%s6 + $0x524] sm:$0xf]
        %v3759 = vld [vmem:[%s6 + $0x528] sm:$0xf]
        %v3760 = vld [vmem:[%s6 + $0x52c] sm:$0xf]
        %v3761 = vld [vmem:[%s6 + $0x530] sm:$0xf]
        %v3762 = vld [vmem:[%s6 + $0x534] sm:$0xf]
        %v3763 = vld [vmem:[%s6 + $0x538] sm:$0xf]
        %v3764 = vld [vmem:[%s6 + $0x53c] sm:$0xf]
        %v3765 = vld [vmem:[%s6 + $0x540] sm:$0xf]
        %v3766 = vld [vmem:[%s6 + $0x544] sm:$0xf]
        %v3767 = vld [vmem:[%s6 + $0x548] sm:$0xf]
        %v3768 = vld [vmem:[%s6 + $0x54c] sm:$0xf]
        %v3769 = vld [vmem:[%s6 + $0x550] sm:$0xf]
        %v3770 = vld [vmem:[%s6 + $0x554] sm:$0xf]
        %v3771 = vld [vmem:[%s6 + $0x558] sm:$0xf]
        %v3772 = vld [vmem:[%s6 + $0x55c] sm:$0xf]
        %v3773 = vld [vmem:[%s6 + $0x560] sm:$0xf]
        %v3774 = vld [vmem:[%s6 + $0x564] sm:$0xf]
        %v3775 = vld [vmem:[%s6 + $0x568] sm:$0xf]
        %v3776 = vld [vmem:[%s6 + $0x56c] sm:$0xf]
        %v3777 = vld [vmem:[%s6 + $0x570] sm:$0xf]
        %v3778 = vld [vmem:[%s6 + $0x574] sm:$0xf]
        %v3779 = vld [vmem:[%s6 + $0x578] sm:$0xf]
        %v3780 = vld [vmem:[%s6 + $0x57c] sm:$0xf]
        %v3781 = vld [vmem:[%s6 + $0x580] sm:$0xf]
        %v3782 = vld [vmem:[%s6 + $0x584] sm:$0xf]
        %v3783 = vld [vmem:[%s6 + $0x588] sm:$0xf]
        %v3784 = vld [vmem:[%s6 + $0x58c] sm:$0xf]
        %v3785 = vld [vmem:[%s6 + $0x590] sm:$0xf]
        %v3786 = vld [vmem:[%s6 + $0x594] sm:$0xf]
        %v3787 = vld [vmem:[%s6 + $0x598] sm:$0xf]
        %v3788 = vld [vmem:[%s6 + $0x59c] sm:$0xf]
        %v3789 = vld [vmem:[%s6 + $0x5a0] sm:$0xf]
        %v3790 = vld [vmem:[%s6 + $0x5a4] sm:$0xf]
        %v3791 = vld [vmem:[%s6 + $0x5a8] sm:$0xf]
        %v3792 = vld [vmem:[%s6 + $0x5ac] sm:$0xf]
        %v3793 = vld [vmem:[%s6 + $0x5b0] sm:$0xf]
        %v3794 = vld [vmem:[%s6 + $0x5b4] sm:$0xf]
        %v3795 = vld [vmem:[%s6 + $0x5b8] sm:$0xf]
        %v3796 = vld [vmem:[%s6 + $0x5bc] sm:$0xf]
        %v3797 = vld [vmem:[%s6 + $0x5c0] sm:$0xf]
        %v3798 = vld [vmem:[%s6 + $0x5c4] sm:$0xf]
        %v3799 = vld [vmem:[%s6 + $0x5c8] sm:$0xf]
        %v3800 = vld [vmem:[%s6 + $0x5cc] sm:$0xf]
        %v3801 = vld [vmem:[%s6 + $0x5d0] sm:$0xf]
        %v3802 = vld [vmem:[%s6 + $0x5d4] sm:$0xf]
        %v3803 = vld [vmem:[%s6 + $0x5d8] sm:$0xf]
        %v3804 = vld [vmem:[%s6 + $0x5dc] sm:$0xf]
        %v3805 = vld [vmem:[%s6 + $0x5e0] sm:$0xf]
        %v3806 = vld [vmem:[%s6 + $0x5e4] sm:$0xf]
        %v3807 = vld [vmem:[%s6 + $0x5e8] sm:$0xf]
        %v3808 = vld [vmem:[%s6 + $0x5ec] sm:$0xf]
        %v3809 = vld [vmem:[%s6 + $0x5f0] sm:$0xf]
        %v3810 = vld [vmem:[%s6 + $0x5f4] sm:$0xf]
        %v3811 = vld [vmem:[%s6 + $0x5f8] sm:$0xf]
        %v3812 = vld [vmem:[%s6 + $0x5fc] sm:$0xf]
        %v3941 = vunpack.c.l.b16 %v3685
        %v3942 = vunpack.c.l.b16 %v3686
        %v3943 = vunpack.c.l.b16 %v3687
        %v3944 = vunpack.c.l.b16 %v3688
        %v3945 = vunpack.c.l.b16 %v3689
        %v3946 = vunpack.c.l.b16 %v3690
        %v3947 = vunpack.c.l.b16 %v3691
        %v3948 = vunpack.c.l.b16 %v3692
        %v3949 = vunpack.c.l.b16 %v3693
        %v3950 = vunpack.c.l.b16 %v3694
        %v3951 = vunpack.c.l.b16 %v3695
        %v3952 = vunpack.c.l.b16 %v3696
        %v3953 = vunpack.c.l.b16 %v3697
        %v3954 = vunpack.c.l.b16 %v3698
        %v3955 = vunpack.c.l.b16 %v3699
        %v3956 = vunpack.c.l.b16 %v3700
        %v3957 = vunpack.c.l.b16 %v3701
        %v3958 = vunpack.c.l.b16 %v3702
        %v3959 = vunpack.c.l.b16 %v3703
        %v3960 = vunpack.c.l.b16 %v3704
        %v3961 = vunpack.c.l.b16 %v3705
        %v3962 = vunpack.c.l.b16 %v3706
        %v3963 = vunpack.c.l.b16 %v3707
        %v3964 = vunpack.c.l.b16 %v3708
        %v3965 = vunpack.c.l.b16 %v3709
        %v3966 = vunpack.c.l.b16 %v3710
        %v3967 = vunpack.c.l.b16 %v3711
        %v3968 = vunpack.c.l.b16 %v3712
        %v3969 = vunpack.c.l.b16 %v3713
        %v3970 = vunpack.c.l.b16 %v3714
        %v3971 = vunpack.c.l.b16 %v3715
        %v3972 = vunpack.c.l.b16 %v3716
        %v3973 = vunpack.c.l.b16 %v3717
        %v3974 = vunpack.c.l.b16 %v3718
        %v3975 = vunpack.c.l.b16 %v3719
        %v3976 = vunpack.c.l.b16 %v3720
        %v3977 = vunpack.c.l.b16 %v3721
        %v3978 = vunpack.c.l.b16 %v3722
        %v3979 = vunpack.c.l.b16 %v3723
        %v3980 = vunpack.c.l.b16 %v3724
        %v3981 = vunpack.c.l.b16 %v3725
        %v3982 = vunpack.c.l.b16 %v3726
        %v3983 = vunpack.c.l.b16 %v3727
        %v3984 = vunpack.c.l.b16 %v3728
        %v3985 = vunpack.c.l.b16 %v3729
        %v3986 = vunpack.c.l.b16 %v3730
        %v3987 = vunpack.c.l.b16 %v3731
        %v3988 = vunpack.c.l.b16 %v3732
        %v3989 = vunpack.c.l.b16 %v3733
        %v3990 = vunpack.c.l.b16 %v3734
        %v3991 = vunpack.c.l.b16 %v3735
        %v3992 = vunpack.c.l.b16 %v3736
        %v3993 = vunpack.c.l.b16 %v3737
        %v3994 = vunpack.c.l.b16 %v3738
        %v3995 = vunpack.c.l.b16 %v3739
        %v3996 = vunpack.c.l.b16 %v3740
        %v3997 = vunpack.c.l.b16 %v3741
        %v3998 = vunpack.c.l.b16 %v3742
        %v3999 = vunpack.c.l.b16 %v3743
        %v4000 = vunpack.c.l.b16 %v3744
        %v4001 = vunpack.c.l.b16 %v3745
        %v4002 = vunpack.c.l.b16 %v3746
        %v4003 = vunpack.c.l.b16 %v3747
        %v4004 = vunpack.c.l.b16 %v3748
        %v4005 = vunpack.c.l.b16 %v3749
        %v4006 = vunpack.c.l.b16 %v3750
        %v4007 = vunpack.c.l.b16 %v3751
        %v4008 = vunpack.c.l.b16 %v3752
        %v4009 = vunpack.c.l.b16 %v3753
        %v4010 = vunpack.c.l.b16 %v3754
        %v4011 = vunpack.c.l.b16 %v3755
        %v4012 = vunpack.c.l.b16 %v3756
        %v4013 = vunpack.c.l.b16 %v3757
        %v4014 = vunpack.c.l.b16 %v3758
        %v4015 = vunpack.c.l.b16 %v3759
        %v4016 = vunpack.c.l.b16 %v3760
        %v4017 = vunpack.c.l.b16 %v3761
        %v4018 = vunpack.c.l.b16 %v3762
        %v4019 = vunpack.c.l.b16 %v3763
        %v4020 = vunpack.c.l.b16 %v3764
        %v4021 = vunpack.c.l.b16 %v3765
        %v4022 = vunpack.c.l.b16 %v3766
        %v4023 = vunpack.c.l.b16 %v3767
        %v4024 = vunpack.c.l.b16 %v3768
        %v4025 = vunpack.c.l.b16 %v3769
        %v4026 = vunpack.c.l.b16 %v3770
        %v4027 = vunpack.c.l.b16 %v3771
        %v4028 = vunpack.c.l.b16 %v3772
        %v4029 = vunpack.c.l.b16 %v3773
        %v4030 = vunpack.c.l.b16 %v3774
        %v4031 = vunpack.c.l.b16 %v3775
        %v4032 = vunpack.c.l.b16 %v3776
        %v4033 = vunpack.c.l.b16 %v3777
        %v4034 = vunpack.c.l.b16 %v3778
        %v4035 = vunpack.c.l.b16 %v3779
        %v4036 = vunpack.c.l.b16 %v3780
        %v4037 = vunpack.c.l.b16 %v3781
        %v4038 = vunpack.c.l.b16 %v3782
        %v4039 = vunpack.c.l.b16 %v3783
        %v4040 = vunpack.c.l.b16 %v3784
        %v4041 = vunpack.c.l.b16 %v3785
        %v4042 = vunpack.c.l.b16 %v3786
        %v4043 = vunpack.c.l.b16 %v3787
        %v4044 = vunpack.c.l.b16 %v3788
        %v4045 = vunpack.c.l.b16 %v3789
        %v4046 = vunpack.c.l.b16 %v3790
        %v4047 = vunpack.c.l.b16 %v3791
        %v4048 = vunpack.c.l.b16 %v3792
        %v4049 = vunpack.c.l.b16 %v3793
        %v4050 = vunpack.c.l.b16 %v3794
        %v4051 = vunpack.c.l.b16 %v3795
        %v4052 = vunpack.c.l.b16 %v3796
        %v4053 = vunpack.c.l.b16 %v3797
        %v4054 = vunpack.c.l.b16 %v3798
        %v4055 = vunpack.c.l.b16 %v3799
        %v4056 = vunpack.c.l.b16 %v3800
        %v4057 = vunpack.c.l.b16 %v3801
        %v4058 = vunpack.c.l.b16 %v3802
        %v4059 = vunpack.c.l.b16 %v3803
        %v4060 = vunpack.c.l.b16 %v3804
        %v4061 = vunpack.c.l.b16 %v3805
        %v4062 = vunpack.c.l.b16 %v3806
        %v4063 = vunpack.c.l.b16 %v3807
        %v4064 = vunpack.c.l.b16 %v3808
        %v4065 = vunpack.c.l.b16 %v3809
        %v4066 = vunpack.c.l.b16 %v3810
        %v4067 = vunpack.c.l.b16 %v3811
        %v4068 = vunpack.c.l.b16 %v3812
        %v4069 = vpack.c.b16 %v3942, %v3941
        %v4070 = vpack.c.b16 %v3944, %v3943
        %v4071 = vpack.c.b16 %v3946, %v3945
        %v4072 = vpack.c.b16 %v3948, %v3947
        %v4073 = vpack.c.b16 %v3950, %v3949
        %v4074 = vpack.c.b16 %v3952, %v3951
        %v4075 = vpack.c.b16 %v3954, %v3953
        %v4076 = vpack.c.b16 %v3956, %v3955
        %v4077 = vpack.c.b16 %v3958, %v3957
        %v4078 = vpack.c.b16 %v3960, %v3959
        %v4079 = vpack.c.b16 %v3962, %v3961
        %v4080 = vpack.c.b16 %v3964, %v3963
        %v4081 = vpack.c.b16 %v3966, %v3965
        %v4082 = vpack.c.b16 %v3968, %v3967
        %v4083 = vpack.c.b16 %v3970, %v3969
        %v4084 = vpack.c.b16 %v3972, %v3971
        %v4085 = vpack.c.b16 %v3974, %v3973
        %v4086 = vpack.c.b16 %v3976, %v3975
        %v4087 = vpack.c.b16 %v3978, %v3977
        %v4088 = vpack.c.b16 %v3980, %v3979
        %v4089 = vpack.c.b16 %v3982, %v3981
        %v4090 = vpack.c.b16 %v3984, %v3983
        %v4091 = vpack.c.b16 %v3986, %v3985
        %v4092 = vpack.c.b16 %v3988, %v3987
        %v4093 = vpack.c.b16 %v3990, %v3989
        %v4094 = vpack.c.b16 %v3992, %v3991
        %v4095 = vpack.c.b16 %v3994, %v3993
        %v4096 = vpack.c.b16 %v3996, %v3995
        %v4097 = vpack.c.b16 %v3998, %v3997
        %v4098 = vpack.c.b16 %v4000, %v3999
        %v4099 = vpack.c.b16 %v4002, %v4001
        %v4100 = vpack.c.b16 %v4004, %v4003
        %v4101 = vpack.c.b16 %v4006, %v4005
        %v4102 = vpack.c.b16 %v4008, %v4007
        %v4103 = vpack.c.b16 %v4010, %v4009
        %v4104 = vpack.c.b16 %v4012, %v4011
        %v4105 = vpack.c.b16 %v4014, %v4013
        %v4106 = vpack.c.b16 %v4016, %v4015
        %v4107 = vpack.c.b16 %v4018, %v4017
        %v4108 = vpack.c.b16 %v4020, %v4019
        %v4109 = vpack.c.b16 %v4022, %v4021
        %v4110 = vpack.c.b16 %v4024, %v4023
        %v4111 = vpack.c.b16 %v4026, %v4025
        %v4112 = vpack.c.b16 %v4028, %v4027
        %v4113 = vpack.c.b16 %v4030, %v4029
        %v4114 = vpack.c.b16 %v4032, %v4031
        %v4115 = vpack.c.b16 %v4034, %v4033
        %v4116 = vpack.c.b16 %v4036, %v4035
        %v4117 = vpack.c.b16 %v4038, %v4037
        %v4118 = vpack.c.b16 %v4040, %v4039
        %v4119 = vpack.c.b16 %v4042, %v4041
        %v4120 = vpack.c.b16 %v4044, %v4043
        %v4121 = vpack.c.b16 %v4046, %v4045
        %v4122 = vpack.c.b16 %v4048, %v4047
        %v4123 = vpack.c.b16 %v4050, %v4049
        %v4124 = vpack.c.b16 %v4052, %v4051
        %v4125 = vpack.c.b16 %v4054, %v4053
        %v4126 = vpack.c.b16 %v4056, %v4055
        %v4127 = vpack.c.b16 %v4058, %v4057
        %v4128 = vpack.c.b16 %v4060, %v4059
        %v4129 = vpack.c.b16 %v4062, %v4061
        %v4130 = vpack.c.b16 %v4064, %v4063
        %v4131 = vpack.c.b16 %v4066, %v4065
        %v4132 = vpack.c.b16 %v4068, %v4067
        %4197 = vmatprep.subr.bf16.mxu0 0
        %4198 = vmatpush1.bf16.msra.mxu0 %v4076
        %4199 = vmatprep.subr.bf16.mxu0 0
        %4200 = vmatpush1.bf16.msra.mxu0 %v4075
        %4201 = vmatprep.subr.bf16.mxu0 0
        %4202 = vmatpush1.bf16.msra.mxu0 %v4074
        %4203 = vmatprep.subr.bf16.mxu0 0
        %4204 = vmatpush1.bf16.msra.mxu0 %v4073
        %4205 = vmatprep.subr.bf16.mxu0 0
        %4206 = vmatpush1.bf16.msra.mxu0 %v4072
        %4207 = vmatprep.subr.bf16.mxu0 0
        %4208 = vmatpush1.bf16.msra.mxu0 %v4071
        %4209 = vmatprep.subr.bf16.mxu0 0
        %4210 = vmatpush1.bf16.msra.mxu0 %v4070
        %4211 = vmatprep.subr.bf16.mxu0 0
        %4212 = vmatpush1.bf16.msra.mxu0 %v4069
        %4213 = vmatprep.subr.bf16.mxu0 0
        %4214 = vmatpush2.bf16.msra.mxu0 %v4084
        %4215 = vmatprep.subr.bf16.mxu0 0
        %4216 = vmatpush2.bf16.msra.mxu0 %v4083
        %4217 = vmatprep.subr.bf16.mxu0 0
        %4218 = vmatpush2.bf16.msra.mxu0 %v4082
        %4219 = vmatprep.subr.bf16.mxu0 0
        %4220 = vmatpush2.bf16.msra.mxu0 %v4081
        %4221 = vmatprep.subr.bf16.mxu0 0
        %4222 = vmatpush2.bf16.msra.mxu0 %v4080
        %4223 = vmatprep.subr.bf16.mxu0 0
        %4224 = vmatpush2.bf16.msra.mxu0 %v4079
        %4225 = vmatprep.subr.bf16.mxu0 0
        %4226 = vmatpush2.bf16.msra.mxu0 %v4078
        %4227 = vmatprep.subr.bf16.mxu0 0
        %4228 = vmatpush2.bf16.msra.mxu0 %v4077
        %4229 = vmatprep.mubr.bf16.mxu0 %v3678
        %4230 = vmatmul.mubr.bf16.gmra.mxu0 %v3677
        %v4231 = vpop.f32.mrf.mxu0
        %v4232 = vadd.f32 0.0, %v4231
        %v4233 = vpop.f32.mrf.mxu0
        %v4234 = vpop.f32.mrf.mxu0
        %v4235 = vadd.f32 0.0, %v4234
        %v4236 = vpop.f32.mrf.mxu0
        %4237 = vdwg.mxu0
        %4238 = vmatprep.subr.bf16.mxu0 0
        %4239 = vmatpush1.bf16.msra.mxu0 %v4092
        %4240 = vmatprep.subr.bf16.mxu0 0
        %4241 = vmatpush1.bf16.msra.mxu0 %v4091
        %4242 = vmatprep.subr.bf16.mxu0 0
        %4243 = vmatpush1.bf16.msra.mxu0 %v4090
        %4244 = vmatprep.subr.bf16.mxu0 0
        %4245 = vmatpush1.bf16.msra.mxu0 %v4089
        %4246 = vmatprep.subr.bf16.mxu0 0
        %4247 = vmatpush1.bf16.msra.mxu0 %v4088
        %4248 = vmatprep.subr.bf16.mxu0 0
        %4249 = vmatpush1.bf16.msra.mxu0 %v4087
        %4250 = vmatprep.subr.bf16.mxu0 0
        %4251 = vmatpush1.bf16.msra.mxu0 %v4086
        %4252 = vmatprep.subr.bf16.mxu0 0
        %4253 = vmatpush1.bf16.msra.mxu0 %v4085
        %4254 = vmatprep.subr.bf16.mxu0 0
        %4255 = vmatpush2.bf16.msra.mxu0 %v4100
        %4256 = vmatprep.subr.bf16.mxu0 0
        %4257 = vmatpush2.bf16.msra.mxu0 %v4099
        %4258 = vmatprep.subr.bf16.mxu0 0
        %4259 = vmatpush2.bf16.msra.mxu0 %v4098
        %4260 = vmatprep.subr.bf16.mxu0 0
        %4261 = vmatpush2.bf16.msra.mxu0 %v4097
        %4262 = vmatprep.subr.bf16.mxu0 0
        %4263 = vmatpush2.bf16.msra.mxu0 %v4096
        %4264 = vmatprep.subr.bf16.mxu0 0
        %4265 = vmatpush2.bf16.msra.mxu0 %v4095
        %4266 = vmatprep.subr.bf16.mxu0 0
        %4267 = vmatpush2.bf16.msra.mxu0 %v4094
        %4268 = vmatprep.subr.bf16.mxu0 0
        %4269 = vmatpush2.bf16.msra.mxu0 %v4093
        %4270 = vmatprep.mubr.bf16.mxu0 %v3680
        %4271 = vmatmul.mubr.bf16.gmra.mxu0 %v3679
        %v4272 = vpop.f32.mrf.mxu0
        %v4273 = vadd.f32 %v4232, %v4272
        %v4274 = vpop.f32.mrf.mxu0
        %v4275 = vpop.f32.mrf.mxu0
        %v4276 = vadd.f32 %v4235, %v4275
        %v4277 = vpop.f32.mrf.mxu0
        %4278 = vdwg.mxu0
        %4279 = vmatprep.subr.bf16.mxu0 0
        %4280 = vmatpush1.bf16.msra.mxu0 %v4108
        %4281 = vmatprep.subr.bf16.mxu0 0
        %4282 = vmatpush1.bf16.msra.mxu0 %v4107
        %4283 = vmatprep.subr.bf16.mxu0 0
        %4284 = vmatpush1.bf16.msra.mxu0 %v4106
        %4285 = vmatprep.subr.bf16.mxu0 0
        %4286 = vmatpush1.bf16.msra.mxu0 %v4105
        %4287 = vmatprep.subr.bf16.mxu0 0
        %4288 = vmatpush1.bf16.msra.mxu0 %v4104
        %4289 = vmatprep.subr.bf16.mxu0 0
        %4290 = vmatpush1.bf16.msra.mxu0 %v4103
        %4291 = vmatprep.subr.bf16.mxu0 0
        %4292 = vmatpush1.bf16.msra.mxu0 %v4102
        %4293 = vmatprep.subr.bf16.mxu0 0
        %4294 = vmatpush1.bf16.msra.mxu0 %v4101
        %4295 = vmatprep.subr.bf16.mxu0 0
        %4296 = vmatpush2.bf16.msra.mxu0 %v4116
        %4297 = vmatprep.subr.bf16.mxu0 0
        %4298 = vmatpush2.bf16.msra.mxu0 %v4115
        %4299 = vmatprep.subr.bf16.mxu0 0
        %4300 = vmatpush2.bf16.msra.mxu0 %v4114
        %4301 = vmatprep.subr.bf16.mxu0 0
        %4302 = vmatpush2.bf16.msra.mxu0 %v4113
        %4303 = vmatprep.subr.bf16.mxu0 0
        %4304 = vmatpush2.bf16.msra.mxu0 %v4112
        %4305 = vmatprep.subr.bf16.mxu0 0
        %4306 = vmatpush2.bf16.msra.mxu0 %v4111
        %4307 = vmatprep.subr.bf16.mxu0 0
        %4308 = vmatpush2.bf16.msra.mxu0 %v4110
        %4309 = vmatprep.subr.bf16.mxu0 0
        %4310 = vmatpush2.bf16.msra.mxu0 %v4109
        %4311 = vmatprep.mubr.bf16.mxu0 %v3682
        %4312 = vmatmul.mubr.bf16.gmra.mxu0 %v3681
        %v4313 = vpop.f32.mrf.mxu0
        %v4314 = vadd.f32 %v4273, %v4313
        %v4315 = vpop.f32.mrf.mxu0
        %v4316 = vpop.f32.mrf.mxu0
        %v4317 = vadd.f32 %v4276, %v4316
        %v4318 = vpop.f32.mrf.mxu0
        %4319 = vdwg.mxu0
        %4320 = vmatprep.subr.bf16.mxu0 0
        %4321 = vmatpush1.bf16.msra.mxu0 %v4124
        %4322 = vmatprep.subr.bf16.mxu0 0
        %4323 = vmatpush1.bf16.msra.mxu0 %v4123
        %4324 = vmatprep.subr.bf16.mxu0 0
        %4325 = vmatpush1.bf16.msra.mxu0 %v4122
        %4326 = vmatprep.subr.bf16.mxu0 0
        %4327 = vmatpush1.bf16.msra.mxu0 %v4121
        %4328 = vmatprep.subr.bf16.mxu0 0
        %4329 = vmatpush1.bf16.msra.mxu0 %v4120
        %4330 = vmatprep.subr.bf16.mxu0 0
        %4331 = vmatpush1.bf16.msra.mxu0 %v4119
        %4332 = vmatprep.subr.bf16.mxu0 0
        %4333 = vmatpush1.bf16.msra.mxu0 %v4118
        %4334 = vmatprep.subr.bf16.mxu0 0
        %4335 = vmatpush1.bf16.msra.mxu0 %v4117
        %4336 = vmatprep.subr.bf16.mxu0 0
        %4337 = vmatpush2.bf16.msra.mxu0 %v4132
        %4338 = vmatprep.subr.bf16.mxu0 0
        %4339 = vmatpush2.bf16.msra.mxu0 %v4131
        %4340 = vmatprep.subr.bf16.mxu0 0
        %4341 = vmatpush2.bf16.msra.mxu0 %v4130
        %4342 = vmatprep.subr.bf16.mxu0 0
        %4343 = vmatpush2.bf16.msra.mxu0 %v4129
        %4344 = vmatprep.subr.bf16.mxu0 0
        %4345 = vmatpush2.bf16.msra.mxu0 %v4128
        %4346 = vmatprep.subr.bf16.mxu0 0
        %4347 = vmatpush2.bf16.msra.mxu0 %v4127
        %4348 = vmatprep.subr.bf16.mxu0 0
        %4349 = vmatpush2.bf16.msra.mxu0 %v4126
        %4350 = vmatprep.subr.bf16.mxu0 0
        %4351 = vmatpush2.bf16.msra.mxu0 %v4125
        %4352 = vmatprep.mubr.bf16.mxu0 %v3684
        %4353 = vmatmul.mubr.bf16.gmra.mxu0 %v3683
        %v4354 = vpop.f32.mrf.mxu0
        %v4355 = vadd.f32 %v4314, %v4354
        %v4356 = vpop.f32.mrf.mxu0
        %v4357 = vpop.f32.mrf.mxu0
        %v4358 = vadd.f32 %v4317, %v4357
        %v4359 = vpop.f32.mrf.mxu0
        %4360 = vdwg.mxu0
        %v4361 = vadd.f32 %v3296, %v4355
        %v4362 = vadd.f32 %v3297, %v4358
        %v4363 = vld [vmem:[%s441 + $0xc] sm:$0xf]
        %v4364 = vld [vmem:[%s441 + $0x1c] sm:$0xf]
        %s4365 = scalar_lea.vmem %s391, 24 [#allocation2]
        %v4366 = vld [vmem:[%s4365] sm:$0xf]
        %v4367 = vld [vmem:[%s4365 + $0x4] sm:$0xf]
        %v4370 = vunpack.c.l.b16 %v4366
        %v4371 = vunpack.c.l.b16 %v4367
        %v4372 = vpack.c.b16 %v4371, %v4370
        %v4374 = vsel %vm816, %v4372, 0
        %4376 = vmatprep.subr.bf16.mxu0 0
        %4377 = vmatpush1.bf16.msra.mxu0 0
        %4378 = vmatprep.subr.bf16.mxu0 0
        %4379 = vmatpush1.bf16.msra.mxu0 0
        %4380 = vmatprep.subr.bf16.mxu0 0
        %4381 = vmatpush1.bf16.msra.mxu0 0
        %4382 = vmatprep.subr.bf16.mxu0 0
        %4383 = vmatpush1.bf16.msra.mxu0 0
        %4384 = vmatprep.subr.bf16.mxu0 0
        %4385 = vmatpush1.bf16.msra.mxu0 0
        %4386 = vmatprep.subr.bf16.mxu0 0
        %4387 = vmatpush1.bf16.msra.mxu0 0
        %4388 = vmatprep.subr.bf16.mxu0 %v793
        %4389 = vmatpush1.bf16.msra.mxu0 %v792
        %4390 = vmatprep.subr.bf16.mxu0 %v785
        %4391 = vmatpush1.bf16.msra.mxu0 %v784
        %4392 = vmatprep.subr.bf16.mxu0 0
        %4393 = vmatpush2.bf16.msra.mxu0 0
        %4394 = vmatprep.subr.bf16.mxu0 0
        %4395 = vmatpush2.bf16.msra.mxu0 0
        %4396 = vmatprep.subr.bf16.mxu0 0
        %4397 = vmatpush2.bf16.msra.mxu0 0
        %4398 = vmatprep.subr.bf16.mxu0 0
        %4399 = vmatpush2.bf16.msra.mxu0 0
        %4400 = vmatprep.subr.bf16.mxu0 0
        %4401 = vmatpush2.bf16.msra.mxu0 0
        %4402 = vmatprep.subr.bf16.mxu0 0
        %4403 = vmatpush2.bf16.msra.mxu0 0
        %4404 = vmatprep.subr.bf16.mxu0 0
        %4405 = vmatpush2.bf16.msra.mxu0 0
        %4406 = vmatprep.subr.bf16.mxu0 0
        %4407 = vmatpush2.bf16.msra.mxu0 0
        %4408 = vmatprep.mubr.bf16.mxu0 0
        %4409 = vmatmul.mubr.bf16.gmra.mxu0 %v4374
        %v4410 = vpop.f32.mrf.mxu0
        %v4411 = vadd.f32 0.0, %v4410
        %v4412 = vpop.f32.mrf.mxu0
        %v4413 = vadd.f32 0.0, %v4412
        %v4414 = vpop.f32.mrf.mxu0
        %v4415 = vadd.f32 0.0, %v4414
        %v4416 = vpop.f32.mrf.mxu0
        %v4417 = vadd.f32 0.0, %v4416
        %4418 = vdwg.mxu0
        %4419 = vmatprep.subr.bf16.mxu0 0
        %4420 = vmatpush1.bf16.msra.mxu0 0
        %4421 = vmatprep.subr.bf16.mxu0 0
        %4422 = vmatpush1.bf16.msra.mxu0 0
        %4423 = vmatprep.subr.bf16.mxu0 0
        %4424 = vmatpush1.bf16.msra.mxu0 0
        %4425 = vmatprep.subr.bf16.mxu0 0
        %4426 = vmatpush1.bf16.msra.mxu0 0
        %4427 = vmatprep.subr.bf16.mxu0 0
        %4428 = vmatpush1.bf16.msra.mxu0 0
        %4429 = vmatprep.subr.bf16.mxu0 0
        %4430 = vmatpush1.bf16.msra.mxu0 0
        %4431 = vmatprep.subr.bf16.mxu0 %v795
        %4432 = vmatpush1.bf16.msra.mxu0 %v794
        %4433 = vmatprep.subr.bf16.mxu0 %v787
        %4434 = vmatpush1.bf16.msra.mxu0 %v786
        %4435 = vmatprep.subr.bf16.mxu0 0
        %4436 = vmatpush2.bf16.msra.mxu0 0
        %4437 = vmatprep.subr.bf16.mxu0 0
        %4438 = vmatpush2.bf16.msra.mxu0 0
        %4439 = vmatprep.subr.bf16.mxu0 0
        %4440 = vmatpush2.bf16.msra.mxu0 0
        %4441 = vmatprep.subr.bf16.mxu0 0
        %4442 = vmatpush2.bf16.msra.mxu0 0
        %4443 = vmatprep.subr.bf16.mxu0 0
        %4444 = vmatpush2.bf16.msra.mxu0 0
        %4445 = vmatprep.subr.bf16.mxu0 0
        %4446 = vmatpush2.bf16.msra.mxu0 0
        %4447 = vmatprep.subr.bf16.mxu0 0
        %4448 = vmatpush2.bf16.msra.mxu0 0
        %4449 = vmatprep.subr.bf16.mxu0 0
        %4450 = vmatpush2.bf16.msra.mxu0 0
        %4451 = vmatprep.mubr.bf16.mxu0 0
        %4452 = vmatmul.mubr.bf16.gmra.mxu0 %v4374
        %v4453 = vpop.f32.mrf.mxu0
        %v4454 = vadd.f32 0.0, %v4453
        %v4455 = vpop.f32.mrf.mxu0
        %v4456 = vadd.f32 0.0, %v4455
        %v4457 = vpop.f32.mrf.mxu0
        %v4458 = vadd.f32 0.0, %v4457
        %v4459 = vpop.f32.mrf.mxu0
        %v4460 = vadd.f32 0.0, %v4459
        %4461 = vdwg.mxu0
        %4462 = vmatprep.subr.bf16.mxu0 0
        %4463 = vmatpush1.bf16.msra.mxu0 0
        %4464 = vmatprep.subr.bf16.mxu0 0
        %4465 = vmatpush1.bf16.msra.mxu0 0
        %4466 = vmatprep.subr.bf16.mxu0 0
        %4467 = vmatpush1.bf16.msra.mxu0 0
        %4468 = vmatprep.subr.bf16.mxu0 0
        %4469 = vmatpush1.bf16.msra.mxu0 0
        %4470 = vmatprep.subr.bf16.mxu0 0
        %4471 = vmatpush1.bf16.msra.mxu0 0
        %4472 = vmatprep.subr.bf16.mxu0 0
        %4473 = vmatpush1.bf16.msra.mxu0 0
        %4474 = vmatprep.subr.bf16.mxu0 %v797
        %4475 = vmatpush1.bf16.msra.mxu0 %v796
        %4476 = vmatprep.subr.bf16.mxu0 %v789
        %4477 = vmatpush1.bf16.msra.mxu0 %v788
        %4478 = vmatprep.subr.bf16.mxu0 0
        %4479 = vmatpush2.bf16.msra.mxu0 0
        %4480 = vmatprep.subr.bf16.mxu0 0
        %4481 = vmatpush2.bf16.msra.mxu0 0
        %4482 = vmatprep.subr.bf16.mxu0 0
        %4483 = vmatpush2.bf16.msra.mxu0 0
        %4484 = vmatprep.subr.bf16.mxu0 0
        %4485 = vmatpush2.bf16.msra.mxu0 0
        %4486 = vmatprep.subr.bf16.mxu0 0
        %4487 = vmatpush2.bf16.msra.mxu0 0
        %4488 = vmatprep.subr.bf16.mxu0 0
        %4489 = vmatpush2.bf16.msra.mxu0 0
        %4490 = vmatprep.subr.bf16.mxu0 0
        %4491 = vmatpush2.bf16.msra.mxu0 0
        %4492 = vmatprep.subr.bf16.mxu0 0
        %4493 = vmatpush2.bf16.msra.mxu0 0
        %4494 = vmatprep.mubr.bf16.mxu0 0
        %4495 = vmatmul.mubr.bf16.gmra.mxu0 %v4374
        %v4496 = vpop.f32.mrf.mxu0
        %v4497 = vadd.f32 0.0, %v4496
        %v4498 = vpop.f32.mrf.mxu0
        %v4499 = vadd.f32 0.0, %v4498
        %v4500 = vpop.f32.mrf.mxu0
        %v4501 = vadd.f32 0.0, %v4500
        %v4502 = vpop.f32.mrf.mxu0
        %v4503 = vadd.f32 0.0, %v4502
        %4504 = vdwg.mxu0
        %4505 = vmatprep.subr.bf16.mxu0 0
        %4506 = vmatpush1.bf16.msra.mxu0 0
        %4507 = vmatprep.subr.bf16.mxu0 0
        %4508 = vmatpush1.bf16.msra.mxu0 0
        %4509 = vmatprep.subr.bf16.mxu0 0
        %4510 = vmatpush1.bf16.msra.mxu0 0
        %4511 = vmatprep.subr.bf16.mxu0 0
        %4512 = vmatpush1.bf16.msra.mxu0 0
        %4513 = vmatprep.subr.bf16.mxu0 0
        %4514 = vmatpush1.bf16.msra.mxu0 0
        %4515 = vmatprep.subr.bf16.mxu0 0
        %4516 = vmatpush1.bf16.msra.mxu0 0
        %4517 = vmatprep.subr.bf16.mxu0 %v799
        %4518 = vmatpush1.bf16.msra.mxu0 %v798
        %4519 = vmatprep.subr.bf16.mxu0 %v791
        %4520 = vmatpush1.bf16.msra.mxu0 %v790
        %4521 = vmatprep.subr.bf16.mxu0 0
        %4522 = vmatpush2.bf16.msra.mxu0 0
        %4523 = vmatprep.subr.bf16.mxu0 0
        %4524 = vmatpush2.bf16.msra.mxu0 0
        %4525 = vmatprep.subr.bf16.mxu0 0
        %4526 = vmatpush2.bf16.msra.mxu0 0
        %4527 = vmatprep.subr.bf16.mxu0 0
        %4528 = vmatpush2.bf16.msra.mxu0 0
        %4529 = vmatprep.subr.bf16.mxu0 0
        %4530 = vmatpush2.bf16.msra.mxu0 0
        %4531 = vmatprep.subr.bf16.mxu0 0
        %4532 = vmatpush2.bf16.msra.mxu0 0
        %4533 = vmatprep.subr.bf16.mxu0 0
        %4534 = vmatpush2.bf16.msra.mxu0 0
        %4535 = vmatprep.subr.bf16.mxu0 0
        %4536 = vmatpush2.bf16.msra.mxu0 0
        %4537 = vmatprep.mubr.bf16.mxu0 0
        %4538 = vmatmul.mubr.bf16.gmra.mxu0 %v4374
        %v4539 = vpop.f32.mrf.mxu0
        %v4540 = vadd.f32 0.0, %v4539
        %v4541 = vpop.f32.mrf.mxu0
        %v4542 = vadd.f32 0.0, %v4541
        %v4543 = vpop.f32.mrf.mxu0
        %v4544 = vadd.f32 0.0, %v4543
        %v4545 = vpop.f32.mrf.mxu0
        %v4546 = vadd.f32 0.0, %v4545
        %4547 = vdwg.mxu0
        %v4550 = vunpack.c.l.b16 %v4363
        %v4551 = vunpack.c.l.b16 %v4364
        %v4552 = vpack.c.b16 %v4551, %v4550
        %4554 = vmatprep.subr.bf16.mxu0 %v1247
        %4555 = vmatpush1.bf16.msra.mxu0 %v1246
        %4556 = vmatprep.subr.bf16.mxu0 %v1239
        %4557 = vmatpush1.bf16.msra.mxu0 %v1238
        %4558 = vmatprep.subr.bf16.mxu0 %v1231
        %4559 = vmatpush1.bf16.msra.mxu0 %v1230
        %4560 = vmatprep.subr.bf16.mxu0 %v1223
        %4561 = vmatpush1.bf16.msra.mxu0 %v1222
        %4562 = vmatprep.subr.bf16.mxu0 %v1215
        %4563 = vmatpush1.bf16.msra.mxu0 %v1214
        %4564 = vmatprep.subr.bf16.mxu0 %v1207
        %4565 = vmatpush1.bf16.msra.mxu0 %v1206
        %4566 = vmatprep.subr.bf16.mxu0 %v1199
        %4567 = vmatpush1.bf16.msra.mxu0 %v1198
        %4568 = vmatprep.subr.bf16.mxu0 %v1191
        %4569 = vmatpush1.bf16.msra.mxu0 %v1190
        %4570 = vmatprep.subr.bf16.mxu0 0
        %4571 = vmatpush2.bf16.msra.mxu0 0
        %4572 = vmatprep.subr.bf16.mxu0 0
        %4573 = vmatpush2.bf16.msra.mxu0 0
        %4574 = vmatprep.subr.bf16.mxu0 0
        %4575 = vmatpush2.bf16.msra.mxu0 0
        %4576 = vmatprep.subr.bf16.mxu0 0
        %4577 = vmatpush2.bf16.msra.mxu0 0
        %4578 = vmatprep.subr.bf16.mxu0 0
        %4579 = vmatpush2.bf16.msra.mxu0 0
        %4580 = vmatprep.subr.bf16.mxu0 0
        %4581 = vmatpush2.bf16.msra.mxu0 0
        %4582 = vmatprep.subr.bf16.mxu0 0
        %4583 = vmatpush2.bf16.msra.mxu0 0
        %4584 = vmatprep.subr.bf16.mxu0 0
        %4585 = vmatpush2.bf16.msra.mxu0 0
        %4586 = vmatprep.mubr.bf16.mxu0 0
        %4587 = vmatmul.mubr.bf16.gmra.mxu0 %v4552
        %v4588 = vpop.f32.mrf.mxu0
        %v4589 = vadd.f32 %v4411, %v4588
        %v4590 = vpop.f32.mrf.mxu0
        %v4591 = vadd.f32 %v4413, %v4590
        %v4592 = vpop.f32.mrf.mxu0
        %v4593 = vadd.f32 %v4415, %v4592
        %v4594 = vpop.f32.mrf.mxu0
        %v4595 = vadd.f32 %v4417, %v4594
        %4596 = vdwg.mxu0
        %4597 = vmatprep.subr.bf16.mxu0 %v1249
        %4598 = vmatpush1.bf16.msra.mxu0 %v1248
        %4599 = vmatprep.subr.bf16.mxu0 %v1241
        %4600 = vmatpush1.bf16.msra.mxu0 %v1240
        %4601 = vmatprep.subr.bf16.mxu0 %v1233
        %4602 = vmatpush1.bf16.msra.mxu0 %v1232
        %4603 = vmatprep.subr.bf16.mxu0 %v1225
        %4604 = vmatpush1.bf16.msra.mxu0 %v1224
        %4605 = vmatprep.subr.bf16.mxu0 %v1217
        %4606 = vmatpush1.bf16.msra.mxu0 %v1216
        %4607 = vmatprep.subr.bf16.mxu0 %v1209
        %4608 = vmatpush1.bf16.msra.mxu0 %v1208
        %4609 = vmatprep.subr.bf16.mxu0 %v1201
        %4610 = vmatpush1.bf16.msra.mxu0 %v1200
        %4611 = vmatprep.subr.bf16.mxu0 %v1193
        %4612 = vmatpush1.bf16.msra.mxu0 %v1192
        %4613 = vmatprep.subr.bf16.mxu0 0
        %4614 = vmatpush2.bf16.msra.mxu0 0
        %4615 = vmatprep.subr.bf16.mxu0 0
        %4616 = vmatpush2.bf16.msra.mxu0 0
        %4617 = vmatprep.subr.bf16.mxu0 0
        %4618 = vmatpush2.bf16.msra.mxu0 0
        %4619 = vmatprep.subr.bf16.mxu0 0
        %4620 = vmatpush2.bf16.msra.mxu0 0
        %4621 = vmatprep.subr.bf16.mxu0 0
        %4622 = vmatpush2.bf16.msra.mxu0 0
        %4623 = vmatprep.subr.bf16.mxu0 0
        %4624 = vmatpush2.bf16.msra.mxu0 0
        %4625 = vmatprep.subr.bf16.mxu0 0
        %4626 = vmatpush2.bf16.msra.mxu0 0
        %4627 = vmatprep.subr.bf16.mxu0 0
        %4628 = vmatpush2.bf16.msra.mxu0 0
        %4629 = vmatprep.mubr.bf16.mxu0 0
        %4630 = vmatmul.mubr.bf16.gmra.mxu0 %v4552
        %v4631 = vpop.f32.mrf.mxu0
        %v4632 = vadd.f32 %v4454, %v4631
        %v4633 = vpop.f32.mrf.mxu0
        %v4634 = vadd.f32 %v4456, %v4633
        %v4635 = vpop.f32.mrf.mxu0
        %v4636 = vadd.f32 %v4458, %v4635
        %v4637 = vpop.f32.mrf.mxu0
        %v4638 = vadd.f32 %v4460, %v4637
        %4639 = vdwg.mxu0
        %4640 = vmatprep.subr.bf16.mxu0 %v1251
        %4641 = vmatpush1.bf16.msra.mxu0 %v1250
        %4642 = vmatprep.subr.bf16.mxu0 %v1243
        %4643 = vmatpush1.bf16.msra.mxu0 %v1242
        %4644 = vmatprep.subr.bf16.mxu0 %v1235
        %4645 = vmatpush1.bf16.msra.mxu0 %v1234
        %4646 = vmatprep.subr.bf16.mxu0 %v1227
        %4647 = vmatpush1.bf16.msra.mxu0 %v1226
        %4648 = vmatprep.subr.bf16.mxu0 %v1219
        %4649 = vmatpush1.bf16.msra.mxu0 %v1218
        %4650 = vmatprep.subr.bf16.mxu0 %v1211
        %4651 = vmatpush1.bf16.msra.mxu0 %v1210
        %4652 = vmatprep.subr.bf16.mxu0 %v1203
        %4653 = vmatpush1.bf16.msra.mxu0 %v1202
        %4654 = vmatprep.subr.bf16.mxu0 %v1195
        %4655 = vmatpush1.bf16.msra.mxu0 %v1194
        %4656 = vmatprep.subr.bf16.mxu0 0
        %4657 = vmatpush2.bf16.msra.mxu0 0
        %4658 = vmatprep.subr.bf16.mxu0 0
        %4659 = vmatpush2.bf16.msra.mxu0 0
        %4660 = vmatprep.subr.bf16.mxu0 0
        %4661 = vmatpush2.bf16.msra.mxu0 0
        %4662 = vmatprep.subr.bf16.mxu0 0
        %4663 = vmatpush2.bf16.msra.mxu0 0
        %4664 = vmatprep.subr.bf16.mxu0 0
        %4665 = vmatpush2.bf16.msra.mxu0 0
        %4666 = vmatprep.subr.bf16.mxu0 0
        %4667 = vmatpush2.bf16.msra.mxu0 0
        %4668 = vmatprep.subr.bf16.mxu0 0
        %4669 = vmatpush2.bf16.msra.mxu0 0
        %4670 = vmatprep.subr.bf16.mxu0 0
        %4671 = vmatpush2.bf16.msra.mxu0 0
        %4672 = vmatprep.mubr.bf16.mxu0 0
        %4673 = vmatmul.mubr.bf16.gmra.mxu0 %v4552
        %v4674 = vpop.f32.mrf.mxu0
        %v4675 = vadd.f32 %v4497, %v4674
        %v4676 = vpop.f32.mrf.mxu0
        %v4677 = vadd.f32 %v4499, %v4676
        %v4678 = vpop.f32.mrf.mxu0
        %v4679 = vadd.f32 %v4501, %v4678
        %v4680 = vpop.f32.mrf.mxu0
        %v4681 = vadd.f32 %v4503, %v4680
        %4682 = vdwg.mxu0
        %4683 = vmatprep.subr.bf16.mxu0 %v1253
        %4684 = vmatpush1.bf16.msra.mxu0 %v1252
        %4685 = vmatprep.subr.bf16.mxu0 %v1245
        %4686 = vmatpush1.bf16.msra.mxu0 %v1244
        %4687 = vmatprep.subr.bf16.mxu0 %v1237
        %4688 = vmatpush1.bf16.msra.mxu0 %v1236
        %4689 = vmatprep.subr.bf16.mxu0 %v1229
        %4690 = vmatpush1.bf16.msra.mxu0 %v1228
        %4691 = vmatprep.subr.bf16.mxu0 %v1221
        %4692 = vmatpush1.bf16.msra.mxu0 %v1220
        %4693 = vmatprep.subr.bf16.mxu0 %v1213
        %4694 = vmatpush1.bf16.msra.mxu0 %v1212
        %4695 = vmatprep.subr.bf16.mxu0 %v1205
        %4696 = vmatpush1.bf16.msra.mxu0 %v1204
        %4697 = vmatprep.subr.bf16.mxu0 %v1197
        %4698 = vmatpush1.bf16.msra.mxu0 %v1196
        %4699 = vmatprep.subr.bf16.mxu0 0
        %4700 = vmatpush2.bf16.msra.mxu0 0
        %4701 = vmatprep.subr.bf16.mxu0 0
        %4702 = vmatpush2.bf16.msra.mxu0 0
        %4703 = vmatprep.subr.bf16.mxu0 0
        %4704 = vmatpush2.bf16.msra.mxu0 0
        %4705 = vmatprep.subr.bf16.mxu0 0
        %4706 = vmatpush2.bf16.msra.mxu0 0
        %4707 = vmatprep.subr.bf16.mxu0 0
        %4708 = vmatpush2.bf16.msra.mxu0 0
        %4709 = vmatprep.subr.bf16.mxu0 0
        %4710 = vmatpush2.bf16.msra.mxu0 0
        %4711 = vmatprep.subr.bf16.mxu0 0
        %4712 = vmatpush2.bf16.msra.mxu0 0
        %4713 = vmatprep.subr.bf16.mxu0 0
        %4714 = vmatpush2.bf16.msra.mxu0 0
        %4715 = vmatprep.mubr.bf16.mxu0 0
        %4716 = vmatmul.mubr.bf16.gmra.mxu0 %v4552
        %v4717 = vpop.f32.mrf.mxu0
        %v4718 = vadd.f32 %v4540, %v4717
        %v4719 = vpop.f32.mrf.mxu0
        %v4720 = vadd.f32 %v4542, %v4719
        %v4721 = vpop.f32.mrf.mxu0
        %v4722 = vadd.f32 %v4544, %v4721
        %v4723 = vpop.f32.mrf.mxu0
        %v4724 = vadd.f32 %v4546, %v4723
        %4725 = vdwg.mxu0
        %v4726 = vadd.f32 %v4589, %v1494
        %v4727 = vadd.f32 %v4591, %v1498
        %v4728 = vadd.f32 %v4632, %v1502
        %v4729 = vadd.f32 %v4634, %v1506
        %v4730 = vadd.f32 %v4675, %v1510
        %v4731 = vadd.f32 %v4677, %v1514
        %v4732 = vadd.f32 %v4718, %v1518
        %v4733 = vadd.f32 %v4720, %v1522
        %v4734 = vadd.f32 %v4593, %v1494
        %v4735 = vadd.f32 %v4595, %v1498
        %v4736 = vadd.f32 %v4636, %v1502
        %v4737 = vadd.f32 %v4638, %v1506
        %v4738 = vadd.f32 %v4679, %v1510
        %v4739 = vadd.f32 %v4681, %v1514
        %v4740 = vadd.f32 %v4722, %v1518
        %v4741 = vadd.f32 %v4724, %v1522
        %v4742 = vpack.c.bf16 %v4734, %v4726
        %v4743 = vpack.c.bf16 %v4735, %v4727
        %v4744 = vpack.c.bf16 %v4736, %v4728
        %v4745 = vpack.c.bf16 %v4737, %v4729
        %v4746 = vpack.c.bf16 %v4738, %v4730
        %v4747 = vpack.c.bf16 %v4739, %v4731
        %v4748 = vpack.c.bf16 %v4740, %v4732
        %v4749 = vpack.c.bf16 %v4741, %v4733
        %v4750 = vld [vmem:[%s6 + $0x600] sm:$0xf]
        %v4751 = vld [vmem:[%s6 + $0x604] sm:$0xf]
        %v4752 = vld [vmem:[%s6 + $0x608] sm:$0xf]
        %v4753 = vld [vmem:[%s6 + $0x60c] sm:$0xf]
        %v4754 = vld [vmem:[%s6 + $0x610] sm:$0xf]
        %v4755 = vld [vmem:[%s6 + $0x614] sm:$0xf]
        %v4756 = vld [vmem:[%s6 + $0x618] sm:$0xf]
        %v4757 = vld [vmem:[%s6 + $0x61c] sm:$0xf]
        %v4758 = vld [vmem:[%s6 + $0x620] sm:$0xf]
        %v4759 = vld [vmem:[%s6 + $0x624] sm:$0xf]
        %v4760 = vld [vmem:[%s6 + $0x628] sm:$0xf]
        %v4761 = vld [vmem:[%s6 + $0x62c] sm:$0xf]
        %v4762 = vld [vmem:[%s6 + $0x630] sm:$0xf]
        %v4763 = vld [vmem:[%s6 + $0x634] sm:$0xf]
        %v4764 = vld [vmem:[%s6 + $0x638] sm:$0xf]
        %v4765 = vld [vmem:[%s6 + $0x63c] sm:$0xf]
        %v4766 = vld [vmem:[%s6 + $0x640] sm:$0xf]
        %v4767 = vld [vmem:[%s6 + $0x644] sm:$0xf]
        %v4768 = vld [vmem:[%s6 + $0x648] sm:$0xf]
        %v4769 = vld [vmem:[%s6 + $0x64c] sm:$0xf]
        %v4770 = vld [vmem:[%s6 + $0x650] sm:$0xf]
        %v4771 = vld [vmem:[%s6 + $0x654] sm:$0xf]
        %v4772 = vld [vmem:[%s6 + $0x658] sm:$0xf]
        %v4773 = vld [vmem:[%s6 + $0x65c] sm:$0xf]
        %v4774 = vld [vmem:[%s6 + $0x660] sm:$0xf]
        %v4775 = vld [vmem:[%s6 + $0x664] sm:$0xf]
        %v4776 = vld [vmem:[%s6 + $0x668] sm:$0xf]
        %v4777 = vld [vmem:[%s6 + $0x66c] sm:$0xf]
        %v4778 = vld [vmem:[%s6 + $0x670] sm:$0xf]
        %v4779 = vld [vmem:[%s6 + $0x674] sm:$0xf]
        %v4780 = vld [vmem:[%s6 + $0x678] sm:$0xf]
        %v4781 = vld [vmem:[%s6 + $0x67c] sm:$0xf]
        %v4782 = vld [vmem:[%s6 + $0x680] sm:$0xf]
        %v4783 = vld [vmem:[%s6 + $0x684] sm:$0xf]
        %v4784 = vld [vmem:[%s6 + $0x688] sm:$0xf]
        %v4785 = vld [vmem:[%s6 + $0x68c] sm:$0xf]
        %v4786 = vld [vmem:[%s6 + $0x690] sm:$0xf]
        %v4787 = vld [vmem:[%s6 + $0x694] sm:$0xf]
        %v4788 = vld [vmem:[%s6 + $0x698] sm:$0xf]
        %v4789 = vld [vmem:[%s6 + $0x69c] sm:$0xf]
        %v4790 = vld [vmem:[%s6 + $0x6a0] sm:$0xf]
        %v4791 = vld [vmem:[%s6 + $0x6a4] sm:$0xf]
        %v4792 = vld [vmem:[%s6 + $0x6a8] sm:$0xf]
        %v4793 = vld [vmem:[%s6 + $0x6ac] sm:$0xf]
        %v4794 = vld [vmem:[%s6 + $0x6b0] sm:$0xf]
        %v4795 = vld [vmem:[%s6 + $0x6b4] sm:$0xf]
        %v4796 = vld [vmem:[%s6 + $0x6b8] sm:$0xf]
        %v4797 = vld [vmem:[%s6 + $0x6bc] sm:$0xf]
        %v4798 = vld [vmem:[%s6 + $0x6c0] sm:$0xf]
        %v4799 = vld [vmem:[%s6 + $0x6c4] sm:$0xf]
        %v4800 = vld [vmem:[%s6 + $0x6c8] sm:$0xf]
        %v4801 = vld [vmem:[%s6 + $0x6cc] sm:$0xf]
        %v4802 = vld [vmem:[%s6 + $0x6d0] sm:$0xf]
        %v4803 = vld [vmem:[%s6 + $0x6d4] sm:$0xf]
        %v4804 = vld [vmem:[%s6 + $0x6d8] sm:$0xf]
        %v4805 = vld [vmem:[%s6 + $0x6dc] sm:$0xf]
        %v4806 = vld [vmem:[%s6 + $0x6e0] sm:$0xf]
        %v4807 = vld [vmem:[%s6 + $0x6e4] sm:$0xf]
        %v4808 = vld [vmem:[%s6 + $0x6e8] sm:$0xf]
        %v4809 = vld [vmem:[%s6 + $0x6ec] sm:$0xf]
        %v4810 = vld [vmem:[%s6 + $0x6f0] sm:$0xf]
        %v4811 = vld [vmem:[%s6 + $0x6f4] sm:$0xf]
        %v4812 = vld [vmem:[%s6 + $0x6f8] sm:$0xf]
        %v4813 = vld [vmem:[%s6 + $0x6fc] sm:$0xf]
        %v4814 = vld [vmem:[%s6 + $0x700] sm:$0xf]
        %v4815 = vld [vmem:[%s6 + $0x704] sm:$0xf]
        %v4816 = vld [vmem:[%s6 + $0x708] sm:$0xf]
        %v4817 = vld [vmem:[%s6 + $0x70c] sm:$0xf]
        %v4818 = vld [vmem:[%s6 + $0x710] sm:$0xf]
        %v4819 = vld [vmem:[%s6 + $0x714] sm:$0xf]
        %v4820 = vld [vmem:[%s6 + $0x718] sm:$0xf]
        %v4821 = vld [vmem:[%s6 + $0x71c] sm:$0xf]
        %v4822 = vld [vmem:[%s6 + $0x720] sm:$0xf]
        %v4823 = vld [vmem:[%s6 + $0x724] sm:$0xf]
        %v4824 = vld [vmem:[%s6 + $0x728] sm:$0xf]
        %v4825 = vld [vmem:[%s6 + $0x72c] sm:$0xf]
        %v4826 = vld [vmem:[%s6 + $0x730] sm:$0xf]
        %v4827 = vld [vmem:[%s6 + $0x734] sm:$0xf]
        %v4828 = vld [vmem:[%s6 + $0x738] sm:$0xf]
        %v4829 = vld [vmem:[%s6 + $0x73c] sm:$0xf]
        %v4830 = vld [vmem:[%s6 + $0x740] sm:$0xf]
        %v4831 = vld [vmem:[%s6 + $0x744] sm:$0xf]
        %v4832 = vld [vmem:[%s6 + $0x748] sm:$0xf]
        %v4833 = vld [vmem:[%s6 + $0x74c] sm:$0xf]
        %v4834 = vld [vmem:[%s6 + $0x750] sm:$0xf]
        %v4835 = vld [vmem:[%s6 + $0x754] sm:$0xf]
        %v4836 = vld [vmem:[%s6 + $0x758] sm:$0xf]
        %v4837 = vld [vmem:[%s6 + $0x75c] sm:$0xf]
        %v4838 = vld [vmem:[%s6 + $0x760] sm:$0xf]
        %v4839 = vld [vmem:[%s6 + $0x764] sm:$0xf]
        %v4840 = vld [vmem:[%s6 + $0x768] sm:$0xf]
        %v4841 = vld [vmem:[%s6 + $0x76c] sm:$0xf]
        %v4842 = vld [vmem:[%s6 + $0x770] sm:$0xf]
        %v4843 = vld [vmem:[%s6 + $0x774] sm:$0xf]
        %v4844 = vld [vmem:[%s6 + $0x778] sm:$0xf]
        %v4845 = vld [vmem:[%s6 + $0x77c] sm:$0xf]
        %v4846 = vld [vmem:[%s6 + $0x780] sm:$0xf]
        %v4847 = vld [vmem:[%s6 + $0x784] sm:$0xf]
        %v4848 = vld [vmem:[%s6 + $0x788] sm:$0xf]
        %v4849 = vld [vmem:[%s6 + $0x78c] sm:$0xf]
        %v4850 = vld [vmem:[%s6 + $0x790] sm:$0xf]
        %v4851 = vld [vmem:[%s6 + $0x794] sm:$0xf]
        %v4852 = vld [vmem:[%s6 + $0x798] sm:$0xf]
        %v4853 = vld [vmem:[%s6 + $0x79c] sm:$0xf]
        %v4854 = vld [vmem:[%s6 + $0x7a0] sm:$0xf]
        %v4855 = vld [vmem:[%s6 + $0x7a4] sm:$0xf]
        %v4856 = vld [vmem:[%s6 + $0x7a8] sm:$0xf]
        %v4857 = vld [vmem:[%s6 + $0x7ac] sm:$0xf]
        %v4858 = vld [vmem:[%s6 + $0x7b0] sm:$0xf]
        %v4859 = vld [vmem:[%s6 + $0x7b4] sm:$0xf]
        %v4860 = vld [vmem:[%s6 + $0x7b8] sm:$0xf]
        %v4861 = vld [vmem:[%s6 + $0x7bc] sm:$0xf]
        %v4862 = vld [vmem:[%s6 + $0x7c0] sm:$0xf]
        %v4863 = vld [vmem:[%s6 + $0x7c4] sm:$0xf]
        %v4864 = vld [vmem:[%s6 + $0x7c8] sm:$0xf]
        %v4865 = vld [vmem:[%s6 + $0x7cc] sm:$0xf]
        %v4866 = vld [vmem:[%s6 + $0x7d0] sm:$0xf]
        %v4867 = vld [vmem:[%s6 + $0x7d4] sm:$0xf]
        %v4868 = vld [vmem:[%s6 + $0x7d8] sm:$0xf]
        %v4869 = vld [vmem:[%s6 + $0x7dc] sm:$0xf]
        %v4870 = vld [vmem:[%s6 + $0x7e0] sm:$0xf]
        %v4871 = vld [vmem:[%s6 + $0x7e4] sm:$0xf]
        %v4872 = vld [vmem:[%s6 + $0x7e8] sm:$0xf]
        %v4873 = vld [vmem:[%s6 + $0x7ec] sm:$0xf]
        %v4874 = vld [vmem:[%s6 + $0x7f0] sm:$0xf]
        %v4875 = vld [vmem:[%s6 + $0x7f4] sm:$0xf]
        %v4876 = vld [vmem:[%s6 + $0x7f8] sm:$0xf]
        %v4877 = vld [vmem:[%s6 + $0x7fc] sm:$0xf]
        %v5006 = vunpack.c.l.b16 %v4750
        %v5007 = vunpack.c.l.b16 %v4751
        %v5008 = vunpack.c.l.b16 %v4752
        %v5009 = vunpack.c.l.b16 %v4753
        %v5010 = vunpack.c.l.b16 %v4754
        %v5011 = vunpack.c.l.b16 %v4755
        %v5012 = vunpack.c.l.b16 %v4756
        %v5013 = vunpack.c.l.b16 %v4757
        %v5014 = vunpack.c.l.b16 %v4758
        %v5015 = vunpack.c.l.b16 %v4759
        %v5016 = vunpack.c.l.b16 %v4760
        %v5017 = vunpack.c.l.b16 %v4761
        %v5018 = vunpack.c.l.b16 %v4762
        %v5019 = vunpack.c.l.b16 %v4763
        %v5020 = vunpack.c.l.b16 %v4764
        %v5021 = vunpack.c.l.b16 %v4765
        %v5022 = vunpack.c.l.b16 %v4766
        %v5023 = vunpack.c.l.b16 %v4767
        %v5024 = vunpack.c.l.b16 %v4768
        %v5025 = vunpack.c.l.b16 %v4769
        %v5026 = vunpack.c.l.b16 %v4770
        %v5027 = vunpack.c.l.b16 %v4771
        %v5028 = vunpack.c.l.b16 %v4772
        %v5029 = vunpack.c.l.b16 %v4773
        %v5030 = vunpack.c.l.b16 %v4774
        %v5031 = vunpack.c.l.b16 %v4775
        %v5032 = vunpack.c.l.b16 %v4776
        %v5033 = vunpack.c.l.b16 %v4777
        %v5034 = vunpack.c.l.b16 %v4778
        %v5035 = vunpack.c.l.b16 %v4779
        %v5036 = vunpack.c.l.b16 %v4780
        %v5037 = vunpack.c.l.b16 %v4781
        %v5038 = vunpack.c.l.b16 %v4782
        %v5039 = vunpack.c.l.b16 %v4783
        %v5040 = vunpack.c.l.b16 %v4784
        %v5041 = vunpack.c.l.b16 %v4785
        %v5042 = vunpack.c.l.b16 %v4786
        %v5043 = vunpack.c.l.b16 %v4787
        %v5044 = vunpack.c.l.b16 %v4788
        %v5045 = vunpack.c.l.b16 %v4789
        %v5046 = vunpack.c.l.b16 %v4790
        %v5047 = vunpack.c.l.b16 %v4791
        %v5048 = vunpack.c.l.b16 %v4792
        %v5049 = vunpack.c.l.b16 %v4793
        %v5050 = vunpack.c.l.b16 %v4794
        %v5051 = vunpack.c.l.b16 %v4795
        %v5052 = vunpack.c.l.b16 %v4796
        %v5053 = vunpack.c.l.b16 %v4797
        %v5054 = vunpack.c.l.b16 %v4798
        %v5055 = vunpack.c.l.b16 %v4799
        %v5056 = vunpack.c.l.b16 %v4800
        %v5057 = vunpack.c.l.b16 %v4801
        %v5058 = vunpack.c.l.b16 %v4802
        %v5059 = vunpack.c.l.b16 %v4803
        %v5060 = vunpack.c.l.b16 %v4804
        %v5061 = vunpack.c.l.b16 %v4805
        %v5062 = vunpack.c.l.b16 %v4806
        %v5063 = vunpack.c.l.b16 %v4807
        %v5064 = vunpack.c.l.b16 %v4808
        %v5065 = vunpack.c.l.b16 %v4809
        %v5066 = vunpack.c.l.b16 %v4810
        %v5067 = vunpack.c.l.b16 %v4811
        %v5068 = vunpack.c.l.b16 %v4812
        %v5069 = vunpack.c.l.b16 %v4813
        %v5070 = vunpack.c.l.b16 %v4814
        %v5071 = vunpack.c.l.b16 %v4815
        %v5072 = vunpack.c.l.b16 %v4816
        %v5073 = vunpack.c.l.b16 %v4817
        %v5074 = vunpack.c.l.b16 %v4818
        %v5075 = vunpack.c.l.b16 %v4819
        %v5076 = vunpack.c.l.b16 %v4820
        %v5077 = vunpack.c.l.b16 %v4821
        %v5078 = vunpack.c.l.b16 %v4822
        %v5079 = vunpack.c.l.b16 %v4823
        %v5080 = vunpack.c.l.b16 %v4824
        %v5081 = vunpack.c.l.b16 %v4825
        %v5082 = vunpack.c.l.b16 %v4826
        %v5083 = vunpack.c.l.b16 %v4827
        %v5084 = vunpack.c.l.b16 %v4828
        %v5085 = vunpack.c.l.b16 %v4829
        %v5086 = vunpack.c.l.b16 %v4830
        %v5087 = vunpack.c.l.b16 %v4831
        %v5088 = vunpack.c.l.b16 %v4832
        %v5089 = vunpack.c.l.b16 %v4833
        %v5090 = vunpack.c.l.b16 %v4834
        %v5091 = vunpack.c.l.b16 %v4835
        %v5092 = vunpack.c.l.b16 %v4836
        %v5093 = vunpack.c.l.b16 %v4837
        %v5094 = vunpack.c.l.b16 %v4838
        %v5095 = vunpack.c.l.b16 %v4839
        %v5096 = vunpack.c.l.b16 %v4840
        %v5097 = vunpack.c.l.b16 %v4841
        %v5098 = vunpack.c.l.b16 %v4842
        %v5099 = vunpack.c.l.b16 %v4843
        %v5100 = vunpack.c.l.b16 %v4844
        %v5101 = vunpack.c.l.b16 %v4845
        %v5102 = vunpack.c.l.b16 %v4846
        %v5103 = vunpack.c.l.b16 %v4847
        %v5104 = vunpack.c.l.b16 %v4848
        %v5105 = vunpack.c.l.b16 %v4849
        %v5106 = vunpack.c.l.b16 %v4850
        %v5107 = vunpack.c.l.b16 %v4851
        %v5108 = vunpack.c.l.b16 %v4852
        %v5109 = vunpack.c.l.b16 %v4853
        %v5110 = vunpack.c.l.b16 %v4854
        %v5111 = vunpack.c.l.b16 %v4855
        %v5112 = vunpack.c.l.b16 %v4856
        %v5113 = vunpack.c.l.b16 %v4857
        %v5114 = vunpack.c.l.b16 %v4858
        %v5115 = vunpack.c.l.b16 %v4859
        %v5116 = vunpack.c.l.b16 %v4860
        %v5117 = vunpack.c.l.b16 %v4861
        %v5118 = vunpack.c.l.b16 %v4862
        %v5119 = vunpack.c.l.b16 %v4863
        %v5120 = vunpack.c.l.b16 %v4864
        %v5121 = vunpack.c.l.b16 %v4865
        %v5122 = vunpack.c.l.b16 %v4866
        %v5123 = vunpack.c.l.b16 %v4867
        %v5124 = vunpack.c.l.b16 %v4868
        %v5125 = vunpack.c.l.b16 %v4869
        %v5126 = vunpack.c.l.b16 %v4870
        %v5127 = vunpack.c.l.b16 %v4871
        %v5128 = vunpack.c.l.b16 %v4872
        %v5129 = vunpack.c.l.b16 %v4873
        %v5130 = vunpack.c.l.b16 %v4874
        %v5131 = vunpack.c.l.b16 %v4875
        %v5132 = vunpack.c.l.b16 %v4876
        %v5133 = vunpack.c.l.b16 %v4877
        %v5134 = vpack.c.b16 %v5007, %v5006
        %v5135 = vpack.c.b16 %v5009, %v5008
        %v5136 = vpack.c.b16 %v5011, %v5010
        %v5137 = vpack.c.b16 %v5013, %v5012
        %v5138 = vpack.c.b16 %v5015, %v5014
        %v5139 = vpack.c.b16 %v5017, %v5016
        %v5140 = vpack.c.b16 %v5019, %v5018
        %v5141 = vpack.c.b16 %v5021, %v5020
        %v5142 = vpack.c.b16 %v5023, %v5022
        %v5143 = vpack.c.b16 %v5025, %v5024
        %v5144 = vpack.c.b16 %v5027, %v5026
        %v5145 = vpack.c.b16 %v5029, %v5028
        %v5146 = vpack.c.b16 %v5031, %v5030
        %v5147 = vpack.c.b16 %v5033, %v5032
        %v5148 = vpack.c.b16 %v5035, %v5034
        %v5149 = vpack.c.b16 %v5037, %v5036
        %v5150 = vpack.c.b16 %v5039, %v5038
        %v5151 = vpack.c.b16 %v5041, %v5040
        %v5152 = vpack.c.b16 %v5043, %v5042
        %v5153 = vpack.c.b16 %v5045, %v5044
        %v5154 = vpack.c.b16 %v5047, %v5046
        %v5155 = vpack.c.b16 %v5049, %v5048
        %v5156 = vpack.c.b16 %v5051, %v5050
        %v5157 = vpack.c.b16 %v5053, %v5052
        %v5158 = vpack.c.b16 %v5055, %v5054
        %v5159 = vpack.c.b16 %v5057, %v5056
        %v5160 = vpack.c.b16 %v5059, %v5058
        %v5161 = vpack.c.b16 %v5061, %v5060
        %v5162 = vpack.c.b16 %v5063, %v5062
        %v5163 = vpack.c.b16 %v5065, %v5064
        %v5164 = vpack.c.b16 %v5067, %v5066
        %v5165 = vpack.c.b16 %v5069, %v5068
        %v5166 = vpack.c.b16 %v5071, %v5070
        %v5167 = vpack.c.b16 %v5073, %v5072
        %v5168 = vpack.c.b16 %v5075, %v5074
        %v5169 = vpack.c.b16 %v5077, %v5076
        %v5170 = vpack.c.b16 %v5079, %v5078
        %v5171 = vpack.c.b16 %v5081, %v5080
        %v5172 = vpack.c.b16 %v5083, %v5082
        %v5173 = vpack.c.b16 %v5085, %v5084
        %v5174 = vpack.c.b16 %v5087, %v5086
        %v5175 = vpack.c.b16 %v5089, %v5088
        %v5176 = vpack.c.b16 %v5091, %v5090
        %v5177 = vpack.c.b16 %v5093, %v5092
        %v5178 = vpack.c.b16 %v5095, %v5094
        %v5179 = vpack.c.b16 %v5097, %v5096
        %v5180 = vpack.c.b16 %v5099, %v5098
        %v5181 = vpack.c.b16 %v5101, %v5100
        %v5182 = vpack.c.b16 %v5103, %v5102
        %v5183 = vpack.c.b16 %v5105, %v5104
        %v5184 = vpack.c.b16 %v5107, %v5106
        %v5185 = vpack.c.b16 %v5109, %v5108
        %v5186 = vpack.c.b16 %v5111, %v5110
        %v5187 = vpack.c.b16 %v5113, %v5112
        %v5188 = vpack.c.b16 %v5115, %v5114
        %v5189 = vpack.c.b16 %v5117, %v5116
        %v5190 = vpack.c.b16 %v5119, %v5118
        %v5191 = vpack.c.b16 %v5121, %v5120
        %v5192 = vpack.c.b16 %v5123, %v5122
        %v5193 = vpack.c.b16 %v5125, %v5124
        %v5194 = vpack.c.b16 %v5127, %v5126
        %v5195 = vpack.c.b16 %v5129, %v5128
        %v5196 = vpack.c.b16 %v5131, %v5130
        %v5197 = vpack.c.b16 %v5133, %v5132
        %5262 = vmatprep.subr.bf16.mxu0 0
        %5263 = vmatpush1.bf16.msra.mxu0 %v5141
        %5264 = vmatprep.subr.bf16.mxu0 0
        %5265 = vmatpush1.bf16.msra.mxu0 %v5140
        %5266 = vmatprep.subr.bf16.mxu0 0
        %5267 = vmatpush1.bf16.msra.mxu0 %v5139
        %5268 = vmatprep.subr.bf16.mxu0 0
        %5269 = vmatpush1.bf16.msra.mxu0 %v5138
        %5270 = vmatprep.subr.bf16.mxu0 0
        %5271 = vmatpush1.bf16.msra.mxu0 %v5137
        %5272 = vmatprep.subr.bf16.mxu0 0
        %5273 = vmatpush1.bf16.msra.mxu0 %v5136
        %5274 = vmatprep.subr.bf16.mxu0 0
        %5275 = vmatpush1.bf16.msra.mxu0 %v5135
        %5276 = vmatprep.subr.bf16.mxu0 0
        %5277 = vmatpush1.bf16.msra.mxu0 %v5134
        %5278 = vmatprep.subr.bf16.mxu0 0
        %5279 = vmatpush2.bf16.msra.mxu0 %v5149
        %5280 = vmatprep.subr.bf16.mxu0 0
        %5281 = vmatpush2.bf16.msra.mxu0 %v5148
        %5282 = vmatprep.subr.bf16.mxu0 0
        %5283 = vmatpush2.bf16.msra.mxu0 %v5147
        %5284 = vmatprep.subr.bf16.mxu0 0
        %5285 = vmatpush2.bf16.msra.mxu0 %v5146
        %5286 = vmatprep.subr.bf16.mxu0 0
        %5287 = vmatpush2.bf16.msra.mxu0 %v5145
        %5288 = vmatprep.subr.bf16.mxu0 0
        %5289 = vmatpush2.bf16.msra.mxu0 %v5144
        %5290 = vmatprep.subr.bf16.mxu0 0
        %5291 = vmatpush2.bf16.msra.mxu0 %v5143
        %5292 = vmatprep.subr.bf16.mxu0 0
        %5293 = vmatpush2.bf16.msra.mxu0 %v5142
        %5294 = vmatprep.mubr.bf16.mxu0 %v4743
        %5295 = vmatmul.mubr.bf16.gmra.mxu0 %v4742
        %v5296 = vpop.f32.mrf.mxu0
        %v5297 = vadd.f32 0.0, %v5296
        %v5298 = vpop.f32.mrf.mxu0
        %v5299 = vpop.f32.mrf.mxu0
        %v5300 = vadd.f32 0.0, %v5299
        %v5301 = vpop.f32.mrf.mxu0
        %5302 = vdwg.mxu0
        %5303 = vmatprep.subr.bf16.mxu0 0
        %5304 = vmatpush1.bf16.msra.mxu0 %v5157
        %5305 = vmatprep.subr.bf16.mxu0 0
        %5306 = vmatpush1.bf16.msra.mxu0 %v5156
        %5307 = vmatprep.subr.bf16.mxu0 0
        %5308 = vmatpush1.bf16.msra.mxu0 %v5155
        %5309 = vmatprep.subr.bf16.mxu0 0
        %5310 = vmatpush1.bf16.msra.mxu0 %v5154
        %5311 = vmatprep.subr.bf16.mxu0 0
        %5312 = vmatpush1.bf16.msra.mxu0 %v5153
        %5313 = vmatprep.subr.bf16.mxu0 0
        %5314 = vmatpush1.bf16.msra.mxu0 %v5152
        %5315 = vmatprep.subr.bf16.mxu0 0
        %5316 = vmatpush1.bf16.msra.mxu0 %v5151
        %5317 = vmatprep.subr.bf16.mxu0 0
        %5318 = vmatpush1.bf16.msra.mxu0 %v5150
        %5319 = vmatprep.subr.bf16.mxu0 0
        %5320 = vmatpush2.bf16.msra.mxu0 %v5165
        %5321 = vmatprep.subr.bf16.mxu0 0
        %5322 = vmatpush2.bf16.msra.mxu0 %v5164
        %5323 = vmatprep.subr.bf16.mxu0 0
        %5324 = vmatpush2.bf16.msra.mxu0 %v5163
        %5325 = vmatprep.subr.bf16.mxu0 0
        %5326 = vmatpush2.bf16.msra.mxu0 %v5162
        %5327 = vmatprep.subr.bf16.mxu0 0
        %5328 = vmatpush2.bf16.msra.mxu0 %v5161
        %5329 = vmatprep.subr.bf16.mxu0 0
        %5330 = vmatpush2.bf16.msra.mxu0 %v5160
        %5331 = vmatprep.subr.bf16.mxu0 0
        %5332 = vmatpush2.bf16.msra.mxu0 %v5159
        %5333 = vmatprep.subr.bf16.mxu0 0
        %5334 = vmatpush2.bf16.msra.mxu0 %v5158
        %5335 = vmatprep.mubr.bf16.mxu0 %v4745
        %5336 = vmatmul.mubr.bf16.gmra.mxu0 %v4744
        %v5337 = vpop.f32.mrf.mxu0
        %v5338 = vadd.f32 %v5297, %v5337
        %v5339 = vpop.f32.mrf.mxu0
        %v5340 = vpop.f32.mrf.mxu0
        %v5341 = vadd.f32 %v5300, %v5340
        %v5342 = vpop.f32.mrf.mxu0
        %5343 = vdwg.mxu0
        %5344 = vmatprep.subr.bf16.mxu0 0
        %5345 = vmatpush1.bf16.msra.mxu0 %v5173
        %5346 = vmatprep.subr.bf16.mxu0 0
        %5347 = vmatpush1.bf16.msra.mxu0 %v5172
        %5348 = vmatprep.subr.bf16.mxu0 0
        %5349 = vmatpush1.bf16.msra.mxu0 %v5171
        %5350 = vmatprep.subr.bf16.mxu0 0
        %5351 = vmatpush1.bf16.msra.mxu0 %v5170
        %5352 = vmatprep.subr.bf16.mxu0 0
        %5353 = vmatpush1.bf16.msra.mxu0 %v5169
        %5354 = vmatprep.subr.bf16.mxu0 0
        %5355 = vmatpush1.bf16.msra.mxu0 %v5168
        %5356 = vmatprep.subr.bf16.mxu0 0
        %5357 = vmatpush1.bf16.msra.mxu0 %v5167
        %5358 = vmatprep.subr.bf16.mxu0 0
        %5359 = vmatpush1.bf16.msra.mxu0 %v5166
        %5360 = vmatprep.subr.bf16.mxu0 0
        %5361 = vmatpush2.bf16.msra.mxu0 %v5181
        %5362 = vmatprep.subr.bf16.mxu0 0
        %5363 = vmatpush2.bf16.msra.mxu0 %v5180
        %5364 = vmatprep.subr.bf16.mxu0 0
        %5365 = vmatpush2.bf16.msra.mxu0 %v5179
        %5366 = vmatprep.subr.bf16.mxu0 0
        %5367 = vmatpush2.bf16.msra.mxu0 %v5178
        %5368 = vmatprep.subr.bf16.mxu0 0
        %5369 = vmatpush2.bf16.msra.mxu0 %v5177
        %5370 = vmatprep.subr.bf16.mxu0 0
        %5371 = vmatpush2.bf16.msra.mxu0 %v5176
        %5372 = vmatprep.subr.bf16.mxu0 0
        %5373 = vmatpush2.bf16.msra.mxu0 %v5175
        %5374 = vmatprep.subr.bf16.mxu0 0
        %5375 = vmatpush2.bf16.msra.mxu0 %v5174
        %5376 = vmatprep.mubr.bf16.mxu0 %v4747
        %5377 = vmatmul.mubr.bf16.gmra.mxu0 %v4746
        %v5378 = vpop.f32.mrf.mxu0
        %v5379 = vadd.f32 %v5338, %v5378
        %v5380 = vpop.f32.mrf.mxu0
        %v5381 = vpop.f32.mrf.mxu0
        %v5382 = vadd.f32 %v5341, %v5381
        %v5383 = vpop.f32.mrf.mxu0
        %5384 = vdwg.mxu0
        %5385 = vmatprep.subr.bf16.mxu0 0
        %5386 = vmatpush1.bf16.msra.mxu0 %v5189
        %5387 = vmatprep.subr.bf16.mxu0 0
        %5388 = vmatpush1.bf16.msra.mxu0 %v5188
        %5389 = vmatprep.subr.bf16.mxu0 0
        %5390 = vmatpush1.bf16.msra.mxu0 %v5187
        %5391 = vmatprep.subr.bf16.mxu0 0
        %5392 = vmatpush1.bf16.msra.mxu0 %v5186
        %5393 = vmatprep.subr.bf16.mxu0 0
        %5394 = vmatpush1.bf16.msra.mxu0 %v5185
        %5395 = vmatprep.subr.bf16.mxu0 0
        %5396 = vmatpush1.bf16.msra.mxu0 %v5184
        %5397 = vmatprep.subr.bf16.mxu0 0
        %5398 = vmatpush1.bf16.msra.mxu0 %v5183
        %5399 = vmatprep.subr.bf16.mxu0 0
        %5400 = vmatpush1.bf16.msra.mxu0 %v5182
        %5401 = vmatprep.subr.bf16.mxu0 0
        %5402 = vmatpush2.bf16.msra.mxu0 %v5197
        %5403 = vmatprep.subr.bf16.mxu0 0
        %5404 = vmatpush2.bf16.msra.mxu0 %v5196
        %5405 = vmatprep.subr.bf16.mxu0 0
        %5406 = vmatpush2.bf16.msra.mxu0 %v5195
        %5407 = vmatprep.subr.bf16.mxu0 0
        %5408 = vmatpush2.bf16.msra.mxu0 %v5194
        %5409 = vmatprep.subr.bf16.mxu0 0
        %5410 = vmatpush2.bf16.msra.mxu0 %v5193
        %5411 = vmatprep.subr.bf16.mxu0 0
        %5412 = vmatpush2.bf16.msra.mxu0 %v5192
        %5413 = vmatprep.subr.bf16.mxu0 0
        %5414 = vmatpush2.bf16.msra.mxu0 %v5191
        %5415 = vmatprep.subr.bf16.mxu0 0
        %5416 = vmatpush2.bf16.msra.mxu0 %v5190
        %5417 = vmatprep.mubr.bf16.mxu0 %v4749
        %5418 = vmatmul.mubr.bf16.gmra.mxu0 %v4748
        %v5419 = vpop.f32.mrf.mxu0
        %v5420 = vadd.f32 %v5379, %v5419
        %v5421 = vpop.f32.mrf.mxu0
        %v5422 = vpop.f32.mrf.mxu0
        %v5423 = vadd.f32 %v5382, %v5422
        %v5424 = vpop.f32.mrf.mxu0
        %5425 = vdwg.mxu0
        %v5426 = vadd.f32 %v4361, %v5420
        %v5427 = vadd.f32 %v4362, %v5423
        %vm5428 = vcmask 523264
        %5429 = vst.msk [vmem:[%s455] sm:$0xff] %vm5428, %v5426
        %5430 = vst.msk [vmem:[%s455 + $0x8] sm:$0xff] %vm5428, %v5427
        %s5431 = smul.u32 2, %s20
        %p5432 = scmp.lt.s32.totalorder %s5431, 3
        %s5433 = scalar_select %p5432, %s5431, 3
        %s5434 = smul.addr %s5433, 8
        %s5435 = scalar_lea.vmem %s9, %s5434
        // Predicated region
        $region98: #{table_decoder_forward.3} parent=92 // pred_check
          %p5436 = pneg %p242
        $region99: #{table_decoder_forward.3} parent=92 // pred_check_branch
          %5438 = sbr.rel (%p5436) target = $region101
        $region100: #{table_decoder_forward.3} parent=92 // pred_region
          %s5439 = smul.u32 2, %s20
        $region101: #{table_decoder_forward.3} parent=92 // pred_fallthru
          _
      $region93: #{table_decoder_forward.3} parent=5 // pred_fallthru
        _
      %p5440 = scmp.le.s32.totalorder 2, %s15
      // Predicated region
      $region102: #{table_decoder_forward.3} parent=5 // pred_check
        %p5441 = pneg %p5440
      $region103: #{table_decoder_forward.3} parent=5 // pred_check_branch
        %5443 = sbr.rel (%p5441) target = $region105
      $region104: #{table_decoder_forward.3} parent=5 // pred_region
        %s5444 = ssub.s32 %s15, 2
        // Predicated region
        $region106: #{table_decoder_forward.3} parent=104 // pred_check
          %p5445 = pneg %p248
        $region107: #{table_decoder_forward.3} parent=104 // pred_check_branch
          %5447 = sbr.rel (%p5445) target = $region109
        $region108: #{table_decoder_forward.3} parent=104 // pred_region
          %s5448 = smul.u32 2, %s21
          %p5449 = scmp.lt.s32.totalorder %s5448, 3
          %s5450 = scalar_select %p5449, %s5448, 3
          %s5451 = smul.addr %s5450, 8
          %s5452 = scalar_lea.vmem %s9, %s5451
        $region109: #{table_decoder_forward.3} parent=104 // pred_fallthru
          _
      $region105: #{table_decoder_forward.3} parent=5 // pred_fallthru
        _
    $region6: #{table_decoder_forward.3} parent=1 // loop_footer
      %s19 = sadd.s32 1, %s15
    $region7: #{table_decoder_forward.3} parent=1 // loop_footer_branch
      %14 = sbr.rel target = $region3
    $region8: #{table_decoder_forward.3} parent=1 // loop_exit
      _

</llo_original>
